<compile_context>
chip_gen: v7x
topology: tpu7x:2x2x1
jax: 0.10.0
libtpu: 0.0.40
codegen_flags: <defaults>
</compile_context>

<pallas_src>
import functools

import numpy as np
import jax
import jax.numpy as jnp
from jax import lax
from jax.experimental import pallas as pl
from jax.experimental.pallas import tpu as pltpu


def _beta_cond_base_block_kernel(
    H, W, mid,
    x_ref, cond_ref, mask_ref,
    win_ref, bin_ref, w3_ref, b3_ref,
    woh_ref, woc_ref, bo_ref,
    o_ref):
  """One block of b_tile images per grid step.

  x_ref    : (b_tile, ch, H*W)        input images (storage dtype)
  cond_ref : (b_tile, cond_ch, H*W)
  mask_ref : (9, H*W)                 precomputed 3x3 boundary masks (0/1)
  win_ref  : (3*mid, ch+cond_ch)      fused [conv0 ; proj_1 ; proj_2] block weight
  bin_ref  : (3*mid, 1)  f32          fused biases
  w3_ref   : (9, mid, mid)            conv[2] weight split per tap
  b3_ref   : (mid, 1)    f32
  woh_ref  : (ch, mid)                conv[4] weight
  woc_ref  : (ch, cond_ch)            proj_3 weight
  bo_ref   : (ch, 1)     f32          conv[4].bias + proj_3.bias
  o_ref    : (b_tile, ch, H*W)
  """
  HW = H * W
  f32 = jnp.float32
  b_tile = x_ref.shape[0]

  # Resident small operands, loaded once per grid step (outside the image loop).
  mask = mask_ref[...]          # (9, HW), storage dtype (values 0/1)
  win = win_ref[...]
  bin_ = bin_ref[...]
  b3 = b3_ref[...]
  woh = woh_ref[...]
  woc = woc_ref[...]
  bo = bo_ref[...]

  for bi in range(b_tile):      # static unroll over the images of this block
    x = x_ref[bi]               # (ch, HW)
    cond = cond_ref[bi]         # (cond_ch, HW)
    dt = x.dtype

    # ---- Stage 1: conv[0], proj_1, proj_2 fused into one MXU push ---------
    # xc is a tiny (ch+cond_ch sublanes) copy; the fusion halves the number
    # of small-K MXU pushes/drains for this stage.
    xc = jnp.concatenate([x, cond], axis=0)                     # (ch+cond_ch, HW)
    hp = jnp.dot(win, xc, preferred_element_type=f32) + bin_    # (3*mid, HW) f32
    h = jnp.maximum(hp[:mid], 0.0) + hp[mid:2 * mid]            # relu(conv0)+proj1
    h_c = h.astype(dt)                                          # MXU input dtype

    # ---- Stage 2: 3x3 conv (pad 1) as 9 accumulating per-tap matmuls ------
    # No im2col stack: each tap is a lane roll (XLU) + mask multiply, then a
    # (mid, mid) x (mid, HW) MXU matmul accumulated in f32 registers.
    acc = None
    t = 0
    for dy in (-1, 0, 1):
      for dx in (-1, 0, 1):
        shift = (-(dy * W + dx)) % HW
        rolled = pltpu.roll(h_c, shift, axis=1) if shift else h_c
        tap = rolled * mask[t:t + 1]                            # (mid, HW)
        contrib = jnp.dot(w3_ref[t], tap, preferred_element_type=f32)
        acc = contrib if acc is None else acc + contrib
        t += 1
    h2 = jnp.maximum(acc + b3, 0.0) + hp[2 * mid:]              # relu + proj2, f32

    # ---- Stage 3: conv[4] + proj_3 as two K-split dots + residual ---------
    out = (jnp.dot(woh, h2.astype(dt), preferred_element_type=f32)
           + jnp.dot(woc, cond, preferred_element_type=f32)
           + bo
           + x.astype(f32))                                     # residual in f32
    o_ref[bi] = out.astype(o_ref.dtype)


def beta_cond_base_block(x, cond_feat, params, *, b_tile=2, compute_dtype=None):
  """x: (B, ch, H, W); cond_feat: (B, cond_ch, H, W); params in PyTorch layout.

  compute_dtype: storage dtype for activations/weights inside the kernel
  (e.g. jnp.bfloat16 on v6e/v7x).  Accumulation is always f32.  Returns the
  output in that dtype.
  """
  B, ch, H, W = x.shape
  cond_ch = cond_feat.shape[1]
  mid = params['w1'].shape[0]
  HW = H * W
  f32 = jnp.float32
  dt = compute_dtype if compute_dtype is not None else x.dtype

  b_tile = max(1, min(b_tile, B))
  while B % b_tile:
    b_tile -= 1

  # --- wrapper-side weight re-layout (layout plumbing, not compute) --------
  # Fused stage-1 block weight: [[w1, 0], [0, p1w], [0, p2w]].
  w1 = params['w1'].reshape(mid, ch)
  p1w = params['p1w'].reshape(mid, cond_ch)
  p2w = params['p2w'].reshape(mid, cond_ch)
  win = jnp.zeros((3 * mid, ch + cond_ch), f32)
  win = win.at[:mid, :ch].set(w1)
  win = win.at[mid:2 * mid, ch:].set(p1w)
  win = win.at[2 * mid:, ch:].set(p2w)
  win = win.astype(dt)
  bin_ = jnp.concatenate([params['b1'], params['p1b'], params['p2b']]
                         ).reshape(3 * mid, 1).astype(f32)

  # conv[2] weight split into 9 per-tap (mid, mid) slabs: (kh, kw, Cout, Cin).
  w3t = params['w3'].transpose(2, 3, 0, 1).reshape(9, mid, mid).astype(dt)
  b3 = params['b3'].reshape(mid, 1).astype(f32)

  # conv[4] and proj_3 kept K-split (no concatenated RHS in the kernel).
  woh = params['w5'].reshape(ch, mid).astype(dt)
  woc = params['p3w'].reshape(ch, cond_ch).astype(dt)
  bo = (params['b5'] + params['p3b']).reshape(ch, 1).astype(f32)

  # Precomputed 3x3 boundary masks (9, HW): mask[t, p] = 1 iff source pixel
  # (y+dy, x+dx) of destination p is inside the image.
  yy, xx = np.divmod(np.arange(HW), W)
  m = []
  for dy in (-1, 0, 1):
    for dx in (-1, 0, 1):
      m.append((yy + dy >= 0) & (yy + dy < H) & (xx + dx >= 0) & (xx + dx < W))
  mask = jnp.asarray(np.stack(m).astype(np.float32), dtype=dt)  # (9, HW)

  # NCHW -> (B, C, H*W) is a free reshape (pixels land on lanes).
  x_f = x.reshape(B, ch, HW).astype(dt)
  cond_f = cond_feat.reshape(B, cond_ch, HW).astype(dt)

  resident = [mask, win, bin_, w3t, b3, woh, woc, bo]

  def res_spec(a):
    nd = a.ndim
    return pl.BlockSpec(a.shape, lambda g, nd=nd: (0,) * nd)

  kernel = functools.partial(_beta_cond_base_block_kernel, H, W, mid)

  out = pl.pallas_call(
      kernel,
      out_shape=jax.ShapeDtypeStruct((B, ch, HW), dt),
      grid_spec=pltpu.PrefetchScalarGridSpec(
          num_scalar_prefetch=0,
          grid=(B // b_tile,),
          in_specs=[pl.BlockSpec((b_tile, ch, HW), lambda g: (g, 0, 0)),
                    pl.BlockSpec((b_tile, cond_ch, HW), lambda g: (g, 0, 0))]
                   + [res_spec(a) for a in resident],
          out_specs=pl.BlockSpec((b_tile, ch, HW), lambda g: (g, 0, 0))),
      compiler_params=pltpu.CompilerParams(
          dimension_semantics=("parallel",),
          vmem_limit_bytes=32 * 1024 * 1024),
  )(x_f, cond_f, *resident)
  return out.reshape(B, ch, H, W)


def reference(x, cond, params):
  # Pure-JAX NCHW reference of the PyTorch forward (f32).
  dn = ('NCHW', 'OIHW', 'NCHW')

  def c1(inp, w, b):
    return (lax.conv_general_dilated(inp, w, (1, 1), 'VALID',
                                     dimension_numbers=dn)
            + b.reshape(1, -1, 1, 1))

  sc = x
  h = jax.nn.relu(c1(x, params['w1'], params['b1']))
  h = h + c1(cond, params['p1w'], params['p1b'])
  h = (lax.conv_general_dilated(h, params['w3'], (1, 1), ((1, 1), (1, 1)),
                                dimension_numbers=dn)
       + params['b3'].reshape(1, -1, 1, 1))
  h = jax.nn.relu(h)
  h = h + c1(cond, params['p2w'], params['p2b'])
  out = c1(h, params['w5'], params['b5'])
  out = out + c1(cond, params['p3w'], params['p3b'])
  return out + sc


if __name__ == "__main__":
  key = jax.random.PRNGKey(0)
  B, H, W = 4, 16, 16
  ch, mid, cond_ch = 4, 8, 6
  keys = jax.random.split(key, 16)

  params = {
      'w1':  0.2 * jax.random.normal(keys[0],  (mid, ch, 1, 1),      jnp.float32),
      'b1':  0.1 * jax.random.normal(keys[1],  (mid,),               jnp.float32),
      'w3':  0.2 * jax.random.normal(keys[2],  (mid, mid, 3, 3),     jnp.float32),
      'b3':  0.1 * jax.random.normal(keys[3],  (mid,),               jnp.float32),
      'w5':  0.2 * jax.random.normal(keys[4],  (ch, mid, 1, 1),      jnp.float32),
      'b5':  0.1 * jax.random.normal(keys[5],  (ch,),                jnp.float32),
      'p1w': 0.2 * jax.random.normal(keys[6],  (mid, cond_ch, 1, 1), jnp.float32),
      'p1b': 0.1 * jax.random.normal(keys[7],  (mid,),               jnp.float32),
      'p2w': 0.2 * jax.random.normal(keys[8],  (mid, cond_ch, 1, 1), jnp.float32),
      'p2b': 0.1 * jax.random.normal(keys[9],  (mid,),               jnp.float32),
      'p3w': 0.2 * jax.random.normal(keys[10], (ch, cond_ch, 1, 1),  jnp.float32),
      'p3b': 0.1 * jax.random.normal(keys[11], (ch,),                jnp.float32),
  }
  x = jax.random.normal(keys[12], (B, ch, H, W), jnp.float32)
  cond = jax.random.normal(keys[13], (B, cond_ch, H, W), jnp.float32)

  ref = reference(x, cond, params)

  # f32 path (exact vs reference).
  out = jax.block_until_ready(beta_cond_base_block(x, cond, params, b_tile=2))
  err = float(jnp.max(jnp.abs(out - ref)))
  assert jnp.allclose(out, ref, atol=1e-4, rtol=1e-4), err

  # bf16 activation/weight path (memory-bound win on v6e/v7x); f32 accumulation,
  # relaxed tolerance vs the f32 reference.
  out_bf = jax.block_until_ready(
      beta_cond_base_block(x, cond, params, b_tile=2,
                           compute_dtype=jnp.bfloat16))
  err_bf = float(jnp.max(jnp.abs(out_bf.astype(jnp.float32) - ref)))
  assert jnp.allclose(out_bf.astype(jnp.float32), ref, atol=2e-1, rtol=1e-1), err_bf

  print("KERNEL_OK")
</pallas_src>

<mosaic_0001>
module attributes {stable_mosaic.version = 11 : i64} {
  func.func @_beta_cond_base_block_kernel(%arg0: i32, %arg1: memref<2x4x256xf32, #tpu.memory_space<vmem>>, %arg2: memref<2x6x256xf32, #tpu.memory_space<vmem>>, %arg3: memref<9x256xf32, #tpu.memory_space<vmem>>, %arg4: memref<24x10xf32, #tpu.memory_space<vmem>>, %arg5: memref<24x1xf32, #tpu.memory_space<vmem>>, %arg6: memref<9x8x8xf32, #tpu.memory_space<vmem>>, %arg7: memref<8x1xf32, #tpu.memory_space<vmem>>, %arg8: memref<4x8xf32, #tpu.memory_space<vmem>>, %arg9: memref<4x6xf32, #tpu.memory_space<vmem>>, %arg10: memref<4x1xf32, #tpu.memory_space<vmem>>, %arg11: memref<2x4x256xf32, #tpu.memory_space<vmem>>) attributes {dimension_semantics = [#tpu.dimension_semantics<parallel>], iteration_bounds = array<i64: 2>, scalar_prefetch = 0 : i64, scratch_operands = 0 : i64, tpu.core_type = #tpu.core_type<tc>, window_params = [{transform_indices = @transform_0, window_bounds = array<i64: 2, 4, 256>}, {transform_indices = @transform_1, window_bounds = array<i64: 2, 6, 256>}, {pipeline_mode = #tpu.pipeline_mode<synchronous>, transform_indices = @transform_2, window_bounds = array<i64: 9, 256>}, {pipeline_mode = #tpu.pipeline_mode<synchronous>, transform_indices = @transform_3, window_bounds = array<i64: 24, 10>}, {pipeline_mode = #tpu.pipeline_mode<synchronous>, transform_indices = @transform_4, window_bounds = array<i64: 24, 1>}, {pipeline_mode = #tpu.pipeline_mode<synchronous>, transform_indices = @transform_5, window_bounds = array<i64: 9, 8, 8>}, {pipeline_mode = #tpu.pipeline_mode<synchronous>, transform_indices = @transform_6, window_bounds = array<i64: 8, 1>}, {pipeline_mode = #tpu.pipeline_mode<synchronous>, transform_indices = @transform_7, window_bounds = array<i64: 4, 8>}, {pipeline_mode = #tpu.pipeline_mode<synchronous>, transform_indices = @transform_8, window_bounds = array<i64: 4, 6>}, {pipeline_mode = #tpu.pipeline_mode<synchronous>, transform_indices = @transform_9, window_bounds = array<i64: 4, 1>}, {transform_indices = @transform_10, window_bounds = array<i64: 2, 4, 256>}]} {
    %c0 = arith.constant 0 : index
    %c0_0 = arith.constant 0 : index
    %0 = vector.load %arg3[%c0, %c0_0] : memref<9x256xf32, #tpu.memory_space<vmem>>, vector<9x256xf32>
    %c0_1 = arith.constant 0 : index
    %c0_2 = arith.constant 0 : index
    %1 = vector.load %arg4[%c0_1, %c0_2] : memref<24x10xf32, #tpu.memory_space<vmem>>, vector<24x10xf32>
    %c0_3 = arith.constant 0 : index
    %c0_4 = arith.constant 0 : index
    %2 = vector.load %arg5[%c0_3, %c0_4] : memref<24x1xf32, #tpu.memory_space<vmem>>, vector<24x1xf32>
    %c0_5 = arith.constant 0 : index
    %c0_6 = arith.constant 0 : index
    %3 = vector.load %arg7[%c0_5, %c0_6] : memref<8x1xf32, #tpu.memory_space<vmem>>, vector<8x1xf32>
    %c0_7 = arith.constant 0 : index
    %c0_8 = arith.constant 0 : index
    %4 = vector.load %arg8[%c0_7, %c0_8] : memref<4x8xf32, #tpu.memory_space<vmem>>, vector<4x8xf32>
    %c0_9 = arith.constant 0 : index
    %c0_10 = arith.constant 0 : index
    %5 = vector.load %arg9[%c0_9, %c0_10] : memref<4x6xf32, #tpu.memory_space<vmem>>, vector<4x6xf32>
    %c0_11 = arith.constant 0 : index
    %c0_12 = arith.constant 0 : index
    %6 = vector.load %arg10[%c0_11, %c0_12] : memref<4x1xf32, #tpu.memory_space<vmem>>, vector<4x1xf32>
    %c0_13 = arith.constant 0 : index
    %c0_14 = arith.constant 0 : index
    %c0_15 = arith.constant 0 : index
    %7 = vector.load %arg1[%c0_13, %c0_14, %c0_15] : memref<2x4x256xf32, #tpu.memory_space<vmem>>, vector<1x4x256xf32>
    %8 = vector.shape_cast %7 : vector<1x4x256xf32> to vector<4x256xf32>
    %c0_16 = arith.constant 0 : index
    %c0_17 = arith.constant 0 : index
    %c0_18 = arith.constant 0 : index
    %9 = vector.load %arg2[%c0_16, %c0_17, %c0_18] : memref<2x6x256xf32, #tpu.memory_space<vmem>>, vector<1x6x256xf32>
    %10 = vector.shape_cast %9 : vector<1x6x256xf32> to vector<6x256xf32>
    %11 = tpu.concatenate %8, %10 in 0 : vector<4x256xf32>, vector<6x256xf32> -> vector<10x256xf32>
    %cst = arith.constant dense<0.000000e+00> : vector<24x256xf32>
    %12 = tpu.matmul %1, %11, %cst {dimension_numbers = #tpu.dot_dimension_numbers<[1], [0], [0], [1], [0, 0, 1, 1], [], []>} : vector<24x10xf32>, vector<10x256xf32>, vector<24x256xf32> -> vector<24x256xf32>
    %13 = vector.broadcast %2 : vector<24x1xf32> to vector<24x256xf32>
    %14 = arith.addf %12, %13 : vector<24x256xf32>
    %15 = vector.extract_strided_slice %14 {offsets = [0, 0], sizes = [8, 256], strides = [1, 1]} : vector<24x256xf32> to vector<8x256xf32>
    %cst_19 = arith.constant 0.000000e+00 : f32
    %16 = vector.broadcast %cst_19 : f32 to vector<8x256xf32>
    %17 = arith.maximumf %15, %16 : vector<8x256xf32>
    %18 = vector.extract_strided_slice %14 {offsets = [8, 0], sizes = [8, 256], strides = [1, 1]} : vector<24x256xf32> to vector<8x256xf32>
    %19 = arith.addf %17, %18 : vector<8x256xf32>
    %c17_i32 = arith.constant 17 : i32
    %20 = tpu.dynamic_rotate %19 by %c17_i32 dim 1 : vector<8x256xf32>, i32 -> vector<8x256xf32>
    %21 = vector.extract_strided_slice %0 {offsets = [0, 0], sizes = [1, 256], strides = [1, 1]} : vector<9x256xf32> to vector<1x256xf32>
    %22 = vector.broadcast %21 : vector<1x256xf32> to vector<8x256xf32>
    %23 = arith.mulf %20, %22 : vector<8x256xf32>
    %c0_20 = arith.constant 0 : index
    %c0_21 = arith.constant 0 : index
    %c0_22 = arith.constant 0 : index
    %24 = vector.load %arg6[%c0_20, %c0_21, %c0_22] : memref<9x8x8xf32, #tpu.memory_space<vmem>>, vector<1x8x8xf32>
    %25 = vector.shape_cast %24 : vector<1x8x8xf32> to vector<8x8xf32>
    %cst_23 = arith.constant dense<0.000000e+00> : vector<8x256xf32>
    %26 = tpu.matmul %25, %23, %cst_23 {dimension_numbers = #tpu.dot_dimension_numbers<[1], [0], [0], [1], [0, 0, 1, 1], [], []>} : vector<8x8xf32>, vector<8x256xf32>, vector<8x256xf32> -> vector<8x256xf32>
    %c16_i32 = arith.constant 16 : i32
    %27 = tpu.dynamic_rotate %19 by %c16_i32 dim 1 : vector<8x256xf32>, i32 -> vector<8x256xf32>
    %28 = vector.extract_strided_slice %0 {offsets = [1, 0], sizes = [1, 256], strides = [1, 1]} : vector<9x256xf32> to vector<1x256xf32>
    %29 = vector.broadcast %28 : vector<1x256xf32> to vector<8x256xf32>
    %30 = arith.mulf %27, %29 : vector<8x256xf32>
    %c1 = arith.constant 1 : index
    %c0_24 = arith.constant 0 : index
    %c0_25 = arith.constant 0 : index
    %31 = vector.load %arg6[%c1, %c0_24, %c0_25] : memref<9x8x8xf32, #tpu.memory_space<vmem>>, vector<1x8x8xf32>
    %32 = vector.shape_cast %31 : vector<1x8x8xf32> to vector<8x8xf32>
    %cst_26 = arith.constant dense<0.000000e+00> : vector<8x256xf32>
    %33 = tpu.matmul %32, %30, %cst_26 {dimension_numbers = #tpu.dot_dimension_numbers<[1], [0], [0], [1], [0, 0, 1, 1], [], []>} : vector<8x8xf32>, vector<8x256xf32>, vector<8x256xf32> -> vector<8x256xf32>
    %34 = arith.addf %26, %33 : vector<8x256xf32>
    %c15_i32 = arith.constant 15 : i32
    %35 = tpu.dynamic_rotate %19 by %c15_i32 dim 1 : vector<8x256xf32>, i32 -> vector<8x256xf32>
    %36 = vector.extract_strided_slice %0 {offsets = [2, 0], sizes = [1, 256], strides = [1, 1]} : vector<9x256xf32> to vector<1x256xf32>
    %37 = vector.broadcast %36 : vector<1x256xf32> to vector<8x256xf32>
    %38 = arith.mulf %35, %37 : vector<8x256xf32>
    %c2 = arith.constant 2 : index
    %c0_27 = arith.constant 0 : index
    %c0_28 = arith.constant 0 : index
    %39 = vector.load %arg6[%c2, %c0_27, %c0_28] : memref<9x8x8xf32, #tpu.memory_space<vmem>>, vector<1x8x8xf32>
    %40 = vector.shape_cast %39 : vector<1x8x8xf32> to vector<8x8xf32>
    %cst_29 = arith.constant dense<0.000000e+00> : vector<8x256xf32>
    %41 = tpu.matmul %40, %38, %cst_29 {dimension_numbers = #tpu.dot_dimension_numbers<[1], [0], [0], [1], [0, 0, 1, 1], [], []>} : vector<8x8xf32>, vector<8x256xf32>, vector<8x256xf32> -> vector<8x256xf32>
    %42 = arith.addf %34, %41 : vector<8x256xf32>
    %c1_i32 = arith.constant 1 : i32
    %43 = tpu.dynamic_rotate %19 by %c1_i32 dim 1 : vector<8x256xf32>, i32 -> vector<8x256xf32>
    %44 = vector.extract_strided_slice %0 {offsets = [3, 0], sizes = [1, 256], strides = [1, 1]} : vector<9x256xf32> to vector<1x256xf32>
    %45 = vector.broadcast %44 : vector<1x256xf32> to vector<8x256xf32>
    %46 = arith.mulf %43, %45 : vector<8x256xf32>
    %c3 = arith.constant 3 : index
    %c0_30 = arith.constant 0 : index
    %c0_31 = arith.constant 0 : index
    %47 = vector.load %arg6[%c3, %c0_30, %c0_31] : memref<9x8x8xf32, #tpu.memory_space<vmem>>, vector<1x8x8xf32>
    %48 = vector.shape_cast %47 : vector<1x8x8xf32> to vector<8x8xf32>
    %cst_32 = arith.constant dense<0.000000e+00> : vector<8x256xf32>
    %49 = tpu.matmul %48, %46, %cst_32 {dimension_numbers = #tpu.dot_dimension_numbers<[1], [0], [0], [1], [0, 0, 1, 1], [], []>} : vector<8x8xf32>, vector<8x256xf32>, vector<8x256xf32> -> vector<8x256xf32>
    %50 = arith.addf %42, %49 : vector<8x256xf32>
    %51 = vector.extract_strided_slice %0 {offsets = [4, 0], sizes = [1, 256], strides = [1, 1]} : vector<9x256xf32> to vector<1x256xf32>
    %52 = vector.broadcast %51 : vector<1x256xf32> to vector<8x256xf32>
    %53 = arith.mulf %19, %52 : vector<8x256xf32>
    %c4 = arith.constant 4 : index
    %c0_33 = arith.constant 0 : index
    %c0_34 = arith.constant 0 : index
    %54 = vector.load %arg6[%c4, %c0_33, %c0_34] : memref<9x8x8xf32, #tpu.memory_space<vmem>>, vector<1x8x8xf32>
    %55 = vector.shape_cast %54 : vector<1x8x8xf32> to vector<8x8xf32>
    %cst_35 = arith.constant dense<0.000000e+00> : vector<8x256xf32>
    %56 = tpu.matmul %55, %53, %cst_35 {dimension_numbers = #tpu.dot_dimension_numbers<[1], [0], [0], [1], [0, 0, 1, 1], [], []>} : vector<8x8xf32>, vector<8x256xf32>, vector<8x256xf32> -> vector<8x256xf32>
    %57 = arith.addf %50, %56 : vector<8x256xf32>
    %c255_i32 = arith.constant 255 : i32
    %58 = tpu.dynamic_rotate %19 by %c255_i32 dim 1 : vector<8x256xf32>, i32 -> vector<8x256xf32>
    %59 = vector.extract_strided_slice %0 {offsets = [5, 0], sizes = [1, 256], strides = [1, 1]} : vector<9x256xf32> to vector<1x256xf32>
    %60 = vector.broadcast %59 : vector<1x256xf32> to vector<8x256xf32>
    %61 = arith.mulf %58, %60 : vector<8x256xf32>
    %c5 = arith.constant 5 : index
    %c0_36 = arith.constant 0 : index
    %c0_37 = arith.constant 0 : index
    %62 = vector.load %arg6[%c5, %c0_36, %c0_37] : memref<9x8x8xf32, #tpu.memory_space<vmem>>, vector<1x8x8xf32>
    %63 = vector.shape_cast %62 : vector<1x8x8xf32> to vector<8x8xf32>
    %cst_38 = arith.constant dense<0.000000e+00> : vector<8x256xf32>
    %64 = tpu.matmul %63, %61, %cst_38 {dimension_numbers = #tpu.dot_dimension_numbers<[1], [0], [0], [1], [0, 0, 1, 1], [], []>} : vector<8x8xf32>, vector<8x256xf32>, vector<8x256xf32> -> vector<8x256xf32>
    %65 = arith.addf %57, %64 : vector<8x256xf32>
    %c241_i32 = arith.constant 241 : i32
    %66 = tpu.dynamic_rotate %19 by %c241_i32 dim 1 : vector<8x256xf32>, i32 -> vector<8x256xf32>
    %67 = vector.extract_strided_slice %0 {offsets = [6, 0], sizes = [1, 256], strides = [1, 1]} : vector<9x256xf32> to vector<1x256xf32>
    %68 = vector.broadcast %67 : vector<1x256xf32> to vector<8x256xf32>
    %69 = arith.mulf %66, %68 : vector<8x256xf32>
    %c6 = arith.constant 6 : index
    %c0_39 = arith.constant 0 : index
    %c0_40 = arith.constant 0 : index
    %70 = vector.load %arg6[%c6, %c0_39, %c0_40] : memref<9x8x8xf32, #tpu.memory_space<vmem>>, vector<1x8x8xf32>
    %71 = vector.shape_cast %70 : vector<1x8x8xf32> to vector<8x8xf32>
    %cst_41 = arith.constant dense<0.000000e+00> : vector<8x256xf32>
    %72 = tpu.matmul %71, %69, %cst_41 {dimension_numbers = #tpu.dot_dimension_numbers<[1], [0], [0], [1], [0, 0, 1, 1], [], []>} : vector<8x8xf32>, vector<8x256xf32>, vector<8x256xf32> -> vector<8x256xf32>
    %73 = arith.addf %65, %72 : vector<8x256xf32>
    %c240_i32 = arith.constant 240 : i32
    %74 = tpu.dynamic_rotate %19 by %c240_i32 dim 1 : vector<8x256xf32>, i32 -> vector<8x256xf32>
    %75 = vector.extract_strided_slice %0 {offsets = [7, 0], sizes = [1, 256], strides = [1, 1]} : vector<9x256xf32> to vector<1x256xf32>
    %76 = vector.broadcast %75 : vector<1x256xf32> to vector<8x256xf32>
    %77 = arith.mulf %74, %76 : vector<8x256xf32>
    %c7 = arith.constant 7 : index
    %c0_42 = arith.constant 0 : index
    %c0_43 = arith.constant 0 : index
    %78 = vector.load %arg6[%c7, %c0_42, %c0_43] : memref<9x8x8xf32, #tpu.memory_space<vmem>>, vector<1x8x8xf32>
    %79 = vector.shape_cast %78 : vector<1x8x8xf32> to vector<8x8xf32>
    %cst_44 = arith.constant dense<0.000000e+00> : vector<8x256xf32>
    %80 = tpu.matmul %79, %77, %cst_44 {dimension_numbers = #tpu.dot_dimension_numbers<[1], [0], [0], [1], [0, 0, 1, 1], [], []>} : vector<8x8xf32>, vector<8x256xf32>, vector<8x256xf32> -> vector<8x256xf32>
    %81 = arith.addf %73, %80 : vector<8x256xf32>
    %c239_i32 = arith.constant 239 : i32
    %82 = tpu.dynamic_rotate %19 by %c239_i32 dim 1 : vector<8x256xf32>, i32 -> vector<8x256xf32>
    %83 = vector.extract_strided_slice %0 {offsets = [8, 0], sizes = [1, 256], strides = [1, 1]} : vector<9x256xf32> to vector<1x256xf32>
    %84 = vector.broadcast %83 : vector<1x256xf32> to vector<8x256xf32>
    %85 = arith.mulf %82, %84 : vector<8x256xf32>
    %c8 = arith.constant 8 : index
    %c0_45 = arith.constant 0 : index
    %c0_46 = arith.constant 0 : index
    %86 = vector.load %arg6[%c8, %c0_45, %c0_46] : memref<9x8x8xf32, #tpu.memory_space<vmem>>, vector<1x8x8xf32>
    %87 = vector.shape_cast %86 : vector<1x8x8xf32> to vector<8x8xf32>
    %cst_47 = arith.constant dense<0.000000e+00> : vector<8x256xf32>
    %88 = tpu.matmul %87, %85, %cst_47 {dimension_numbers = #tpu.dot_dimension_numbers<[1], [0], [0], [1], [0, 0, 1, 1], [], []>} : vector<8x8xf32>, vector<8x256xf32>, vector<8x256xf32> -> vector<8x256xf32>
    %89 = arith.addf %81, %88 : vector<8x256xf32>
    %90 = vector.broadcast %3 : vector<8x1xf32> to vector<8x256xf32>
    %91 = arith.addf %89, %90 : vector<8x256xf32>
    %cst_48 = arith.constant 0.000000e+00 : f32
    %92 = vector.broadcast %cst_48 : f32 to vector<8x256xf32>
    %93 = arith.maximumf %91, %92 : vector<8x256xf32>
    %94 = vector.extract_strided_slice %14 {offsets = [16, 0], sizes = [8, 256], strides = [1, 1]} : vector<24x256xf32> to vector<8x256xf32>
    %95 = arith.addf %93, %94 : vector<8x256xf32>
    %cst_49 = arith.constant dense<0.000000e+00> : vector<4x256xf32>
    %96 = tpu.matmul %4, %95, %cst_49 {dimension_numbers = #tpu.dot_dimension_numbers<[1], [0], [0], [1], [0, 0, 1, 1], [], []>} : vector<4x8xf32>, vector<8x256xf32>, vector<4x256xf32> -> vector<4x256xf32>
    %cst_50 = arith.constant dense<0.000000e+00> : vector<4x256xf32>
    %97 = tpu.matmul %5, %10, %cst_50 {dimension_numbers = #tpu.dot_dimension_numbers<[1], [0], [0], [1], [0, 0, 1, 1], [], []>} : vector<4x6xf32>, vector<6x256xf32>, vector<4x256xf32> -> vector<4x256xf32>
    %98 = arith.addf %96, %97 : vector<4x256xf32>
    %99 = vector.broadcast %6 : vector<4x1xf32> to vector<4x256xf32>
    %100 = arith.addf %98, %99 : vector<4x256xf32>
    %101 = arith.addf %100, %8 : vector<4x256xf32>
    %c0_51 = arith.constant 0 : index
    %c0_52 = arith.constant 0 : index
    %c0_53 = arith.constant 0 : index
    %102 = vector.load %arg11[%c0_51, %c0_52, %c0_53] : memref<2x4x256xf32, #tpu.memory_space<vmem>>, vector<1x4x256xf32>
    %103 = vector.shape_cast %102 : vector<1x4x256xf32> to vector<4x256xf32>
    %104 = vector.shape_cast %101 : vector<4x256xf32> to vector<1x4x256xf32>
    tpu.vector_store %arg11[%c0_51, %c0_52, %c0_53], %104 {strides = array<i32>} : memref<2x4x256xf32, #tpu.memory_space<vmem>>, vector<1x4x256xf32>,
    %c1_54 = arith.constant 1 : index
    %c0_55 = arith.constant 0 : index
    %c0_56 = arith.constant 0 : index
    %105 = vector.load %arg1[%c1_54, %c0_55, %c0_56] : memref<2x4x256xf32, #tpu.memory_space<vmem>>, vector<1x4x256xf32>
    %106 = vector.shape_cast %105 : vector<1x4x256xf32> to vector<4x256xf32>
    %c1_57 = arith.constant 1 : index
    %c0_58 = arith.constant 0 : index
    %c0_59 = arith.constant 0 : index
    %107 = vector.load %arg2[%c1_57, %c0_58, %c0_59] : memref<2x6x256xf32, #tpu.memory_space<vmem>>, vector<1x6x256xf32>
    %108 = vector.shape_cast %107 : vector<1x6x256xf32> to vector<6x256xf32>
    %109 = tpu.concatenate %106, %108 in 0 : vector<4x256xf32>, vector<6x256xf32> -> vector<10x256xf32>
    %cst_60 = arith.constant dense<0.000000e+00> : vector<24x256xf32>
    %110 = tpu.matmul %1, %109, %cst_60 {dimension_numbers = #tpu.dot_dimension_numbers<[1], [0], [0], [1], [0, 0, 1, 1], [], []>} : vector<24x10xf32>, vector<10x256xf32>, vector<24x256xf32> -> vector<24x256xf32>
    %111 = vector.broadcast %2 : vector<24x1xf32> to vector<24x256xf32>
    %112 = arith.addf %110, %111 : vector<24x256xf32>
    %113 = vector.extract_strided_slice %112 {offsets = [0, 0], sizes = [8, 256], strides = [1, 1]} : vector<24x256xf32> to vector<8x256xf32>
    %cst_61 = arith.constant 0.000000e+00 : f32
    %114 = vector.broadcast %cst_61 : f32 to vector<8x256xf32>
    %115 = arith.maximumf %113, %114 : vector<8x256xf32>
    %116 = vector.extract_strided_slice %112 {offsets = [8, 0], sizes = [8, 256], strides = [1, 1]} : vector<24x256xf32> to vector<8x256xf32>
    %117 = arith.addf %115, %116 : vector<8x256xf32>
    %c17_i32_62 = arith.constant 17 : i32
    %118 = tpu.dynamic_rotate %117 by %c17_i32_62 dim 1 : vector<8x256xf32>, i32 -> vector<8x256xf32>
    %119 = vector.extract_strided_slice %0 {offsets = [0, 0], sizes = [1, 256], strides = [1, 1]} : vector<9x256xf32> to vector<1x256xf32>
    %120 = vector.broadcast %119 : vector<1x256xf32> to vector<8x256xf32>
    %121 = arith.mulf %118, %120 : vector<8x256xf32>
    %c0_63 = arith.constant 0 : index
    %c0_64 = arith.constant 0 : index
    %c0_65 = arith.constant 0 : index
    %122 = vector.load %arg6[%c0_63, %c0_64, %c0_65] : memref<9x8x8xf32, #tpu.memory_space<vmem>>, vector<1x8x8xf32>
    %123 = vector.shape_cast %122 : vector<1x8x8xf32> to vector<8x8xf32>
    %cst_66 = arith.constant dense<0.000000e+00> : vector<8x256xf32>
    %124 = tpu.matmul %123, %121, %cst_66 {dimension_numbers = #tpu.dot_dimension_numbers<[1], [0], [0], [1], [0, 0, 1, 1], [], []>} : vector<8x8xf32>, vector<8x256xf32>, vector<8x256xf32> -> vector<8x256xf32>
    %c16_i32_67 = arith.constant 16 : i32
    %125 = tpu.dynamic_rotate %117 by %c16_i32_67 dim 1 : vector<8x256xf32>, i32 -> vector<8x256xf32>
    %126 = vector.extract_strided_slice %0 {offsets = [1, 0], sizes = [1, 256], strides = [1, 1]} : vector<9x256xf32> to vector<1x256xf32>
    %127 = vector.broadcast %126 : vector<1x256xf32> to vector<8x256xf32>
    %128 = arith.mulf %125, %127 : vector<8x256xf32>
    %c1_68 = arith.constant 1 : index
    %c0_69 = arith.constant 0 : index
    %c0_70 = arith.constant 0 : index
    %129 = vector.load %arg6[%c1_68, %c0_69, %c0_70] : memref<9x8x8xf32, #tpu.memory_space<vmem>>, vector<1x8x8xf32>
    %130 = vector.shape_cast %129 : vector<1x8x8xf32> to vector<8x8xf32>
    %cst_71 = arith.constant dense<0.000000e+00> : vector<8x256xf32>
    %131 = tpu.matmul %130, %128, %cst_71 {dimension_numbers = #tpu.dot_dimension_numbers<[1], [0], [0], [1], [0, 0, 1, 1], [], []>} : vector<8x8xf32>, vector<8x256xf32>, vector<8x256xf32> -> vector<8x256xf32>
    %132 = arith.addf %124, %131 : vector<8x256xf32>
    %c15_i32_72 = arith.constant 15 : i32
    %133 = tpu.dynamic_rotate %117 by %c15_i32_72 dim 1 : vector<8x256xf32>, i32 -> vector<8x256xf32>
    %134 = vector.extract_strided_slice %0 {offsets = [2, 0], sizes = [1, 256], strides = [1, 1]} : vector<9x256xf32> to vector<1x256xf32>
    %135 = vector.broadcast %134 : vector<1x256xf32> to vector<8x256xf32>
    %136 = arith.mulf %133, %135 : vector<8x256xf32>
    %c2_73 = arith.constant 2 : index
    %c0_74 = arith.constant 0 : index
    %c0_75 = arith.constant 0 : index
    %137 = vector.load %arg6[%c2_73, %c0_74, %c0_75] : memref<9x8x8xf32, #tpu.memory_space<vmem>>, vector<1x8x8xf32>
    %138 = vector.shape_cast %137 : vector<1x8x8xf32> to vector<8x8xf32>
    %cst_76 = arith.constant dense<0.000000e+00> : vector<8x256xf32>
    %139 = tpu.matmul %138, %136, %cst_76 {dimension_numbers = #tpu.dot_dimension_numbers<[1], [0], [0], [1], [0, 0, 1, 1], [], []>} : vector<8x8xf32>, vector<8x256xf32>, vector<8x256xf32> -> vector<8x256xf32>
    %140 = arith.addf %132, %139 : vector<8x256xf32>
    %c1_i32_77 = arith.constant 1 : i32
    %141 = tpu.dynamic_rotate %117 by %c1_i32_77 dim 1 : vector<8x256xf32>, i32 -> vector<8x256xf32>
    %142 = vector.extract_strided_slice %0 {offsets = [3, 0], sizes = [1, 256], strides = [1, 1]} : vector<9x256xf32> to vector<1x256xf32>
    %143 = vector.broadcast %142 : vector<1x256xf32> to vector<8x256xf32>
    %144 = arith.mulf %141, %143 : vector<8x256xf32>
    %c3_78 = arith.constant 3 : index
    %c0_79 = arith.constant 0 : index
    %c0_80 = arith.constant 0 : index
    %145 = vector.load %arg6[%c3_78, %c0_79, %c0_80] : memref<9x8x8xf32, #tpu.memory_space<vmem>>, vector<1x8x8xf32>
    %146 = vector.shape_cast %145 : vector<1x8x8xf32> to vector<8x8xf32>
    %cst_81 = arith.constant dense<0.000000e+00> : vector<8x256xf32>
    %147 = tpu.matmul %146, %144, %cst_81 {dimension_numbers = #tpu.dot_dimension_numbers<[1], [0], [0], [1], [0, 0, 1, 1], [], []>} : vector<8x8xf32>, vector<8x256xf32>, vector<8x256xf32> -> vector<8x256xf32>
    %148 = arith.addf %140, %147 : vector<8x256xf32>
    %149 = vector.extract_strided_slice %0 {offsets = [4, 0], sizes = [1, 256], strides = [1, 1]} : vector<9x256xf32> to vector<1x256xf32>
    %150 = vector.broadcast %149 : vector<1x256xf32> to vector<8x256xf32>
    %151 = arith.mulf %117, %150 : vector<8x256xf32>
    %c4_82 = arith.constant 4 : index
    %c0_83 = arith.constant 0 : index
    %c0_84 = arith.constant 0 : index
    %152 = vector.load %arg6[%c4_82, %c0_83, %c0_84] : memref<9x8x8xf32, #tpu.memory_space<vmem>>, vector<1x8x8xf32>
    %153 = vector.shape_cast %152 : vector<1x8x8xf32> to vector<8x8xf32>
    %cst_85 = arith.constant dense<0.000000e+00> : vector<8x256xf32>
    %154 = tpu.matmul %153, %151, %cst_85 {dimension_numbers = #tpu.dot_dimension_numbers<[1], [0], [0], [1], [0, 0, 1, 1], [], []>} : vector<8x8xf32>, vector<8x256xf32>, vector<8x256xf32> -> vector<8x256xf32>
    %155 = arith.addf %148, %154 : vector<8x256xf32>
    %c255_i32_86 = arith.constant 255 : i32
    %156 = tpu.dynamic_rotate %117 by %c255_i32_86 dim 1 : vector<8x256xf32>, i32 -> vector<8x256xf32>
    %157 = vector.extract_strided_slice %0 {offsets = [5, 0], sizes = [1, 256], strides = [1, 1]} : vector<9x256xf32> to vector<1x256xf32>
    %158 = vector.broadcast %157 : vector<1x256xf32> to vector<8x256xf32>
    %159 = arith.mulf %156, %158 : vector<8x256xf32>
    %c5_87 = arith.constant 5 : index
    %c0_88 = arith.constant 0 : index
    %c0_89 = arith.constant 0 : index
    %160 = vector.load %arg6[%c5_87, %c0_88, %c0_89] : memref<9x8x8xf32, #tpu.memory_space<vmem>>, vector<1x8x8xf32>
    %161 = vector.shape_cast %160 : vector<1x8x8xf32> to vector<8x8xf32>
    %cst_90 = arith.constant dense<0.000000e+00> : vector<8x256xf32>
    %162 = tpu.matmul %161, %159, %cst_90 {dimension_numbers = #tpu.dot_dimension_numbers<[1], [0], [0], [1], [0, 0, 1, 1], [], []>} : vector<8x8xf32>, vector<8x256xf32>, vector<8x256xf32> -> vector<8x256xf32>
    %163 = arith.addf %155, %162 : vector<8x256xf32>
    %c241_i32_91 = arith.constant 241 : i32
    %164 = tpu.dynamic_rotate %117 by %c241_i32_91 dim 1 : vector<8x256xf32>, i32 -> vector<8x256xf32>
    %165 = vector.extract_strided_slice %0 {offsets = [6, 0], sizes = [1, 256], strides = [1, 1]} : vector<9x256xf32> to vector<1x256xf32>
    %166 = vector.broadcast %165 : vector<1x256xf32> to vector<8x256xf32>
    %167 = arith.mulf %164, %166 : vector<8x256xf32>
    %c6_92 = arith.constant 6 : index
    %c0_93 = arith.constant 0 : index
    %c0_94 = arith.constant 0 : index
    %168 = vector.load %arg6[%c6_92, %c0_93, %c0_94] : memref<9x8x8xf32, #tpu.memory_space<vmem>>, vector<1x8x8xf32>
    %169 = vector.shape_cast %168 : vector<1x8x8xf32> to vector<8x8xf32>
    %cst_95 = arith.constant dense<0.000000e+00> : vector<8x256xf32>
    %170 = tpu.matmul %169, %167, %cst_95 {dimension_numbers = #tpu.dot_dimension_numbers<[1], [0], [0], [1], [0, 0, 1, 1], [], []>} : vector<8x8xf32>, vector<8x256xf32>, vector<8x256xf32> -> vector<8x256xf32>
    %171 = arith.addf %163, %170 : vector<8x256xf32>
    %c240_i32_96 = arith.constant 240 : i32
    %172 = tpu.dynamic_rotate %117 by %c240_i32_96 dim 1 : vector<8x256xf32>, i32 -> vector<8x256xf32>
    %173 = vector.extract_strided_slice %0 {offsets = [7, 0], sizes = [1, 256], strides = [1, 1]} : vector<9x256xf32> to vector<1x256xf32>
    %174 = vector.broadcast %173 : vector<1x256xf32> to vector<8x256xf32>
    %175 = arith.mulf %172, %174 : vector<8x256xf32>
    %c7_97 = arith.constant 7 : index
    %c0_98 = arith.constant 0 : index
    %c0_99 = arith.constant 0 : index
    %176 = vector.load %arg6[%c7_97, %c0_98, %c0_99] : memref<9x8x8xf32, #tpu.memory_space<vmem>>, vector<1x8x8xf32>
    %177 = vector.shape_cast %176 : vector<1x8x8xf32> to vector<8x8xf32>
    %cst_100 = arith.constant dense<0.000000e+00> : vector<8x256xf32>
    %178 = tpu.matmul %177, %175, %cst_100 {dimension_numbers = #tpu.dot_dimension_numbers<[1], [0], [0], [1], [0, 0, 1, 1], [], []>} : vector<8x8xf32>, vector<8x256xf32>, vector<8x256xf32> -> vector<8x256xf32>
    %179 = arith.addf %171, %178 : vector<8x256xf32>
    %c239_i32_101 = arith.constant 239 : i32
    %180 = tpu.dynamic_rotate %117 by %c239_i32_101 dim 1 : vector<8x256xf32>, i32 -> vector<8x256xf32>
    %181 = vector.extract_strided_slice %0 {offsets = [8, 0], sizes = [1, 256], strides = [1, 1]} : vector<9x256xf32> to vector<1x256xf32>
    %182 = vector.broadcast %181 : vector<1x256xf32> to vector<8x256xf32>
    %183 = arith.mulf %180, %182 : vector<8x256xf32>
    %c8_102 = arith.constant 8 : index
    %c0_103 = arith.constant 0 : index
    %c0_104 = arith.constant 0 : index
    %184 = vector.load %arg6[%c8_102, %c0_103, %c0_104] : memref<9x8x8xf32, #tpu.memory_space<vmem>>, vector<1x8x8xf32>
    %185 = vector.shape_cast %184 : vector<1x8x8xf32> to vector<8x8xf32>
    %cst_105 = arith.constant dense<0.000000e+00> : vector<8x256xf32>
    %186 = tpu.matmul %185, %183, %cst_105 {dimension_numbers = #tpu.dot_dimension_numbers<[1], [0], [0], [1], [0, 0, 1, 1], [], []>} : vector<8x8xf32>, vector<8x256xf32>, vector<8x256xf32> -> vector<8x256xf32>
    %187 = arith.addf %179, %186 : vector<8x256xf32>
    %188 = vector.broadcast %3 : vector<8x1xf32> to vector<8x256xf32>
    %189 = arith.addf %187, %188 : vector<8x256xf32>
    %cst_106 = arith.constant 0.000000e+00 : f32
    %190 = vector.broadcast %cst_106 : f32 to vector<8x256xf32>
    %191 = arith.maximumf %189, %190 : vector<8x256xf32>
    %192 = vector.extract_strided_slice %112 {offsets = [16, 0], sizes = [8, 256], strides = [1, 1]} : vector<24x256xf32> to vector<8x256xf32>
    %193 = arith.addf %191, %192 : vector<8x256xf32>
    %cst_107 = arith.constant dense<0.000000e+00> : vector<4x256xf32>
    %194 = tpu.matmul %4, %193, %cst_107 {dimension_numbers = #tpu.dot_dimension_numbers<[1], [0], [0], [1], [0, 0, 1, 1], [], []>} : vector<4x8xf32>, vector<8x256xf32>, vector<4x256xf32> -> vector<4x256xf32>
    %cst_108 = arith.constant dense<0.000000e+00> : vector<4x256xf32>
    %195 = tpu.matmul %5, %108, %cst_108 {dimension_numbers = #tpu.dot_dimension_numbers<[1], [0], [0], [1], [0, 0, 1, 1], [], []>} : vector<4x6xf32>, vector<6x256xf32>, vector<4x256xf32> -> vector<4x256xf32>
    %196 = arith.addf %194, %195 : vector<4x256xf32>
    %197 = vector.broadcast %6 : vector<4x1xf32> to vector<4x256xf32>
    %198 = arith.addf %196, %197 : vector<4x256xf32>
    %199 = arith.addf %198, %106 : vector<4x256xf32>
    %c1_109 = arith.constant 1 : index
    %c0_110 = arith.constant 0 : index
    %c0_111 = arith.constant 0 : index
    %200 = vector.load %arg11[%c1_109, %c0_110, %c0_111] : memref<2x4x256xf32, #tpu.memory_space<vmem>>, vector<1x4x256xf32>
    %201 = vector.shape_cast %200 : vector<1x4x256xf32> to vector<4x256xf32>
    %202 = vector.shape_cast %199 : vector<4x256xf32> to vector<1x4x256xf32>
    tpu.vector_store %arg11[%c1_109, %c0_110, %c0_111], %202 {strides = array<i32>} : memref<2x4x256xf32, #tpu.memory_space<vmem>>, vector<1x4x256xf32>,
    return
  }
  func.func @transform_0(%arg0: i32) -> (i32, i32, i32) {
    %c0_i32 = arith.constant 0 : i32
    %c0_i32_0 = arith.constant 0 : i32
    %c0_i32_1 = arith.constant 0 : i32
    return %arg0, %c0_i32, %c0_i32_0 : i32, i32, i32
  }
  func.func @transform_1(%arg0: i32) -> (i32, i32, i32) {
    %c0_i32 = arith.constant 0 : i32
    %c0_i32_0 = arith.constant 0 : i32
    %c0_i32_1 = arith.constant 0 : i32
    return %arg0, %c0_i32, %c0_i32_0 : i32, i32, i32
  }
  func.func @transform_2(%arg0: i32) -> (i32, i32) {
    %c0_i32 = arith.constant 0 : i32
    %c0_i32_0 = arith.constant 0 : i32
    %c0_i32_1 = arith.constant 0 : i32
    return %c0_i32, %c0_i32_0 : i32, i32
  }
  func.func @transform_3(%arg0: i32) -> (i32, i32) {
    %c0_i32 = arith.constant 0 : i32
    %c0_i32_0 = arith.constant 0 : i32
    %c0_i32_1 = arith.constant 0 : i32
    return %c0_i32, %c0_i32_0 : i32, i32
  }
  func.func @transform_4(%arg0: i32) -> (i32, i32) {
    %c0_i32 = arith.constant 0 : i32
    %c0_i32_0 = arith.constant 0 : i32
    %c0_i32_1 = arith.constant 0 : i32
    return %c0_i32, %c0_i32_0 : i32, i32
  }
  func.func @transform_5(%arg0: i32) -> (i32, i32, i32) {
    %c0_i32 = arith.constant 0 : i32
    %c0_i32_0 = arith.constant 0 : i32
    %c0_i32_1 = arith.constant 0 : i32
    %c0_i32_2 = arith.constant 0 : i32
    return %c0_i32, %c0_i32_0, %c0_i32_1 : i32, i32, i32
  }
  func.func @transform_6(%arg0: i32) -> (i32, i32) {
    %c0_i32 = arith.constant 0 : i32
    %c0_i32_0 = arith.constant 0 : i32
    %c0_i32_1 = arith.constant 0 : i32
    return %c0_i32, %c0_i32_0 : i32, i32
  }
  func.func @transform_7(%arg0: i32) -> (i32, i32) {
    %c0_i32 = arith.constant 0 : i32
    %c0_i32_0 = arith.constant 0 : i32
    %c0_i32_1 = arith.constant 0 : i32
    return %c0_i32, %c0_i32_0 : i32, i32
  }
  func.func @transform_8(%arg0: i32) -> (i32, i32) {
    %c0_i32 = arith.constant 0 : i32
    %c0_i32_0 = arith.constant 0 : i32
    %c0_i32_1 = arith.constant 0 : i32
    return %c0_i32, %c0_i32_0 : i32, i32
  }
  func.func @transform_9(%arg0: i32) -> (i32, i32) {
    %c0_i32 = arith.constant 0 : i32
    %c0_i32_0 = arith.constant 0 : i32
    %c0_i32_1 = arith.constant 0 : i32
    return %c0_i32, %c0_i32_0 : i32, i32
  }
  func.func @transform_10(%arg0: i32) -> (i32, i32, i32) {
    %c0_i32 = arith.constant 0 : i32
    %c0_i32_0 = arith.constant 0 : i32
    %c0_i32_1 = arith.constant 0 : i32
    return %arg0, %c0_i32, %c0_i32_0 : i32, i32, i32
  }
}

</mosaic_0001>

<llo_original>
// kernel: tpu_custom_call.1
$region0: #{tpu_custom_call.1}
  #allocation0 [shape = 'u32[]', space=smem, size = 0x4, offset = 0x4, fixed_abs, tag = 'smem constant byte address 0x4 - core index']
  #allocation1 [shape = 'u32[144,128]{1,0:T(1,128)}', space=vmem, size = 0x12000, scoped, tag = 'internal scratch']
  %s0 = inlined_call_operand.vmem [shape: f32[4,4,256], index: 0, kind: input, shape index: {}]
  %s1 = inlined_call_operand.vmem [shape: f32[4,6,256], index: 1, kind: input, shape index: {}]
  %s2 = inlined_call_operand.vmem [shape: f32[9,256], index: 2, kind: input, shape index: {}]
  %s3 = inlined_call_operand.vmem [shape: f32[24,10], index: 3, kind: input, shape index: {}]
  %s4 = inlined_call_operand.vmem [shape: f32[24,1], index: 4, kind: input, shape index: {}]
  %s5 = inlined_call_operand.vmem [shape: f32[9,8,8], index: 5, kind: input, shape index: {}]
  %s6 = inlined_call_operand.vmem [shape: f32[8,1], index: 6, kind: input, shape index: {}]
  %s7 = inlined_call_operand.vmem [shape: f32[4,8], index: 7, kind: input, shape index: {}]
  %s8 = inlined_call_operand.vmem [shape: f32[4,6], index: 8, kind: input, shape index: {}]
  %s9 = inlined_call_operand.vmem [shape: f32[4,1], index: 9, kind: input, shape index: {}]
  %s10 = inlined_call_operand.hbm [shape: f32[4,4,256], index: 10, kind: output, shape index: {}]
  %s11 = sld [smem:[#allocation0]]
  $region73: #{tpu_custom_call.1} parent=0
    _
  %s13 = ssub.s32 1, %s11
  %s14 = scalar_select 0, %s13, %s11
  $region1: #{tpu_custom_call.1} parent=0
    #allocation2 [shape = 'u8[16384]{0}', space=vmem, size = 0x4000, scoped, tag = 'output window, operand 0']
    #allocation3 [shape = 's32[2]{0}', space=sflag, size = 0x8, scoped, tag = 'scoped memory for tpu_custom_call.1']
    %15 = vsyncpa [#allocation3], 0
    %s16 = scalar_lea.sflag [#allocation3], 1
    %17 = vsyncpa %s16, 0
    loop: start=0, step=1, limit=4
    $region2: #{tpu_custom_call.1} parent=1 // loop_pre_header
      _
    $region3: #{tpu_custom_call.1} parent=1 // loop_header
      %s19 = sphi 0, %s23
      %p20 = scmp.ge.s32.totalorder %s19, 4
      %s29 = sphi 0, %s31
      %s32 = sphi 0, %s29
      %s33 = sphi 0, %s32
      %s49 = sphi 0, %s33
      %s55 = sphi 0, %s57
      %s58 = sphi 0, %s55
      %s59 = sphi 0, %s58
      %s75 = sphi 0, %s59
      %s79 = sphi 0, %s79
      %s81 = sphi 0, %s79
      %s82 = sphi 0, %s81
      %s96 = sphi 0, %s82
      %s100 = sphi 0, %s100
      %s102 = sphi 0, %s100
      %s103 = sphi 0, %s102
      %s117 = sphi 0, %s103
      %s121 = sphi 0, %s121
      %s123 = sphi 0, %s121
      %s124 = sphi 0, %s123
      %s138 = sphi 0, %s124
      %s142 = sphi 0, %s142
      %s144 = sphi 0, %s142
      %s145 = sphi 0, %s144
      %s159 = sphi 0, %s145
      %s163 = sphi 0, %s163
      %s165 = sphi 0, %s163
      %s166 = sphi 0, %s165
      %s180 = sphi 0, %s166
      %s184 = sphi 0, %s184
      %s186 = sphi 0, %s184
      %s187 = sphi 0, %s186
      %s201 = sphi 0, %s187
      %s205 = sphi 0, %s205
      %s207 = sphi 0, %s205
      %s208 = sphi 0, %s207
      %s222 = sphi 0, %s208
      %s226 = sphi 0, %s226
      %s228 = sphi 0, %s226
      %s229 = sphi 0, %s228
      %s243 = sphi 0, %s229
      %s249 = sphi 0, %s251
      %s252 = sphi 0, %s249
      %s253 = sphi 0, %s252
      %s269 = sphi 0, %s253
    $region4: #{tpu_custom_call.1} parent=1 // loop_header_branch
      %22 = sbr.rel (%p20) target = $region8
    $region5: #{tpu_custom_call.1} parent=1 // loop_body
      %s24 = ssub.s32 %s19, 1
      %s25 = ssub.s32 %s19, 2
      %s26 = sadd.s32 %s19, 1
      %s27 = ssub.s32 %s19, %s26
      %p28 = scmp.eq.s32.totalorder %s27, 0
      %s30 = sadd.s32 %s29, 1
      %s31 = scalar_select %p28, %s29, %s30
      %p34 = pneg %p28
      %p35 = scmp.eq.s32.totalorder %s19, 1
      %p36 = por %p34, %p35
      %p37 = scmp.ne.s32.totalorder %s29, %s32
      %p38 = scmp.eq.s32.totalorder %s19, 0
      %p39 = por %p37, %p38
      %p40 = scmp.ne.s32.totalorder %s29, %s32
      %p41 = scmp.eq.s32.totalorder %s24, 1
      %p42 = por %p40, %p41
      %p43 = scmp.ne.s32.totalorder %s32, %s33
      %p44 = scmp.eq.s32.totalorder %s24, 0
      %p45 = por %p43, %p44
      %p46 = scmp.ne.s32.totalorder %s32, %s33
      %p47 = scmp.eq.s32.totalorder %s25, 1
      %p48 = por %p46, %p47
      %p50 = scmp.ne.s32.totalorder %s33, %s49
      %p51 = scmp.eq.s32.totalorder %s25, 0
      %p52 = por %p50, %p51
      %s53 = ssub.s32 %s19, %s26
      %p54 = scmp.eq.s32.totalorder %s53, 0
      %s56 = sadd.s32 %s55, 1
      %s57 = scalar_select %p54, %s55, %s56
      %p60 = pneg %p54
      %p61 = scmp.eq.s32.totalorder %s19, 1
      %p62 = por %p60, %p61
      %p63 = scmp.ne.s32.totalorder %s55, %s58
      %p64 = scmp.eq.s32.totalorder %s19, 0
      %p65 = por %p63, %p64
      %p66 = scmp.ne.s32.totalorder %s55, %s58
      %p67 = scmp.eq.s32.totalorder %s24, 1
      %p68 = por %p66, %p67
      %p69 = scmp.ne.s32.totalorder %s58, %s59
      %p70 = scmp.eq.s32.totalorder %s24, 0
      %p71 = por %p69, %p70
      %p72 = scmp.ne.s32.totalorder %s58, %s59
      %p73 = scmp.eq.s32.totalorder %s25, 1
      %p74 = por %p72, %p73
      %p76 = scmp.ne.s32.totalorder %s59, %s75
      %p77 = scmp.eq.s32.totalorder %s25, 0
      %p78 = por %p76, %p77
      %s80 = sadd.s32 %s79, 1
      %p83 = scmp.eq.s32.totalorder %s19, 1
      %p84 = scmp.ne.s32.totalorder %s79, %s81
      %p85 = scmp.eq.s32.totalorder %s19, 0
      %p86 = por %p84, %p85
      %p87 = scmp.ne.s32.totalorder %s79, %s81
      %p88 = scmp.eq.s32.totalorder %s24, 1
      %p89 = por %p87, %p88
      %p90 = scmp.ne.s32.totalorder %s81, %s82
      %p91 = scmp.eq.s32.totalorder %s24, 0
      %p92 = por %p90, %p91
      %p93 = scmp.ne.s32.totalorder %s81, %s82
      %p94 = scmp.eq.s32.totalorder %s25, 1
      %p95 = por %p93, %p94
      %p97 = scmp.ne.s32.totalorder %s82, %s96
      %p98 = scmp.eq.s32.totalorder %s25, 0
      %p99 = por %p97, %p98
      %s101 = sadd.s32 %s100, 1
      %p104 = scmp.eq.s32.totalorder %s19, 1
      %p105 = scmp.ne.s32.totalorder %s100, %s102
      %p106 = scmp.eq.s32.totalorder %s19, 0
      %p107 = por %p105, %p106
      %p108 = scmp.ne.s32.totalorder %s100, %s102
      %p109 = scmp.eq.s32.totalorder %s24, 1
      %p110 = por %p108, %p109
      %p111 = scmp.ne.s32.totalorder %s102, %s103
      %p112 = scmp.eq.s32.totalorder %s24, 0
      %p113 = por %p111, %p112
      %p114 = scmp.ne.s32.totalorder %s102, %s103
      %p115 = scmp.eq.s32.totalorder %s25, 1
      %p116 = por %p114, %p115
      %p118 = scmp.ne.s32.totalorder %s103, %s117
      %p119 = scmp.eq.s32.totalorder %s25, 0
      %p120 = por %p118, %p119
      %s122 = sadd.s32 %s121, 1
      %p125 = scmp.eq.s32.totalorder %s19, 1
      %p126 = scmp.ne.s32.totalorder %s121, %s123
      %p127 = scmp.eq.s32.totalorder %s19, 0
      %p128 = por %p126, %p127
      %p129 = scmp.ne.s32.totalorder %s121, %s123
      %p130 = scmp.eq.s32.totalorder %s24, 1
      %p131 = por %p129, %p130
      %p132 = scmp.ne.s32.totalorder %s123, %s124
      %p133 = scmp.eq.s32.totalorder %s24, 0
      %p134 = por %p132, %p133
      %p135 = scmp.ne.s32.totalorder %s123, %s124
      %p136 = scmp.eq.s32.totalorder %s25, 1
      %p137 = por %p135, %p136
      %p139 = scmp.ne.s32.totalorder %s124, %s138
      %p140 = scmp.eq.s32.totalorder %s25, 0
      %p141 = por %p139, %p140
      %s143 = sadd.s32 %s142, 1
      %p146 = scmp.eq.s32.totalorder %s19, 1
      %p147 = scmp.ne.s32.totalorder %s142, %s144
      %p148 = scmp.eq.s32.totalorder %s19, 0
      %p149 = por %p147, %p148
      %p150 = scmp.ne.s32.totalorder %s142, %s144
      %p151 = scmp.eq.s32.totalorder %s24, 1
      %p152 = por %p150, %p151
      %p153 = scmp.ne.s32.totalorder %s144, %s145
      %p154 = scmp.eq.s32.totalorder %s24, 0
      %p155 = por %p153, %p154
      %p156 = scmp.ne.s32.totalorder %s144, %s145
      %p157 = scmp.eq.s32.totalorder %s25, 1
      %p158 = por %p156, %p157
      %p160 = scmp.ne.s32.totalorder %s145, %s159
      %p161 = scmp.eq.s32.totalorder %s25, 0
      %p162 = por %p160, %p161
      %s164 = sadd.s32 %s163, 1
      %p167 = scmp.eq.s32.totalorder %s19, 1
      %p168 = scmp.ne.s32.totalorder %s163, %s165
      %p169 = scmp.eq.s32.totalorder %s19, 0
      %p170 = por %p168, %p169
      %p171 = scmp.ne.s32.totalorder %s163, %s165
      %p172 = scmp.eq.s32.totalorder %s24, 1
      %p173 = por %p171, %p172
      %p174 = scmp.ne.s32.totalorder %s165, %s166
      %p175 = scmp.eq.s32.totalorder %s24, 0
      %p176 = por %p174, %p175
      %p177 = scmp.ne.s32.totalorder %s165, %s166
      %p178 = scmp.eq.s32.totalorder %s25, 1
      %p179 = por %p177, %p178
      %p181 = scmp.ne.s32.totalorder %s166, %s180
      %p182 = scmp.eq.s32.totalorder %s25, 0
      %p183 = por %p181, %p182
      %s185 = sadd.s32 %s184, 1
      %p188 = scmp.eq.s32.totalorder %s19, 1
      %p189 = scmp.ne.s32.totalorder %s184, %s186
      %p190 = scmp.eq.s32.totalorder %s19, 0
      %p191 = por %p189, %p190
      %p192 = scmp.ne.s32.totalorder %s184, %s186
      %p193 = scmp.eq.s32.totalorder %s24, 1
      %p194 = por %p192, %p193
      %p195 = scmp.ne.s32.totalorder %s186, %s187
      %p196 = scmp.eq.s32.totalorder %s24, 0
      %p197 = por %p195, %p196
      %p198 = scmp.ne.s32.totalorder %s186, %s187
      %p199 = scmp.eq.s32.totalorder %s25, 1
      %p200 = por %p198, %p199
      %p202 = scmp.ne.s32.totalorder %s187, %s201
      %p203 = scmp.eq.s32.totalorder %s25, 0
      %p204 = por %p202, %p203
      %s206 = sadd.s32 %s205, 1
      %p209 = scmp.eq.s32.totalorder %s19, 1
      %p210 = scmp.ne.s32.totalorder %s205, %s207
      %p211 = scmp.eq.s32.totalorder %s19, 0
      %p212 = por %p210, %p211
      %p213 = scmp.ne.s32.totalorder %s205, %s207
      %p214 = scmp.eq.s32.totalorder %s24, 1
      %p215 = por %p213, %p214
      %p216 = scmp.ne.s32.totalorder %s207, %s208
      %p217 = scmp.eq.s32.totalorder %s24, 0
      %p218 = por %p216, %p217
      %p219 = scmp.ne.s32.totalorder %s207, %s208
      %p220 = scmp.eq.s32.totalorder %s25, 1
      %p221 = por %p219, %p220
      %p223 = scmp.ne.s32.totalorder %s208, %s222
      %p224 = scmp.eq.s32.totalorder %s25, 0
      %p225 = por %p223, %p224
      %s227 = sadd.s32 %s226, 1
      %p230 = scmp.eq.s32.totalorder %s19, 1
      %p231 = scmp.ne.s32.totalorder %s226, %s228
      %p232 = scmp.eq.s32.totalorder %s19, 0
      %p233 = por %p231, %p232
      %p234 = scmp.ne.s32.totalorder %s226, %s228
      %p235 = scmp.eq.s32.totalorder %s24, 1
      %p236 = por %p234, %p235
      %p237 = scmp.ne.s32.totalorder %s228, %s229
      %p238 = scmp.eq.s32.totalorder %s24, 0
      %p239 = por %p237, %p238
      %p240 = scmp.ne.s32.totalorder %s228, %s229
      %p241 = scmp.eq.s32.totalorder %s25, 1
      %p242 = por %p240, %p241
      %p244 = scmp.ne.s32.totalorder %s229, %s243
      %p245 = scmp.eq.s32.totalorder %s25, 0
      %p246 = por %p244, %p245
      %s247 = ssub.s32 %s19, %s26
      %p248 = scmp.eq.s32.totalorder %s247, 0
      %s250 = sadd.s32 %s249, 1
      %s251 = scalar_select %p248, %s249, %s250
      %p254 = pneg %p248
      %p255 = scmp.eq.s32.totalorder %s19, 1
      %p256 = por %p254, %p255
      %p257 = scmp.ne.s32.totalorder %s249, %s252
      %p258 = scmp.eq.s32.totalorder %s19, 0
      %p259 = por %p257, %p258
      %p260 = scmp.ne.s32.totalorder %s249, %s252
      %p261 = scmp.eq.s32.totalorder %s24, 1
      %p262 = por %p260, %p261
      %p263 = scmp.ne.s32.totalorder %s252, %s253
      %p264 = scmp.eq.s32.totalorder %s24, 0
      %p265 = por %p263, %p264
      %p266 = scmp.ne.s32.totalorder %s252, %s253
      %p267 = scmp.eq.s32.totalorder %s25, 1
      %p268 = por %p266, %p267
      %p270 = scmp.ne.s32.totalorder %s253, %s269
      %p271 = scmp.eq.s32.totalorder %s25, 0
      %p272 = por %p270, %p271
      %p273 = scmp.le.s32.totalorder 1, %s19
      %p274 = scmp.lt.s32.totalorder %s19, 3
      %p275 = pnand %p273, %p274
      %p276 = pneg %p275
      // Predicated region
      $region9: #{tpu_custom_call.1} parent=5 // pred_check
        _
      $region10: #{tpu_custom_call.1} parent=5 // pred_check_branch
        %278 = sbr.rel (%p275) target = $region12
      $region11: #{tpu_custom_call.1} parent=5 // pred_region
        %s279 = ssub.s32 %s19, 1
        // Predicated region
        $region13: #{tpu_custom_call.1} parent=11 // pred_check
          %p280 = pneg %p92
        $region14: #{tpu_custom_call.1} parent=11 // pred_check_branch
          %282 = sbr.rel (%p280) target = $region16
        $region15: #{tpu_custom_call.1} parent=11 // pred_region
          _
        $region16: #{tpu_custom_call.1} parent=11 // pred_fallthru
          _
        // Predicated region
        $region17: #{tpu_custom_call.1} parent=11 // pred_check
          %p283 = pneg %p113
        $region18: #{tpu_custom_call.1} parent=11 // pred_check_branch
          %285 = sbr.rel (%p283) target = $region20
        $region19: #{tpu_custom_call.1} parent=11 // pred_region
          _
        $region20: #{tpu_custom_call.1} parent=11 // pred_fallthru
          _
        // Predicated region
        $region21: #{tpu_custom_call.1} parent=11 // pred_check
          %p286 = pneg %p134
        $region22: #{tpu_custom_call.1} parent=11 // pred_check_branch
          %288 = sbr.rel (%p286) target = $region24
        $region23: #{tpu_custom_call.1} parent=11 // pred_region
          _
        $region24: #{tpu_custom_call.1} parent=11 // pred_fallthru
          _
        // Predicated region
        $region25: #{tpu_custom_call.1} parent=11 // pred_check
          %p289 = pneg %p155
        $region26: #{tpu_custom_call.1} parent=11 // pred_check_branch
          %291 = sbr.rel (%p289) target = $region28
        $region27: #{tpu_custom_call.1} parent=11 // pred_region
          _
        $region28: #{tpu_custom_call.1} parent=11 // pred_fallthru
          _
        // Predicated region
        $region29: #{tpu_custom_call.1} parent=11 // pred_check
          %p292 = pneg %p176
        $region30: #{tpu_custom_call.1} parent=11 // pred_check_branch
          %294 = sbr.rel (%p292) target = $region32
        $region31: #{tpu_custom_call.1} parent=11 // pred_region
          _
        $region32: #{tpu_custom_call.1} parent=11 // pred_fallthru
          _
        // Predicated region
        $region33: #{tpu_custom_call.1} parent=11 // pred_check
          %p295 = pneg %p197
        $region34: #{tpu_custom_call.1} parent=11 // pred_check_branch
          %297 = sbr.rel (%p295) target = $region36
        $region35: #{tpu_custom_call.1} parent=11 // pred_region
          _
        $region36: #{tpu_custom_call.1} parent=11 // pred_fallthru
          _
        // Predicated region
        $region37: #{tpu_custom_call.1} parent=11 // pred_check
          %p298 = pneg %p218
        $region38: #{tpu_custom_call.1} parent=11 // pred_check_branch
          %300 = sbr.rel (%p298) target = $region40
        $region39: #{tpu_custom_call.1} parent=11 // pred_region
          _
        $region40: #{tpu_custom_call.1} parent=11 // pred_fallthru
          _
        // Predicated region
        $region41: #{tpu_custom_call.1} parent=11 // pred_check
          %p301 = pneg %p239
        $region42: #{tpu_custom_call.1} parent=11 // pred_check_branch
          %303 = sbr.rel (%p301) target = $region44
        $region43: #{tpu_custom_call.1} parent=11 // pred_region
          _
        $region44: #{tpu_custom_call.1} parent=11 // pred_fallthru
          _
      $region12: #{tpu_custom_call.1} parent=5 // pred_fallthru
        _
      %p304 = scmp.lt.s32.totalorder %s19, 2
      // Predicated region
      $region45: #{tpu_custom_call.1} parent=5 // pred_check
        %p305 = pneg %p304
      $region46: #{tpu_custom_call.1} parent=5 // pred_check_branch
        %307 = sbr.rel (%p305) target = $region48
      $region47: #{tpu_custom_call.1} parent=5 // pred_region
        // Predicated region
        $region49: #{tpu_custom_call.1} parent=47 // pred_check
          %p308 = pneg %p39
        $region50: #{tpu_custom_call.1} parent=47 // pred_check_branch
          %310 = sbr.rel (%p308) target = $region52
        $region51: #{tpu_custom_call.1} parent=47 // pred_region
          %s311 = smul.u32 2, %s19
          %p312 = scmp.lt.s32.totalorder %s311, 3
          %s313 = scalar_select %p312, %s311, 3
          %s314 = smul.addr %s313, 2
          %s315 = smul.addr %s314, 4
          %s316 = scalar_lea.vmem %s0, %s315
          %s317 = smul.u32 2, %s19
        $region52: #{tpu_custom_call.1} parent=47 // pred_fallthru
          _
        // Predicated region
        $region53: #{tpu_custom_call.1} parent=47 // pred_check
          %p318 = pneg %p65
        $region54: #{tpu_custom_call.1} parent=47 // pred_check_branch
          %320 = sbr.rel (%p318) target = $region56
        $region55: #{tpu_custom_call.1} parent=47 // pred_region
          %s321 = smul.u32 2, %s19
          %p322 = scmp.lt.s32.totalorder %s321, 3
          %s323 = scalar_select %p322, %s321, 3
          %s324 = smul.addr %s323, 2
          %s325 = smul.addr %s324, 8
          %s326 = scalar_lea.vmem %s1, %s325
          %s327 = smul.u32 2, %s19
        $region56: #{tpu_custom_call.1} parent=47 // pred_fallthru
          _
      $region48: #{tpu_custom_call.1} parent=5 // pred_fallthru
        _
      %p328 = scmp.le.s32.totalorder 1, %s19
      %p329 = scmp.lt.s32.totalorder %s19, 3
      %p330 = pnand %p328, %p329
      %p331 = pneg %p330
      // Predicated region
      $region57: #{tpu_custom_call.1} parent=5 // pred_check
        _
      $region58: #{tpu_custom_call.1} parent=5 // pred_check_branch
        %333 = sbr.rel (%p330) target = $region60
      $region59: #{tpu_custom_call.1} parent=5 // pred_region
        %s334 = ssub.s32 %s19, 1
        %s335 = smul.u32 2, %s24
        %p336 = scmp.lt.s32.totalorder %s335, 3
        %s337 = scalar_select %p336, %s335, 3
        %s338 = smul.addr %s337, 2
        %s339 = smul.addr %s338, 4
        %s340 = scalar_lea.vmem %s0, %s339
        %p341 = pneg %p45
        %p342 = pneg %p42
        %s343 = smul.u32 2, %s24
        %p344 = scmp.lt.s32.totalorder %s343, 3
        %s345 = scalar_select %p344, %s343, 3
        %s346 = smul.addr %s345, 2
        %s347 = smul.addr %s346, 8
        %s348 = scalar_lea.vmem %s1, %s347
        %p349 = pneg %p71
        %p350 = pneg %p68
        %p351 = pneg %p92
        %p352 = pneg %p89
        %p353 = pneg %p113
        %p354 = pneg %p110
        %p355 = pneg %p134
        %p356 = pneg %p131
        %p357 = pneg %p155
        %p358 = pneg %p152
        %p359 = pneg %p176
        %p360 = pneg %p173
        %p361 = pneg %p197
        %p362 = pneg %p194
        %p363 = pneg %p218
        %p364 = pneg %p215
        %p365 = pneg %p239
        %p366 = pneg %p236
        %p367 = pneg %p265
        %p368 = pneg %p262
        %s369 = sand.u32 %s252, 1
        %s370 = scalar_lea.sflag [#allocation3], %s369
        %s371 = sand.u32 %s252, 1
        %s372 = smul.addr %s371, 16
        %s373 = scalar_lea.vmem [#allocation2], %s372
        %s374 = smul.u32 2, %s24
        %p375 = scmp.lt.s32.totalorder %s374, 3
        %s376 = scalar_select %p375, %s374, 3
        %s377 = smul.addr %s376, 2
        %s378 = smul.addr %s377, 4
        %s379 = scalar_lea.vmem %s0, %s378
        %s380 = smul.u32 2, %s24
        %s381 = smul.u32 2, %s24
        %p382 = scmp.lt.s32.totalorder %s381, 3
        %s383 = scalar_select %p382, %s381, 3
        %s384 = smul.addr %s383, 2
        %s385 = smul.addr %s384, 8
        %s386 = scalar_lea.vmem %s1, %s385
        %s387 = smul.u32 2, %s24
        %s388 = smul.u32 2, %s24
        %v389 = vld [vmem:[%s2] sm:$0xff]
        %v390 = vld [vmem:[%s2 + $0x8] sm:$0xff]
        %v391 = vld [vmem:[%s2 + $0x10] sm:$0x1]
        %v392 = vld [vmem:[%s2 + $0x18] sm:$0x1]
        %v393 = vld [vmem:[%s3] sm:$0xff]
        %v394 = vld [vmem:[%s3 + $0x8] sm:$0xff]
        %v395 = vld [vmem:[%s3 + $0x10] sm:$0xff]
        %v396 = vld [vmem:[%s4] sm:$0xff]
        %v397 = vld [vmem:[%s4 + $0x8] sm:$0xff]
        %v398 = vld [vmem:[%s4 + $0x10] sm:$0xff]
        %v399 = vld [vmem:[%s6] sm:$0xff]
        %v400 = vld [vmem:[%s7] sm:$0xf]
        %v401 = vld [vmem:[%s8] sm:$0xf]
        %v402 = vld [vmem:[%s9] sm:$0xf]
        %v403 = vld [vmem:[%s379] sm:$0xff]
        %v404 = vld [vmem:[%s386] sm:$0x3f]
        %v405 = vld [vmem:[%s386 + $0x8] sm:$0x3f]
        %v407 = vcombine.high %v403, %v403
        %v411 = vrot.slane %v404, 4
        %v412 = vrot.slane %v405, 4
        %vm415 = vcmask 1043456
        %v416 = vsel %vm415, %v403, %v411
        %v417 = vsel %vm415, %v407, %v412
        %419 = vset.pattern.permute.xlu0 0
        %420 = vperm.xlu0 %419, %v396
        %v421 = vpop.permute.xlu0 %420
        %424 = vset.pattern.permute.xlu0 0
        %425 = vperm.xlu0 %424, %v397
        %v426 = vpop.permute.xlu0 %425
        %429 = vset.pattern.permute.xlu0 0
        %430 = vperm.xlu0 %429, %v398
        %v431 = vpop.permute.xlu0 %430
        %vm433 = vcmask 80896
        %v435 = vsel %vm433, %v393, 0
        %v438 = vsel %vm433, %v394, 0
        %v441 = vsel %vm433, %v395, 0
        %vm443 = vcmask 1041408
        %v444 = vsel %vm443, %v411, 0
        %v446 = vsel %vm443, %v412, 0
        %448 = vmatprep.subr.mxu0 %v417
        %449 = vmatpush1.msra.mxu0 %v416
        %450 = vmatprep.subr.mxu0 %v446
        %451 = vmatpush1.msra.mxu0 %v444
        %452 = vmatprep.subr.mxu0 0.0
        %453 = vmatpush1.msra.mxu0 0.0
        %454 = vmatprep.subr.mxu0 0.0
        %455 = vmatpush1.msra.mxu0 0.0
        %456 = vmatprep.subr.mxu0 0.0
        %457 = vmatpush1.msra.mxu0 0.0
        %458 = vmatprep.subr.mxu0 0.0
        %459 = vmatpush1.msra.mxu0 0.0
        %460 = vmatprep.subr.mxu0 0.0
        %461 = vmatpush1.msra.mxu0 0.0
        %462 = vmatprep.subr.mxu0 0.0
        %463 = vmatpush1.msra.mxu0 0.0
        %464 = vmatprep.subr.mxu0 0.0
        %465 = vmatpush1.msra.mxu0 0.0
        %466 = vmatprep.subr.mxu0 0.0
        %467 = vmatpush1.msra.mxu0 0.0
        %468 = vmatprep.subr.mxu0 0.0
        %469 = vmatpush1.msra.mxu0 0.0
        %470 = vmatprep.subr.mxu0 0.0
        %471 = vmatpush1.msra.mxu0 0.0
        %472 = vmatprep.subr.mxu0 0.0
        %473 = vmatpush1.msra.mxu0 0.0
        %474 = vmatprep.subr.mxu0 0.0
        %475 = vmatpush1.msra.mxu0 0.0
        %476 = vmatprep.subr.mxu0 0.0
        %477 = vmatpush1.msra.mxu0 0.0
        %478 = vmatprep.subr.mxu0 0.0
        %479 = vmatpush1.msra.mxu0 0.0
        %480 = vmatprep.subr.mxu0 0.0
        %481 = vmatpush1.msra.mxu0 0.0
        %482 = vmatprep.subr.mxu0 0.0
        %483 = vmatpush1.msra.mxu0 0.0
        %484 = vmatprep.subr.mxu0 0.0
        %485 = vmatpush1.msra.mxu0 0.0
        %486 = vmatprep.subr.mxu0 0.0
        %487 = vmatpush1.msra.mxu0 0.0
        %488 = vmatprep.subr.mxu0 0.0
        %489 = vmatpush1.msra.mxu0 0.0
        %490 = vmatprep.subr.mxu0 0.0
        %491 = vmatpush1.msra.mxu0 0.0
        %492 = vmatprep.subr.mxu0 0.0
        %493 = vmatpush1.msra.mxu0 0.0
        %494 = vmatprep.subr.mxu0 0.0
        %495 = vmatpush1.msra.mxu0 0.0
        %496 = vmatprep.subr.mxu0 0.0
        %497 = vmatpush1.msra.mxu0 0.0
        %498 = vmatprep.subr.mxu0 0.0
        %499 = vmatpush1.msra.mxu0 0.0
        %500 = vmatprep.subr.mxu0 0.0
        %501 = vmatpush1.msra.mxu0 0.0
        %502 = vmatprep.subr.mxu0 0.0
        %503 = vmatpush1.msra.mxu0 0.0
        %504 = vmatprep.subr.mxu0 0.0
        %505 = vmatpush1.msra.mxu0 0.0
        %506 = vmatprep.subr.mxu0 0.0
        %507 = vmatpush1.msra.mxu0 0.0
        %508 = vmatprep.subr.mxu0 0.0
        %509 = vmatpush1.msra.mxu0 0.0
        %510 = vmatprep.subr.mxu0 0.0
        %511 = vmatpush1.msra.mxu0 0.0
        %512 = vmatprep.mubr.f32.mxu0 0.0
        %513 = vmatmul.mubr.f32.gmra.mrb[0].mxu0 %v435
        %v514 = vpop.f32.mrb[0].mxu0
        %v515 = vadd.f32 %v421, %v514
        %v516 = vpop.f32.mrb[0].mxu0
        %v517 = vadd.f32 %v421, %v516
        %518 = vmatprep.mubr.f32.mxu0 0.0
        %519 = vmatmul.mubr.f32.gmra.mrb[0].mxu0 %v438
        %v520 = vpop.f32.mrb[0].mxu0
        %v521 = vadd.f32 %v426, %v520
        %v522 = vpop.f32.mrb[0].mxu0
        %v523 = vadd.f32 %v426, %v522
        %524 = vmatprep.mubr.f32.mxu0 0.0
        %525 = vmatmul.mubr.f32.gmra.mrb[0].mxu0 %v441
        %v526 = vpop.f32.mrb[0].mxu0
        %v527 = vadd.f32 %v431, %v526
        %v528 = vpop.f32.mrb[0].mxu0
        %v529 = vadd.f32 %v431, %v528
        %530 = vdwg.mxu0
        %v531 = vmax.f32 %v515, 0.0
        %v532 = vmax.f32 %v517, 0.0
        %v533 = vadd.f32 %v531, %v521
        %v534 = vadd.f32 %v532, %v523
        %535 = vrot.lane.b32.xlu0 %v533, 17
        %v536 = vpop.permute.xlu0 %535
        %537 = vrot.lane.b32.xlu0 %v534, 17
        %v538 = vpop.permute.xlu0 %537
        %v539 = vlaneseq
        %v540 = vand.u32 %v539, 127
        %vm541 = vcmp.lt.s32.totalorder %v540, 17
        %v542 = vsel %vm541, %v536, %v538
        %v543 = vsel %vm541, %v538, %v536
        %v544 = vlaneseq
        %v545 = vshrl.u32 %v544, 7
        %v546 = vsub.s32 0, %v545
        %v547 = vrot.slane %v389, %v546
        %v548 = vlaneseq
        %v549 = vshrl.u32 %v548, 7
        %v550 = vsub.s32 0, %v549
        %v551 = vrot.slane %v390, %v550
        %v552 = vmul.f32 %v543, %v547
        %v553 = vmul.f32 %v542, %v551
        %v554 = vld [vmem:[%s5] sm:$0xff]
        %555 = vrot.lane.b32.xlu0 %v533, 16
        %v556 = vpop.permute.xlu0 %555
        %557 = vrot.lane.b32.xlu0 %v534, 16
        %v558 = vpop.permute.xlu0 %557
        %vm559 = vcmp.lt.s32.totalorder %v540, 16
        %v560 = vsel %vm559, %v556, %v558
        %v561 = vsel %vm559, %v558, %v556
        %v562 = vlaneseq
        %v563 = vshrl.u32 %v562, 7
        %v564 = vsub.s32 1, %v563
        %v565 = vrot.slane %v389, %v564
        %v566 = vlaneseq
        %v567 = vshrl.u32 %v566, 7
        %v568 = vsub.s32 1, %v567
        %v569 = vrot.slane %v390, %v568
        %v570 = vmul.f32 %v561, %v565
        %v571 = vmul.f32 %v560, %v569
        %s572 = scalar_lea.vmem %s5, 8
        %v573 = vld [vmem:[%s572] sm:$0xff]
        %vm574 = vcmask 64512
        %v576 = vsel %vm574, %v573, 0
        %578 = vmatprep.subr.mxu0 %v571
        %579 = vmatpush1.msra.mxu0 %v570
        %580 = vmatprep.subr.mxu0 0.0
        %581 = vmatpush1.msra.mxu0 0.0
        %582 = vmatprep.subr.mxu0 0.0
        %583 = vmatpush1.msra.mxu0 0.0
        %584 = vmatprep.subr.mxu0 0.0
        %585 = vmatpush1.msra.mxu0 0.0
        %586 = vmatprep.subr.mxu0 0.0
        %587 = vmatpush1.msra.mxu0 0.0
        %588 = vmatprep.subr.mxu0 0.0
        %589 = vmatpush1.msra.mxu0 0.0
        %590 = vmatprep.subr.mxu0 0.0
        %591 = vmatpush1.msra.mxu0 0.0
        %592 = vmatprep.subr.mxu0 0.0
        %593 = vmatpush1.msra.mxu0 0.0
        %594 = vmatprep.subr.mxu0 0.0
        %595 = vmatpush1.msra.mxu0 0.0
        %596 = vmatprep.subr.mxu0 0.0
        %597 = vmatpush1.msra.mxu0 0.0
        %598 = vmatprep.subr.mxu0 0.0
        %599 = vmatpush1.msra.mxu0 0.0
        %600 = vmatprep.subr.mxu0 0.0
        %601 = vmatpush1.msra.mxu0 0.0
        %602 = vmatprep.subr.mxu0 0.0
        %603 = vmatpush1.msra.mxu0 0.0
        %604 = vmatprep.subr.mxu0 0.0
        %605 = vmatpush1.msra.mxu0 0.0
        %606 = vmatprep.subr.mxu0 0.0
        %607 = vmatpush1.msra.mxu0 0.0
        %608 = vmatprep.subr.mxu0 0.0
        %609 = vmatpush1.msra.mxu0 0.0
        %610 = vmatprep.subr.mxu0 0.0
        %611 = vmatpush1.msra.mxu0 0.0
        %612 = vmatprep.subr.mxu0 0.0
        %613 = vmatpush1.msra.mxu0 0.0
        %614 = vmatprep.subr.mxu0 0.0
        %615 = vmatpush1.msra.mxu0 0.0
        %616 = vmatprep.subr.mxu0 0.0
        %617 = vmatpush1.msra.mxu0 0.0
        %618 = vmatprep.subr.mxu0 0.0
        %619 = vmatpush1.msra.mxu0 0.0
        %620 = vmatprep.subr.mxu0 0.0
        %621 = vmatpush1.msra.mxu0 0.0
        %622 = vmatprep.subr.mxu0 0.0
        %623 = vmatpush1.msra.mxu0 0.0
        %624 = vmatprep.subr.mxu0 0.0
        %625 = vmatpush1.msra.mxu0 0.0
        %626 = vmatprep.subr.mxu0 0.0
        %627 = vmatpush1.msra.mxu0 0.0
        %628 = vmatprep.subr.mxu0 0.0
        %629 = vmatpush1.msra.mxu0 0.0
        %630 = vmatprep.subr.mxu0 0.0
        %631 = vmatpush1.msra.mxu0 0.0
        %632 = vmatprep.subr.mxu0 0.0
        %633 = vmatpush1.msra.mxu0 0.0
        %634 = vmatprep.subr.mxu0 0.0
        %635 = vmatpush1.msra.mxu0 0.0
        %636 = vmatprep.subr.mxu0 0.0
        %637 = vmatpush1.msra.mxu0 0.0
        %638 = vmatprep.subr.mxu0 0.0
        %639 = vmatpush1.msra.mxu0 0.0
        %640 = vmatprep.subr.mxu0 0.0
        %641 = vmatpush1.msra.mxu0 0.0
        %642 = vmatprep.mubr.f32.mxu0 0.0
        %643 = vmatmul.mubr.f32.gmra.mrb[0].mxu0 %v576
        %v644 = vpop.f32.mrb[0].mxu0
        %v645 = vadd.f32 0.0, %v644
        %v646 = vpop.f32.mrb[0].mxu0
        %v647 = vadd.f32 0.0, %v646
        %648 = vdwg.mxu0
        %v650 = vsel %vm574, %v554, 0
        %652 = vmatprep.subr.mxu0 %v553
        %653 = vmatpush1.msra.mxu0 %v552
        %654 = vmatprep.subr.mxu0 0.0
        %655 = vmatpush1.msra.mxu0 0.0
        %656 = vmatprep.subr.mxu0 0.0
        %657 = vmatpush1.msra.mxu0 0.0
        %658 = vmatprep.subr.mxu0 0.0
        %659 = vmatpush1.msra.mxu0 0.0
        %660 = vmatprep.subr.mxu0 0.0
        %661 = vmatpush1.msra.mxu0 0.0
        %662 = vmatprep.subr.mxu0 0.0
        %663 = vmatpush1.msra.mxu0 0.0
        %664 = vmatprep.subr.mxu0 0.0
        %665 = vmatpush1.msra.mxu0 0.0
        %666 = vmatprep.subr.mxu0 0.0
        %667 = vmatpush1.msra.mxu0 0.0
        %668 = vmatprep.subr.mxu0 0.0
        %669 = vmatpush1.msra.mxu0 0.0
        %670 = vmatprep.subr.mxu0 0.0
        %671 = vmatpush1.msra.mxu0 0.0
        %672 = vmatprep.subr.mxu0 0.0
        %673 = vmatpush1.msra.mxu0 0.0
        %674 = vmatprep.subr.mxu0 0.0
        %675 = vmatpush1.msra.mxu0 0.0
        %676 = vmatprep.subr.mxu0 0.0
        %677 = vmatpush1.msra.mxu0 0.0
        %678 = vmatprep.subr.mxu0 0.0
        %679 = vmatpush1.msra.mxu0 0.0
        %680 = vmatprep.subr.mxu0 0.0
        %681 = vmatpush1.msra.mxu0 0.0
        %682 = vmatprep.subr.mxu0 0.0
        %683 = vmatpush1.msra.mxu0 0.0
        %684 = vmatprep.subr.mxu0 0.0
        %685 = vmatpush1.msra.mxu0 0.0
        %686 = vmatprep.subr.mxu0 0.0
        %687 = vmatpush1.msra.mxu0 0.0
        %688 = vmatprep.subr.mxu0 0.0
        %689 = vmatpush1.msra.mxu0 0.0
        %690 = vmatprep.subr.mxu0 0.0
        %691 = vmatpush1.msra.mxu0 0.0
        %692 = vmatprep.subr.mxu0 0.0
        %693 = vmatpush1.msra.mxu0 0.0
        %694 = vmatprep.subr.mxu0 0.0
        %695 = vmatpush1.msra.mxu0 0.0
        %696 = vmatprep.subr.mxu0 0.0
        %697 = vmatpush1.msra.mxu0 0.0
        %698 = vmatprep.subr.mxu0 0.0
        %699 = vmatpush1.msra.mxu0 0.0
        %700 = vmatprep.subr.mxu0 0.0
        %701 = vmatpush1.msra.mxu0 0.0
        %702 = vmatprep.subr.mxu0 0.0
        %703 = vmatpush1.msra.mxu0 0.0
        %704 = vmatprep.subr.mxu0 0.0
        %705 = vmatpush1.msra.mxu0 0.0
        %706 = vmatprep.subr.mxu0 0.0
        %707 = vmatpush1.msra.mxu0 0.0
        %708 = vmatprep.subr.mxu0 0.0
        %709 = vmatpush1.msra.mxu0 0.0
        %710 = vmatprep.subr.mxu0 0.0
        %711 = vmatpush1.msra.mxu0 0.0
        %712 = vmatprep.subr.mxu0 0.0
        %713 = vmatpush1.msra.mxu0 0.0
        %714 = vmatprep.subr.mxu0 0.0
        %715 = vmatpush1.msra.mxu0 0.0
        %716 = vmatprep.mubr.f32.mxu0 0.0
        %717 = vmatmul.mubr.f32.gmra.mrb[0].mxu0 %v650
        %v718 = vpop.f32.mrb[0].mxu0
        %v719 = vadd.f32 %v645, %v718
        %v720 = vpop.f32.mrb[0].mxu0
        %v721 = vadd.f32 %v647, %v720
        %722 = vdwg.mxu0
        %723 = vrot.lane.b32.xlu0 %v533, 15
        %v724 = vpop.permute.xlu0 %723
        %725 = vrot.lane.b32.xlu0 %v534, 15
        %v726 = vpop.permute.xlu0 %725
        %vm727 = vcmp.lt.s32.totalorder %v540, 15
        %v728 = vsel %vm727, %v724, %v726
        %v729 = vsel %vm727, %v726, %v724
        %v730 = vlaneseq
        %v731 = vshrl.u32 %v730, 7
        %v732 = vsub.s32 2, %v731
        %v733 = vrot.slane %v389, %v732
        %v734 = vlaneseq
        %v735 = vshrl.u32 %v734, 7
        %v736 = vsub.s32 2, %v735
        %v737 = vrot.slane %v390, %v736
        %v738 = vmul.f32 %v729, %v733
        %v739 = vmul.f32 %v728, %v737
        %s740 = scalar_lea.vmem %s5, 16
        %v741 = vld [vmem:[%s740] sm:$0xff]
        %v743 = vsel %vm574, %v741, 0
        %745 = vmatprep.subr.mxu0 %v739
        %746 = vmatpush1.msra.mxu0 %v738
        %747 = vmatprep.subr.mxu0 0.0
        %748 = vmatpush1.msra.mxu0 0.0
        %749 = vmatprep.subr.mxu0 0.0
        %750 = vmatpush1.msra.mxu0 0.0
        %751 = vmatprep.subr.mxu0 0.0
        %752 = vmatpush1.msra.mxu0 0.0
        %753 = vmatprep.subr.mxu0 0.0
        %754 = vmatpush1.msra.mxu0 0.0
        %755 = vmatprep.subr.mxu0 0.0
        %756 = vmatpush1.msra.mxu0 0.0
        %757 = vmatprep.subr.mxu0 0.0
        %758 = vmatpush1.msra.mxu0 0.0
        %759 = vmatprep.subr.mxu0 0.0
        %760 = vmatpush1.msra.mxu0 0.0
        %761 = vmatprep.subr.mxu0 0.0
        %762 = vmatpush1.msra.mxu0 0.0
        %763 = vmatprep.subr.mxu0 0.0
        %764 = vmatpush1.msra.mxu0 0.0
        %765 = vmatprep.subr.mxu0 0.0
        %766 = vmatpush1.msra.mxu0 0.0
        %767 = vmatprep.subr.mxu0 0.0
        %768 = vmatpush1.msra.mxu0 0.0
        %769 = vmatprep.subr.mxu0 0.0
        %770 = vmatpush1.msra.mxu0 0.0
        %771 = vmatprep.subr.mxu0 0.0
        %772 = vmatpush1.msra.mxu0 0.0
        %773 = vmatprep.subr.mxu0 0.0
        %774 = vmatpush1.msra.mxu0 0.0
        %775 = vmatprep.subr.mxu0 0.0
        %776 = vmatpush1.msra.mxu0 0.0
        %777 = vmatprep.subr.mxu0 0.0
        %778 = vmatpush1.msra.mxu0 0.0
        %779 = vmatprep.subr.mxu0 0.0
        %780 = vmatpush1.msra.mxu0 0.0
        %781 = vmatprep.subr.mxu0 0.0
        %782 = vmatpush1.msra.mxu0 0.0
        %783 = vmatprep.subr.mxu0 0.0
        %784 = vmatpush1.msra.mxu0 0.0
        %785 = vmatprep.subr.mxu0 0.0
        %786 = vmatpush1.msra.mxu0 0.0
        %787 = vmatprep.subr.mxu0 0.0
        %788 = vmatpush1.msra.mxu0 0.0
        %789 = vmatprep.subr.mxu0 0.0
        %790 = vmatpush1.msra.mxu0 0.0
        %791 = vmatprep.subr.mxu0 0.0
        %792 = vmatpush1.msra.mxu0 0.0
        %793 = vmatprep.subr.mxu0 0.0
        %794 = vmatpush1.msra.mxu0 0.0
        %795 = vmatprep.subr.mxu0 0.0
        %796 = vmatpush1.msra.mxu0 0.0
        %797 = vmatprep.subr.mxu0 0.0
        %798 = vmatpush1.msra.mxu0 0.0
        %799 = vmatprep.subr.mxu0 0.0
        %800 = vmatpush1.msra.mxu0 0.0
        %801 = vmatprep.subr.mxu0 0.0
        %802 = vmatpush1.msra.mxu0 0.0
        %803 = vmatprep.subr.mxu0 0.0
        %804 = vmatpush1.msra.mxu0 0.0
        %805 = vmatprep.subr.mxu0 0.0
        %806 = vmatpush1.msra.mxu0 0.0
        %807 = vmatprep.subr.mxu0 0.0
        %808 = vmatpush1.msra.mxu0 0.0
        %809 = vmatprep.mubr.f32.mxu0 0.0
        %810 = vmatmul.mubr.f32.gmra.mrb[0].mxu0 %v743
        %v811 = vpop.f32.mrb[0].mxu0
        %v812 = vadd.f32 0.0, %v811
        %v813 = vpop.f32.mrb[0].mxu0
        %v814 = vadd.f32 0.0, %v813
        %815 = vdwg.mxu0
        %v816 = vadd.f32 %v719, %v812
        %v817 = vadd.f32 %v721, %v814
        %818 = vrot.lane.b32.xlu0 %v533, 1
        %v819 = vpop.permute.xlu0 %818
        %820 = vrot.lane.b32.xlu0 %v534, 1
        %v821 = vpop.permute.xlu0 %820
        %vm822 = vcmp.lt.s32.totalorder %v540, 1
        %v823 = vsel %vm822, %v819, %v821
        %v824 = vsel %vm822, %v821, %v819
        %v825 = vlaneseq
        %v826 = vshrl.u32 %v825, 7
        %v827 = vsub.s32 3, %v826
        %v828 = vrot.slane %v389, %v827
        %v829 = vlaneseq
        %v830 = vshrl.u32 %v829, 7
        %v831 = vsub.s32 3, %v830
        %v832 = vrot.slane %v390, %v831
        %v833 = vmul.f32 %v824, %v828
        %v834 = vmul.f32 %v823, %v832
        %s835 = scalar_lea.vmem %s5, 24
        %v836 = vld [vmem:[%s835] sm:$0xff]
        %v838 = vsel %vm574, %v836, 0
        %840 = vmatprep.subr.mxu0 %v834
        %841 = vmatpush1.msra.mxu0 %v833
        %842 = vmatprep.subr.mxu0 0.0
        %843 = vmatpush1.msra.mxu0 0.0
        %844 = vmatprep.subr.mxu0 0.0
        %845 = vmatpush1.msra.mxu0 0.0
        %846 = vmatprep.subr.mxu0 0.0
        %847 = vmatpush1.msra.mxu0 0.0
        %848 = vmatprep.subr.mxu0 0.0
        %849 = vmatpush1.msra.mxu0 0.0
        %850 = vmatprep.subr.mxu0 0.0
        %851 = vmatpush1.msra.mxu0 0.0
        %852 = vmatprep.subr.mxu0 0.0
        %853 = vmatpush1.msra.mxu0 0.0
        %854 = vmatprep.subr.mxu0 0.0
        %855 = vmatpush1.msra.mxu0 0.0
        %856 = vmatprep.subr.mxu0 0.0
        %857 = vmatpush1.msra.mxu0 0.0
        %858 = vmatprep.subr.mxu0 0.0
        %859 = vmatpush1.msra.mxu0 0.0
        %860 = vmatprep.subr.mxu0 0.0
        %861 = vmatpush1.msra.mxu0 0.0
        %862 = vmatprep.subr.mxu0 0.0
        %863 = vmatpush1.msra.mxu0 0.0
        %864 = vmatprep.subr.mxu0 0.0
        %865 = vmatpush1.msra.mxu0 0.0
        %866 = vmatprep.subr.mxu0 0.0
        %867 = vmatpush1.msra.mxu0 0.0
        %868 = vmatprep.subr.mxu0 0.0
        %869 = vmatpush1.msra.mxu0 0.0
        %870 = vmatprep.subr.mxu0 0.0
        %871 = vmatpush1.msra.mxu0 0.0
        %872 = vmatprep.subr.mxu0 0.0
        %873 = vmatpush1.msra.mxu0 0.0
        %874 = vmatprep.subr.mxu0 0.0
        %875 = vmatpush1.msra.mxu0 0.0
        %876 = vmatprep.subr.mxu0 0.0
        %877 = vmatpush1.msra.mxu0 0.0
        %878 = vmatprep.subr.mxu0 0.0
        %879 = vmatpush1.msra.mxu0 0.0
        %880 = vmatprep.subr.mxu0 0.0
        %881 = vmatpush1.msra.mxu0 0.0
        %882 = vmatprep.subr.mxu0 0.0
        %883 = vmatpush1.msra.mxu0 0.0
        %884 = vmatprep.subr.mxu0 0.0
        %885 = vmatpush1.msra.mxu0 0.0
        %886 = vmatprep.subr.mxu0 0.0
        %887 = vmatpush1.msra.mxu0 0.0
        %888 = vmatprep.subr.mxu0 0.0
        %889 = vmatpush1.msra.mxu0 0.0
        %890 = vmatprep.subr.mxu0 0.0
        %891 = vmatpush1.msra.mxu0 0.0
        %892 = vmatprep.subr.mxu0 0.0
        %893 = vmatpush1.msra.mxu0 0.0
        %894 = vmatprep.subr.mxu0 0.0
        %895 = vmatpush1.msra.mxu0 0.0
        %896 = vmatprep.subr.mxu0 0.0
        %897 = vmatpush1.msra.mxu0 0.0
        %898 = vmatprep.subr.mxu0 0.0
        %899 = vmatpush1.msra.mxu0 0.0
        %900 = vmatprep.subr.mxu0 0.0
        %901 = vmatpush1.msra.mxu0 0.0
        %902 = vmatprep.subr.mxu0 0.0
        %903 = vmatpush1.msra.mxu0 0.0
        %904 = vmatprep.mubr.f32.mxu0 0.0
        %905 = vmatmul.mubr.f32.gmra.mrb[0].mxu0 %v838
        %v906 = vpop.f32.mrb[0].mxu0
        %v907 = vadd.f32 0.0, %v906
        %v908 = vpop.f32.mrb[0].mxu0
        %v909 = vadd.f32 0.0, %v908
        %910 = vdwg.mxu0
        %v911 = vadd.f32 %v816, %v907
        %v912 = vadd.f32 %v817, %v909
        %v913 = vlaneseq
        %v914 = vshrl.u32 %v913, 7
        %v915 = vsub.s32 4, %v914
        %v916 = vrot.slane %v389, %v915
        %v917 = vlaneseq
        %v918 = vshrl.u32 %v917, 7
        %v919 = vsub.s32 4, %v918
        %v920 = vrot.slane %v390, %v919
        %v921 = vmul.f32 %v533, %v916
        %v922 = vmul.f32 %v534, %v920
        %s923 = scalar_lea.vmem %s5, 32
        %v924 = vld [vmem:[%s923] sm:$0xff]
        %v926 = vsel %vm574, %v924, 0
        %928 = vmatprep.subr.mxu0 %v922
        %929 = vmatpush1.msra.mxu0 %v921
        %930 = vmatprep.subr.mxu0 0.0
        %931 = vmatpush1.msra.mxu0 0.0
        %932 = vmatprep.subr.mxu0 0.0
        %933 = vmatpush1.msra.mxu0 0.0
        %934 = vmatprep.subr.mxu0 0.0
        %935 = vmatpush1.msra.mxu0 0.0
        %936 = vmatprep.subr.mxu0 0.0
        %937 = vmatpush1.msra.mxu0 0.0
        %938 = vmatprep.subr.mxu0 0.0
        %939 = vmatpush1.msra.mxu0 0.0
        %940 = vmatprep.subr.mxu0 0.0
        %941 = vmatpush1.msra.mxu0 0.0
        %942 = vmatprep.subr.mxu0 0.0
        %943 = vmatpush1.msra.mxu0 0.0
        %944 = vmatprep.subr.mxu0 0.0
        %945 = vmatpush1.msra.mxu0 0.0
        %946 = vmatprep.subr.mxu0 0.0
        %947 = vmatpush1.msra.mxu0 0.0
        %948 = vmatprep.subr.mxu0 0.0
        %949 = vmatpush1.msra.mxu0 0.0
        %950 = vmatprep.subr.mxu0 0.0
        %951 = vmatpush1.msra.mxu0 0.0
        %952 = vmatprep.subr.mxu0 0.0
        %953 = vmatpush1.msra.mxu0 0.0
        %954 = vmatprep.subr.mxu0 0.0
        %955 = vmatpush1.msra.mxu0 0.0
        %956 = vmatprep.subr.mxu0 0.0
        %957 = vmatpush1.msra.mxu0 0.0
        %958 = vmatprep.subr.mxu0 0.0
        %959 = vmatpush1.msra.mxu0 0.0
        %960 = vmatprep.subr.mxu0 0.0
        %961 = vmatpush1.msra.mxu0 0.0
        %962 = vmatprep.subr.mxu0 0.0
        %963 = vmatpush1.msra.mxu0 0.0
        %964 = vmatprep.subr.mxu0 0.0
        %965 = vmatpush1.msra.mxu0 0.0
        %966 = vmatprep.subr.mxu0 0.0
        %967 = vmatpush1.msra.mxu0 0.0
        %968 = vmatprep.subr.mxu0 0.0
        %969 = vmatpush1.msra.mxu0 0.0
        %970 = vmatprep.subr.mxu0 0.0
        %971 = vmatpush1.msra.mxu0 0.0
        %972 = vmatprep.subr.mxu0 0.0
        %973 = vmatpush1.msra.mxu0 0.0
        %974 = vmatprep.subr.mxu0 0.0
        %975 = vmatpush1.msra.mxu0 0.0
        %976 = vmatprep.subr.mxu0 0.0
        %977 = vmatpush1.msra.mxu0 0.0
        %978 = vmatprep.subr.mxu0 0.0
        %979 = vmatpush1.msra.mxu0 0.0
        %980 = vmatprep.subr.mxu0 0.0
        %981 = vmatpush1.msra.mxu0 0.0
        %982 = vmatprep.subr.mxu0 0.0
        %983 = vmatpush1.msra.mxu0 0.0
        %984 = vmatprep.subr.mxu0 0.0
        %985 = vmatpush1.msra.mxu0 0.0
        %986 = vmatprep.subr.mxu0 0.0
        %987 = vmatpush1.msra.mxu0 0.0
        %988 = vmatprep.subr.mxu0 0.0
        %989 = vmatpush1.msra.mxu0 0.0
        %990 = vmatprep.subr.mxu0 0.0
        %991 = vmatpush1.msra.mxu0 0.0
        %992 = vmatprep.mubr.f32.mxu0 0.0
        %993 = vmatmul.mubr.f32.gmra.mrb[0].mxu0 %v926
        %v994 = vpop.f32.mrb[0].mxu0
        %v995 = vadd.f32 0.0, %v994
        %v996 = vpop.f32.mrb[0].mxu0
        %v997 = vadd.f32 0.0, %v996
        %998 = vdwg.mxu0
        %v999 = vadd.f32 %v911, %v995
        %v1000 = vadd.f32 %v912, %v997
        %1001 = vrot.lane.b32.xlu0 %v533, 127
        %v1002 = vpop.permute.xlu0 %1001
        %1003 = vrot.lane.b32.xlu0 %v534, 127
        %v1004 = vpop.permute.xlu0 %1003
        %vm1005 = vcmp.lt.s32.totalorder %v540, 127
        %v1006 = vsel %vm1005, %v1002, %v1004
        %v1007 = vsel %vm1005, %v1004, %v1002
        %v1008 = vlaneseq
        %v1009 = vshrl.u32 %v1008, 7
        %v1010 = vsub.s32 5, %v1009
        %v1011 = vrot.slane %v389, %v1010
        %v1012 = vlaneseq
        %v1013 = vshrl.u32 %v1012, 7
        %v1014 = vsub.s32 5, %v1013
        %v1015 = vrot.slane %v390, %v1014
        %v1016 = vmul.f32 %v1006, %v1011
        %v1017 = vmul.f32 %v1007, %v1015
        %s1018 = scalar_lea.vmem %s5, 40
        %v1019 = vld [vmem:[%s1018] sm:$0xff]
        %v1021 = vsel %vm574, %v1019, 0
        %1023 = vmatprep.subr.mxu0 %v1017
        %1024 = vmatpush1.msra.mxu0 %v1016
        %1025 = vmatprep.subr.mxu0 0.0
        %1026 = vmatpush1.msra.mxu0 0.0
        %1027 = vmatprep.subr.mxu0 0.0
        %1028 = vmatpush1.msra.mxu0 0.0
        %1029 = vmatprep.subr.mxu0 0.0
        %1030 = vmatpush1.msra.mxu0 0.0
        %1031 = vmatprep.subr.mxu0 0.0
        %1032 = vmatpush1.msra.mxu0 0.0
        %1033 = vmatprep.subr.mxu0 0.0
        %1034 = vmatpush1.msra.mxu0 0.0
        %1035 = vmatprep.subr.mxu0 0.0
        %1036 = vmatpush1.msra.mxu0 0.0
        %1037 = vmatprep.subr.mxu0 0.0
        %1038 = vmatpush1.msra.mxu0 0.0
        %1039 = vmatprep.subr.mxu0 0.0
        %1040 = vmatpush1.msra.mxu0 0.0
        %1041 = vmatprep.subr.mxu0 0.0
        %1042 = vmatpush1.msra.mxu0 0.0
        %1043 = vmatprep.subr.mxu0 0.0
        %1044 = vmatpush1.msra.mxu0 0.0
        %1045 = vmatprep.subr.mxu0 0.0
        %1046 = vmatpush1.msra.mxu0 0.0
        %1047 = vmatprep.subr.mxu0 0.0
        %1048 = vmatpush1.msra.mxu0 0.0
        %1049 = vmatprep.subr.mxu0 0.0
        %1050 = vmatpush1.msra.mxu0 0.0
        %1051 = vmatprep.subr.mxu0 0.0
        %1052 = vmatpush1.msra.mxu0 0.0
        %1053 = vmatprep.subr.mxu0 0.0
        %1054 = vmatpush1.msra.mxu0 0.0
        %1055 = vmatprep.subr.mxu0 0.0
        %1056 = vmatpush1.msra.mxu0 0.0
        %1057 = vmatprep.subr.mxu0 0.0
        %1058 = vmatpush1.msra.mxu0 0.0
        %1059 = vmatprep.subr.mxu0 0.0
        %1060 = vmatpush1.msra.mxu0 0.0
        %1061 = vmatprep.subr.mxu0 0.0
        %1062 = vmatpush1.msra.mxu0 0.0
        %1063 = vmatprep.subr.mxu0 0.0
        %1064 = vmatpush1.msra.mxu0 0.0
        %1065 = vmatprep.subr.mxu0 0.0
        %1066 = vmatpush1.msra.mxu0 0.0
        %1067 = vmatprep.subr.mxu0 0.0
        %1068 = vmatpush1.msra.mxu0 0.0
        %1069 = vmatprep.subr.mxu0 0.0
        %1070 = vmatpush1.msra.mxu0 0.0
        %1071 = vmatprep.subr.mxu0 0.0
        %1072 = vmatpush1.msra.mxu0 0.0
        %1073 = vmatprep.subr.mxu0 0.0
        %1074 = vmatpush1.msra.mxu0 0.0
        %1075 = vmatprep.subr.mxu0 0.0
        %1076 = vmatpush1.msra.mxu0 0.0
        %1077 = vmatprep.subr.mxu0 0.0
        %1078 = vmatpush1.msra.mxu0 0.0
        %1079 = vmatprep.subr.mxu0 0.0
        %1080 = vmatpush1.msra.mxu0 0.0
        %1081 = vmatprep.subr.mxu0 0.0
        %1082 = vmatpush1.msra.mxu0 0.0
        %1083 = vmatprep.subr.mxu0 0.0
        %1084 = vmatpush1.msra.mxu0 0.0
        %1085 = vmatprep.subr.mxu0 0.0
        %1086 = vmatpush1.msra.mxu0 0.0
        %1087 = vmatprep.mubr.f32.mxu0 0.0
        %1088 = vmatmul.mubr.f32.gmra.mrb[0].mxu0 %v1021
        %v1089 = vpop.f32.mrb[0].mxu0
        %v1090 = vadd.f32 0.0, %v1089
        %v1091 = vpop.f32.mrb[0].mxu0
        %v1092 = vadd.f32 0.0, %v1091
        %1093 = vdwg.mxu0
        %v1094 = vadd.f32 %v999, %v1090
        %v1095 = vadd.f32 %v1000, %v1092
        %1096 = vrot.lane.b32.xlu0 %v533, 113
        %v1097 = vpop.permute.xlu0 %1096
        %1098 = vrot.lane.b32.xlu0 %v534, 113
        %v1099 = vpop.permute.xlu0 %1098
        %vm1100 = vcmp.lt.s32.totalorder %v540, 113
        %v1101 = vsel %vm1100, %v1097, %v1099
        %v1102 = vsel %vm1100, %v1099, %v1097
        %v1103 = vlaneseq
        %v1104 = vshrl.u32 %v1103, 7
        %v1105 = vsub.s32 6, %v1104
        %v1106 = vrot.slane %v389, %v1105
        %v1107 = vlaneseq
        %v1108 = vshrl.u32 %v1107, 7
        %v1109 = vsub.s32 6, %v1108
        %v1110 = vrot.slane %v390, %v1109
        %v1111 = vmul.f32 %v1101, %v1106
        %v1112 = vmul.f32 %v1102, %v1110
        %s1113 = scalar_lea.vmem %s5, 48
        %v1114 = vld [vmem:[%s1113] sm:$0xff]
        %v1116 = vsel %vm574, %v1114, 0
        %1118 = vmatprep.subr.mxu0 %v1112
        %1119 = vmatpush1.msra.mxu0 %v1111
        %1120 = vmatprep.subr.mxu0 0.0
        %1121 = vmatpush1.msra.mxu0 0.0
        %1122 = vmatprep.subr.mxu0 0.0
        %1123 = vmatpush1.msra.mxu0 0.0
        %1124 = vmatprep.subr.mxu0 0.0
        %1125 = vmatpush1.msra.mxu0 0.0
        %1126 = vmatprep.subr.mxu0 0.0
        %1127 = vmatpush1.msra.mxu0 0.0
        %1128 = vmatprep.subr.mxu0 0.0
        %1129 = vmatpush1.msra.mxu0 0.0
        %1130 = vmatprep.subr.mxu0 0.0
        %1131 = vmatpush1.msra.mxu0 0.0
        %1132 = vmatprep.subr.mxu0 0.0
        %1133 = vmatpush1.msra.mxu0 0.0
        %1134 = vmatprep.subr.mxu0 0.0
        %1135 = vmatpush1.msra.mxu0 0.0
        %1136 = vmatprep.subr.mxu0 0.0
        %1137 = vmatpush1.msra.mxu0 0.0
        %1138 = vmatprep.subr.mxu0 0.0
        %1139 = vmatpush1.msra.mxu0 0.0
        %1140 = vmatprep.subr.mxu0 0.0
        %1141 = vmatpush1.msra.mxu0 0.0
        %1142 = vmatprep.subr.mxu0 0.0
        %1143 = vmatpush1.msra.mxu0 0.0
        %1144 = vmatprep.subr.mxu0 0.0
        %1145 = vmatpush1.msra.mxu0 0.0
        %1146 = vmatprep.subr.mxu0 0.0
        %1147 = vmatpush1.msra.mxu0 0.0
        %1148 = vmatprep.subr.mxu0 0.0
        %1149 = vmatpush1.msra.mxu0 0.0
        %1150 = vmatprep.subr.mxu0 0.0
        %1151 = vmatpush1.msra.mxu0 0.0
        %1152 = vmatprep.subr.mxu0 0.0
        %1153 = vmatpush1.msra.mxu0 0.0
        %1154 = vmatprep.subr.mxu0 0.0
        %1155 = vmatpush1.msra.mxu0 0.0
        %1156 = vmatprep.subr.mxu0 0.0
        %1157 = vmatpush1.msra.mxu0 0.0
        %1158 = vmatprep.subr.mxu0 0.0
        %1159 = vmatpush1.msra.mxu0 0.0
        %1160 = vmatprep.subr.mxu0 0.0
        %1161 = vmatpush1.msra.mxu0 0.0
        %1162 = vmatprep.subr.mxu0 0.0
        %1163 = vmatpush1.msra.mxu0 0.0
        %1164 = vmatprep.subr.mxu0 0.0
        %1165 = vmatpush1.msra.mxu0 0.0
        %1166 = vmatprep.subr.mxu0 0.0
        %1167 = vmatpush1.msra.mxu0 0.0
        %1168 = vmatprep.subr.mxu0 0.0
        %1169 = vmatpush1.msra.mxu0 0.0
        %1170 = vmatprep.subr.mxu0 0.0
        %1171 = vmatpush1.msra.mxu0 0.0
        %1172 = vmatprep.subr.mxu0 0.0
        %1173 = vmatpush1.msra.mxu0 0.0
        %1174 = vmatprep.subr.mxu0 0.0
        %1175 = vmatpush1.msra.mxu0 0.0
        %1176 = vmatprep.subr.mxu0 0.0
        %1177 = vmatpush1.msra.mxu0 0.0
        %1178 = vmatprep.subr.mxu0 0.0
        %1179 = vmatpush1.msra.mxu0 0.0
        %1180 = vmatprep.subr.mxu0 0.0
        %1181 = vmatpush1.msra.mxu0 0.0
        %1182 = vmatprep.mubr.f32.mxu0 0.0
        %1183 = vmatmul.mubr.f32.gmra.mrb[0].mxu0 %v1116
        %v1184 = vpop.f32.mrb[0].mxu0
        %v1185 = vadd.f32 0.0, %v1184
        %v1186 = vpop.f32.mrb[0].mxu0
        %v1187 = vadd.f32 0.0, %v1186
        %1188 = vdwg.mxu0
        %v1189 = vadd.f32 %v1094, %v1185
        %v1190 = vadd.f32 %v1095, %v1187
        %1191 = vrot.lane.b32.xlu0 %v533, 112
        %v1192 = vpop.permute.xlu0 %1191
        %1193 = vrot.lane.b32.xlu0 %v534, 112
        %v1194 = vpop.permute.xlu0 %1193
        %vm1195 = vcmp.lt.s32.totalorder %v540, 112
        %v1196 = vsel %vm1195, %v1192, %v1194
        %v1197 = vsel %vm1195, %v1194, %v1192
        %v1198 = vlaneseq
        %v1199 = vshrl.u32 %v1198, 7
        %v1200 = vsub.s32 7, %v1199
        %v1201 = vrot.slane %v389, %v1200
        %v1202 = vlaneseq
        %v1203 = vshrl.u32 %v1202, 7
        %v1204 = vsub.s32 7, %v1203
        %v1205 = vrot.slane %v390, %v1204
        %v1206 = vmul.f32 %v1196, %v1201
        %v1207 = vmul.f32 %v1197, %v1205
        %s1208 = scalar_lea.vmem %s5, 56
        %v1209 = vld [vmem:[%s1208] sm:$0xff]
        %v1211 = vsel %vm574, %v1209, 0
        %1213 = vmatprep.subr.mxu0 %v1207
        %1214 = vmatpush1.msra.mxu0 %v1206
        %1215 = vmatprep.subr.mxu0 0.0
        %1216 = vmatpush1.msra.mxu0 0.0
        %1217 = vmatprep.subr.mxu0 0.0
        %1218 = vmatpush1.msra.mxu0 0.0
        %1219 = vmatprep.subr.mxu0 0.0
        %1220 = vmatpush1.msra.mxu0 0.0
        %1221 = vmatprep.subr.mxu0 0.0
        %1222 = vmatpush1.msra.mxu0 0.0
        %1223 = vmatprep.subr.mxu0 0.0
        %1224 = vmatpush1.msra.mxu0 0.0
        %1225 = vmatprep.subr.mxu0 0.0
        %1226 = vmatpush1.msra.mxu0 0.0
        %1227 = vmatprep.subr.mxu0 0.0
        %1228 = vmatpush1.msra.mxu0 0.0
        %1229 = vmatprep.subr.mxu0 0.0
        %1230 = vmatpush1.msra.mxu0 0.0
        %1231 = vmatprep.subr.mxu0 0.0
        %1232 = vmatpush1.msra.mxu0 0.0
        %1233 = vmatprep.subr.mxu0 0.0
        %1234 = vmatpush1.msra.mxu0 0.0
        %1235 = vmatprep.subr.mxu0 0.0
        %1236 = vmatpush1.msra.mxu0 0.0
        %1237 = vmatprep.subr.mxu0 0.0
        %1238 = vmatpush1.msra.mxu0 0.0
        %1239 = vmatprep.subr.mxu0 0.0
        %1240 = vmatpush1.msra.mxu0 0.0
        %1241 = vmatprep.subr.mxu0 0.0
        %1242 = vmatpush1.msra.mxu0 0.0
        %1243 = vmatprep.subr.mxu0 0.0
        %1244 = vmatpush1.msra.mxu0 0.0
        %1245 = vmatprep.subr.mxu0 0.0
        %1246 = vmatpush1.msra.mxu0 0.0
        %1247 = vmatprep.subr.mxu0 0.0
        %1248 = vmatpush1.msra.mxu0 0.0
        %1249 = vmatprep.subr.mxu0 0.0
        %1250 = vmatpush1.msra.mxu0 0.0
        %1251 = vmatprep.subr.mxu0 0.0
        %1252 = vmatpush1.msra.mxu0 0.0
        %1253 = vmatprep.subr.mxu0 0.0
        %1254 = vmatpush1.msra.mxu0 0.0
        %1255 = vmatprep.subr.mxu0 0.0
        %1256 = vmatpush1.msra.mxu0 0.0
        %1257 = vmatprep.subr.mxu0 0.0
        %1258 = vmatpush1.msra.mxu0 0.0
        %1259 = vmatprep.subr.mxu0 0.0
        %1260 = vmatpush1.msra.mxu0 0.0
        %1261 = vmatprep.subr.mxu0 0.0
        %1262 = vmatpush1.msra.mxu0 0.0
        %1263 = vmatprep.subr.mxu0 0.0
        %1264 = vmatpush1.msra.mxu0 0.0
        %1265 = vmatprep.subr.mxu0 0.0
        %1266 = vmatpush1.msra.mxu0 0.0
        %1267 = vmatprep.subr.mxu0 0.0
        %1268 = vmatpush1.msra.mxu0 0.0
        %1269 = vmatprep.subr.mxu0 0.0
        %1270 = vmatpush1.msra.mxu0 0.0
        %1271 = vmatprep.subr.mxu0 0.0
        %1272 = vmatpush1.msra.mxu0 0.0
        %1273 = vmatprep.subr.mxu0 0.0
        %1274 = vmatpush1.msra.mxu0 0.0
        %1275 = vmatprep.subr.mxu0 0.0
        %1276 = vmatpush1.msra.mxu0 0.0
        %1277 = vmatprep.mubr.f32.mxu0 0.0
        %1278 = vmatmul.mubr.f32.gmra.mrb[0].mxu0 %v1211
        %v1279 = vpop.f32.mrb[0].mxu0
        %v1280 = vadd.f32 0.0, %v1279
        %v1281 = vpop.f32.mrb[0].mxu0
        %v1282 = vadd.f32 0.0, %v1281
        %1283 = vdwg.mxu0
        %v1284 = vadd.f32 %v1189, %v1280
        %v1285 = vadd.f32 %v1190, %v1282
        %1286 = vrot.lane.b32.xlu0 %v533, 111
        %v1287 = vpop.permute.xlu0 %1286
        %1288 = vrot.lane.b32.xlu0 %v534, 111
        %v1289 = vpop.permute.xlu0 %1288
        %vm1290 = vcmp.lt.s32.totalorder %v540, 111
        %v1291 = vsel %vm1290, %v1287, %v1289
        %v1292 = vsel %vm1290, %v1289, %v1287
        %v1293 = vlaneseq
        %v1294 = vshrl.u32 %v1293, 7
        %v1295 = vsub.s32 0, %v1294
        %v1296 = vrot.slane %v391, %v1295
        %v1297 = vlaneseq
        %v1298 = vshrl.u32 %v1297, 7
        %v1299 = vsub.s32 0, %v1298
        %v1300 = vrot.slane %v392, %v1299
        %v1301 = vmul.f32 %v1291, %v1296
        %v1302 = vmul.f32 %v1292, %v1300
        %s1303 = scalar_lea.vmem %s5, 64
        %v1304 = vld [vmem:[%s1303] sm:$0xff]
        %v1306 = vsel %vm574, %v1304, 0
        %1308 = vmatprep.subr.mxu0 %v1302
        %1309 = vmatpush1.msra.mxu0 %v1301
        %1310 = vmatprep.subr.mxu0 0.0
        %1311 = vmatpush1.msra.mxu0 0.0
        %1312 = vmatprep.subr.mxu0 0.0
        %1313 = vmatpush1.msra.mxu0 0.0
        %1314 = vmatprep.subr.mxu0 0.0
        %1315 = vmatpush1.msra.mxu0 0.0
        %1316 = vmatprep.subr.mxu0 0.0
        %1317 = vmatpush1.msra.mxu0 0.0
        %1318 = vmatprep.subr.mxu0 0.0
        %1319 = vmatpush1.msra.mxu0 0.0
        %1320 = vmatprep.subr.mxu0 0.0
        %1321 = vmatpush1.msra.mxu0 0.0
        %1322 = vmatprep.subr.mxu0 0.0
        %1323 = vmatpush1.msra.mxu0 0.0
        %1324 = vmatprep.subr.mxu0 0.0
        %1325 = vmatpush1.msra.mxu0 0.0
        %1326 = vmatprep.subr.mxu0 0.0
        %1327 = vmatpush1.msra.mxu0 0.0
        %1328 = vmatprep.subr.mxu0 0.0
        %1329 = vmatpush1.msra.mxu0 0.0
        %1330 = vmatprep.subr.mxu0 0.0
        %1331 = vmatpush1.msra.mxu0 0.0
        %1332 = vmatprep.subr.mxu0 0.0
        %1333 = vmatpush1.msra.mxu0 0.0
        %1334 = vmatprep.subr.mxu0 0.0
        %1335 = vmatpush1.msra.mxu0 0.0
        %1336 = vmatprep.subr.mxu0 0.0
        %1337 = vmatpush1.msra.mxu0 0.0
        %1338 = vmatprep.subr.mxu0 0.0
        %1339 = vmatpush1.msra.mxu0 0.0
        %1340 = vmatprep.subr.mxu0 0.0
        %1341 = vmatpush1.msra.mxu0 0.0
        %1342 = vmatprep.subr.mxu0 0.0
        %1343 = vmatpush1.msra.mxu0 0.0
        %1344 = vmatprep.subr.mxu0 0.0
        %1345 = vmatpush1.msra.mxu0 0.0
        %1346 = vmatprep.subr.mxu0 0.0
        %1347 = vmatpush1.msra.mxu0 0.0
        %1348 = vmatprep.subr.mxu0 0.0
        %1349 = vmatpush1.msra.mxu0 0.0
        %1350 = vmatprep.subr.mxu0 0.0
        %1351 = vmatpush1.msra.mxu0 0.0
        %1352 = vmatprep.subr.mxu0 0.0
        %1353 = vmatpush1.msra.mxu0 0.0
        %1354 = vmatprep.subr.mxu0 0.0
        %1355 = vmatpush1.msra.mxu0 0.0
        %1356 = vmatprep.subr.mxu0 0.0
        %1357 = vmatpush1.msra.mxu0 0.0
        %1358 = vmatprep.subr.mxu0 0.0
        %1359 = vmatpush1.msra.mxu0 0.0
        %1360 = vmatprep.subr.mxu0 0.0
        %1361 = vmatpush1.msra.mxu0 0.0
        %1362 = vmatprep.subr.mxu0 0.0
        %1363 = vmatpush1.msra.mxu0 0.0
        %1364 = vmatprep.subr.mxu0 0.0
        %1365 = vmatpush1.msra.mxu0 0.0
        %1366 = vmatprep.subr.mxu0 0.0
        %1367 = vmatpush1.msra.mxu0 0.0
        %1368 = vmatprep.subr.mxu0 0.0
        %1369 = vmatpush1.msra.mxu0 0.0
        %1370 = vmatprep.subr.mxu0 0.0
        %1371 = vmatpush1.msra.mxu0 0.0
        %1372 = vmatprep.mubr.f32.mxu0 0.0
        %1373 = vmatmul.mubr.f32.gmra.mrb[0].mxu0 %v1306
        %v1374 = vpop.f32.mrb[0].mxu0
        %v1375 = vadd.f32 0.0, %v1374
        %v1376 = vpop.f32.mrb[0].mxu0
        %v1377 = vadd.f32 0.0, %v1376
        %1378 = vdwg.mxu0
        %v1379 = vadd.f32 %v1284, %v1375
        %v1380 = vadd.f32 %v1285, %v1377
        %1382 = vset.pattern.permute.xlu0 0
        %1383 = vperm.xlu0 %1382, %v399
        %v1384 = vpop.permute.xlu0 %1383
        %v1386 = vadd.f32 %v1379, %v1384
        %v1387 = vadd.f32 %v1380, %v1384
        %v1388 = vmax.f32 %v1386, 0.0
        %v1389 = vmax.f32 %v1387, 0.0
        %v1390 = vadd.f32 %v1388, %v527
        %v1391 = vadd.f32 %v1389, %v529
        %vm1392 = vcmask 48128
        %v1394 = vsel %vm1392, %v401, 0
        %vm1396 = vcmask 1045504
        %v1397 = vsel %vm1396, %v404, 0
        %v1399 = vsel %vm1396, %v405, 0
        %1401 = vmatprep.subr.mxu0 %v1399
        %1402 = vmatpush1.msra.mxu0 %v1397
        %1403 = vmatprep.subr.mxu0 0.0
        %1404 = vmatpush1.msra.mxu0 0.0
        %1405 = vmatprep.subr.mxu0 0.0
        %1406 = vmatpush1.msra.mxu0 0.0
        %1407 = vmatprep.subr.mxu0 0.0
        %1408 = vmatpush1.msra.mxu0 0.0
        %1409 = vmatprep.subr.mxu0 0.0
        %1410 = vmatpush1.msra.mxu0 0.0
        %1411 = vmatprep.subr.mxu0 0.0
        %1412 = vmatpush1.msra.mxu0 0.0
        %1413 = vmatprep.subr.mxu0 0.0
        %1414 = vmatpush1.msra.mxu0 0.0
        %1415 = vmatprep.subr.mxu0 0.0
        %1416 = vmatpush1.msra.mxu0 0.0
        %1417 = vmatprep.subr.mxu0 0.0
        %1418 = vmatpush1.msra.mxu0 0.0
        %1419 = vmatprep.subr.mxu0 0.0
        %1420 = vmatpush1.msra.mxu0 0.0
        %1421 = vmatprep.subr.mxu0 0.0
        %1422 = vmatpush1.msra.mxu0 0.0
        %1423 = vmatprep.subr.mxu0 0.0
        %1424 = vmatpush1.msra.mxu0 0.0
        %1425 = vmatprep.subr.mxu0 0.0
        %1426 = vmatpush1.msra.mxu0 0.0
        %1427 = vmatprep.subr.mxu0 0.0
        %1428 = vmatpush1.msra.mxu0 0.0
        %1429 = vmatprep.subr.mxu0 0.0
        %1430 = vmatpush1.msra.mxu0 0.0
        %1431 = vmatprep.subr.mxu0 0.0
        %1432 = vmatpush1.msra.mxu0 0.0
        %1433 = vmatprep.subr.mxu0 0.0
        %1434 = vmatpush1.msra.mxu0 0.0
        %1435 = vmatprep.subr.mxu0 0.0
        %1436 = vmatpush1.msra.mxu0 0.0
        %1437 = vmatprep.subr.mxu0 0.0
        %1438 = vmatpush1.msra.mxu0 0.0
        %1439 = vmatprep.subr.mxu0 0.0
        %1440 = vmatpush1.msra.mxu0 0.0
        %1441 = vmatprep.subr.mxu0 0.0
        %1442 = vmatpush1.msra.mxu0 0.0
        %1443 = vmatprep.subr.mxu0 0.0
        %1444 = vmatpush1.msra.mxu0 0.0
        %1445 = vmatprep.subr.mxu0 0.0
        %1446 = vmatpush1.msra.mxu0 0.0
        %1447 = vmatprep.subr.mxu0 0.0
        %1448 = vmatpush1.msra.mxu0 0.0
        %1449 = vmatprep.subr.mxu0 0.0
        %1450 = vmatpush1.msra.mxu0 0.0
        %1451 = vmatprep.subr.mxu0 0.0
        %1452 = vmatpush1.msra.mxu0 0.0
        %1453 = vmatprep.subr.mxu0 0.0
        %1454 = vmatpush1.msra.mxu0 0.0
        %1455 = vmatprep.subr.mxu0 0.0
        %1456 = vmatpush1.msra.mxu0 0.0
        %1457 = vmatprep.subr.mxu0 0.0
        %1458 = vmatpush1.msra.mxu0 0.0
        %1459 = vmatprep.subr.mxu0 0.0
        %1460 = vmatpush1.msra.mxu0 0.0
        %1461 = vmatprep.subr.mxu0 0.0
        %1462 = vmatpush1.msra.mxu0 0.0
        %1463 = vmatprep.subr.mxu0 0.0
        %1464 = vmatpush1.msra.mxu0 0.0
        %1465 = vmatprep.mubr.f32.mxu0 0.0
        %1466 = vmatmul.mubr.f32.gmra.mrb[0].mxu0 %v1394
        %v1467 = vpop.f32.mrb[0].mxu0
        %v1468 = vadd.f32 0.0, %v1467
        %v1469 = vpop.f32.mrb[0].mxu0
        %v1470 = vadd.f32 0.0, %v1469
        %1471 = vdwg.mxu0
        %v1473 = vsel %vm574, %v400, 0
        %1475 = vmatprep.subr.mxu0 %v1391
        %1476 = vmatpush1.msra.mxu0 %v1390
        %1477 = vmatprep.subr.mxu0 0.0
        %1478 = vmatpush1.msra.mxu0 0.0
        %1479 = vmatprep.subr.mxu0 0.0
        %1480 = vmatpush1.msra.mxu0 0.0
        %1481 = vmatprep.subr.mxu0 0.0
        %1482 = vmatpush1.msra.mxu0 0.0
        %1483 = vmatprep.subr.mxu0 0.0
        %1484 = vmatpush1.msra.mxu0 0.0
        %1485 = vmatprep.subr.mxu0 0.0
        %1486 = vmatpush1.msra.mxu0 0.0
        %1487 = vmatprep.subr.mxu0 0.0
        %1488 = vmatpush1.msra.mxu0 0.0
        %1489 = vmatprep.subr.mxu0 0.0
        %1490 = vmatpush1.msra.mxu0 0.0
        %1491 = vmatprep.subr.mxu0 0.0
        %1492 = vmatpush1.msra.mxu0 0.0
        %1493 = vmatprep.subr.mxu0 0.0
        %1494 = vmatpush1.msra.mxu0 0.0
        %1495 = vmatprep.subr.mxu0 0.0
        %1496 = vmatpush1.msra.mxu0 0.0
        %1497 = vmatprep.subr.mxu0 0.0
        %1498 = vmatpush1.msra.mxu0 0.0
        %1499 = vmatprep.subr.mxu0 0.0
        %1500 = vmatpush1.msra.mxu0 0.0
        %1501 = vmatprep.subr.mxu0 0.0
        %1502 = vmatpush1.msra.mxu0 0.0
        %1503 = vmatprep.subr.mxu0 0.0
        %1504 = vmatpush1.msra.mxu0 0.0
        %1505 = vmatprep.subr.mxu0 0.0
        %1506 = vmatpush1.msra.mxu0 0.0
        %1507 = vmatprep.subr.mxu0 0.0
        %1508 = vmatpush1.msra.mxu0 0.0
        %1509 = vmatprep.subr.mxu0 0.0
        %1510 = vmatpush1.msra.mxu0 0.0
        %1511 = vmatprep.subr.mxu0 0.0
        %1512 = vmatpush1.msra.mxu0 0.0
        %1513 = vmatprep.subr.mxu0 0.0
        %1514 = vmatpush1.msra.mxu0 0.0
        %1515 = vmatprep.subr.mxu0 0.0
        %1516 = vmatpush1.msra.mxu0 0.0
        %1517 = vmatprep.subr.mxu0 0.0
        %1518 = vmatpush1.msra.mxu0 0.0
        %1519 = vmatprep.subr.mxu0 0.0
        %1520 = vmatpush1.msra.mxu0 0.0
        %1521 = vmatprep.subr.mxu0 0.0
        %1522 = vmatpush1.msra.mxu0 0.0
        %1523 = vmatprep.subr.mxu0 0.0
        %1524 = vmatpush1.msra.mxu0 0.0
        %1525 = vmatprep.subr.mxu0 0.0
        %1526 = vmatpush1.msra.mxu0 0.0
        %1527 = vmatprep.subr.mxu0 0.0
        %1528 = vmatpush1.msra.mxu0 0.0
        %1529 = vmatprep.subr.mxu0 0.0
        %1530 = vmatpush1.msra.mxu0 0.0
        %1531 = vmatprep.subr.mxu0 0.0
        %1532 = vmatpush1.msra.mxu0 0.0
        %1533 = vmatprep.subr.mxu0 0.0
        %1534 = vmatpush1.msra.mxu0 0.0
        %1535 = vmatprep.subr.mxu0 0.0
        %1536 = vmatpush1.msra.mxu0 0.0
        %1537 = vmatprep.subr.mxu0 0.0
        %1538 = vmatpush1.msra.mxu0 0.0
        %1539 = vmatprep.mubr.f32.mxu0 0.0
        %1540 = vmatmul.mubr.f32.gmra.mrb[0].mxu0 %v1473
        %v1541 = vpop.f32.mrb[0].mxu0
        %v1542 = vadd.f32 %v1468, %v1541
        %v1543 = vpop.f32.mrb[0].mxu0
        %v1544 = vadd.f32 %v1470, %v1543
        %1545 = vdwg.mxu0
        %1547 = vset.pattern.permute.xlu0 0
        %1548 = vperm.xlu0 %1547, %v402
        %v1549 = vpop.permute.xlu0 %1548
        %v1551 = vadd.f32 %v1542, %v1549
        %v1552 = vadd.f32 %v1544, %v1549
        %v1553 = vadd.f32 %v1551, %v403
        %v1554 = vadd.f32 %v1552, %v407
        %v1557 = vcombine.low %v1553, %v1554
        %1559 = vst [vmem:[%s373] sm:$0xff] %v1557
        %s1560 = scalar_lea.vmem %s379, 8
        %v1561 = vld [vmem:[%s1560] sm:$0xff]
        %s1562 = scalar_lea.vmem %s386, 16
        %v1563 = vld [vmem:[%s1562] sm:$0x3f]
        %v1564 = vld [vmem:[%s1562 + $0x8] sm:$0x3f]
        %v1566 = vcombine.high %v1561, %v1561
        %v1570 = vrot.slane %v1563, 4
        %v1571 = vrot.slane %v1564, 4
        %v1574 = vsel %vm415, %v1561, %v1570
        %v1575 = vsel %vm415, %v1566, %v1571
        %v1576 = vsel %vm443, %v1570, 0
        %v1578 = vsel %vm443, %v1571, 0
        %1580 = vmatprep.subr.mxu0 %v1575
        %1581 = vmatpush1.msra.mxu0 %v1574
        %1582 = vmatprep.subr.mxu0 %v1578
        %1583 = vmatpush1.msra.mxu0 %v1576
        %1584 = vmatprep.subr.mxu0 0.0
        %1585 = vmatpush1.msra.mxu0 0.0
        %1586 = vmatprep.subr.mxu0 0.0
        %1587 = vmatpush1.msra.mxu0 0.0
        %1588 = vmatprep.subr.mxu0 0.0
        %1589 = vmatpush1.msra.mxu0 0.0
        %1590 = vmatprep.subr.mxu0 0.0
        %1591 = vmatpush1.msra.mxu0 0.0
        %1592 = vmatprep.subr.mxu0 0.0
        %1593 = vmatpush1.msra.mxu0 0.0
        %1594 = vmatprep.subr.mxu0 0.0
        %1595 = vmatpush1.msra.mxu0 0.0
        %1596 = vmatprep.subr.mxu0 0.0
        %1597 = vmatpush1.msra.mxu0 0.0
        %1598 = vmatprep.subr.mxu0 0.0
        %1599 = vmatpush1.msra.mxu0 0.0
        %1600 = vmatprep.subr.mxu0 0.0
        %1601 = vmatpush1.msra.mxu0 0.0
        %1602 = vmatprep.subr.mxu0 0.0
        %1603 = vmatpush1.msra.mxu0 0.0
        %1604 = vmatprep.subr.mxu0 0.0
        %1605 = vmatpush1.msra.mxu0 0.0
        %1606 = vmatprep.subr.mxu0 0.0
        %1607 = vmatpush1.msra.mxu0 0.0
        %1608 = vmatprep.subr.mxu0 0.0
        %1609 = vmatpush1.msra.mxu0 0.0
        %1610 = vmatprep.subr.mxu0 0.0
        %1611 = vmatpush1.msra.mxu0 0.0
        %1612 = vmatprep.subr.mxu0 0.0
        %1613 = vmatpush1.msra.mxu0 0.0
        %1614 = vmatprep.subr.mxu0 0.0
        %1615 = vmatpush1.msra.mxu0 0.0
        %1616 = vmatprep.subr.mxu0 0.0
        %1617 = vmatpush1.msra.mxu0 0.0
        %1618 = vmatprep.subr.mxu0 0.0
        %1619 = vmatpush1.msra.mxu0 0.0
        %1620 = vmatprep.subr.mxu0 0.0
        %1621 = vmatpush1.msra.mxu0 0.0
        %1622 = vmatprep.subr.mxu0 0.0
        %1623 = vmatpush1.msra.mxu0 0.0
        %1624 = vmatprep.subr.mxu0 0.0
        %1625 = vmatpush1.msra.mxu0 0.0
        %1626 = vmatprep.subr.mxu0 0.0
        %1627 = vmatpush1.msra.mxu0 0.0
        %1628 = vmatprep.subr.mxu0 0.0
        %1629 = vmatpush1.msra.mxu0 0.0
        %1630 = vmatprep.subr.mxu0 0.0
        %1631 = vmatpush1.msra.mxu0 0.0
        %1632 = vmatprep.subr.mxu0 0.0
        %1633 = vmatpush1.msra.mxu0 0.0
        %1634 = vmatprep.subr.mxu0 0.0
        %1635 = vmatpush1.msra.mxu0 0.0
        %1636 = vmatprep.subr.mxu0 0.0
        %1637 = vmatpush1.msra.mxu0 0.0
        %1638 = vmatprep.subr.mxu0 0.0
        %1639 = vmatpush1.msra.mxu0 0.0
        %1640 = vmatprep.subr.mxu0 0.0
        %1641 = vmatpush1.msra.mxu0 0.0
        %1642 = vmatprep.subr.mxu0 0.0
        %1643 = vmatpush1.msra.mxu0 0.0
        %1644 = vmatprep.mubr.f32.mxu0 0.0
        %1645 = vmatmul.mubr.f32.gmra.mrb[0].mxu0 %v435
        %v1646 = vpop.f32.mrb[0].mxu0
        %v1647 = vadd.f32 %v421, %v1646
        %v1648 = vpop.f32.mrb[0].mxu0
        %v1649 = vadd.f32 %v421, %v1648
        %1650 = vmatprep.mubr.f32.mxu0 0.0
        %1651 = vmatmul.mubr.f32.gmra.mrb[0].mxu0 %v438
        %v1652 = vpop.f32.mrb[0].mxu0
        %v1653 = vadd.f32 %v426, %v1652
        %v1654 = vpop.f32.mrb[0].mxu0
        %v1655 = vadd.f32 %v426, %v1654
        %1656 = vmatprep.mubr.f32.mxu0 0.0
        %1657 = vmatmul.mubr.f32.gmra.mrb[0].mxu0 %v441
        %v1658 = vpop.f32.mrb[0].mxu0
        %v1659 = vadd.f32 %v431, %v1658
        %v1660 = vpop.f32.mrb[0].mxu0
        %v1661 = vadd.f32 %v431, %v1660
        %1662 = vdwg.mxu0
        %v1663 = vmax.f32 %v1647, 0.0
        %v1664 = vmax.f32 %v1649, 0.0
        %v1665 = vadd.f32 %v1663, %v1653
        %v1666 = vadd.f32 %v1664, %v1655
        %1667 = vrot.lane.b32.xlu0 %v1665, 17
        %v1668 = vpop.permute.xlu0 %1667
        %1669 = vrot.lane.b32.xlu0 %v1666, 17
        %v1670 = vpop.permute.xlu0 %1669
        %v1671 = vsel %vm541, %v1668, %v1670
        %v1672 = vsel %vm541, %v1670, %v1668
        %v1673 = vmul.f32 %v1672, %v547
        %v1674 = vmul.f32 %v1671, %v551
        %v1675 = vld [vmem:[%s5] sm:$0xff]
        %1676 = vrot.lane.b32.xlu0 %v1665, 16
        %v1677 = vpop.permute.xlu0 %1676
        %1678 = vrot.lane.b32.xlu0 %v1666, 16
        %v1679 = vpop.permute.xlu0 %1678
        %v1680 = vsel %vm559, %v1677, %v1679
        %v1681 = vsel %vm559, %v1679, %v1677
        %v1682 = vmul.f32 %v1681, %v565
        %v1683 = vmul.f32 %v1680, %v569
        %v1684 = vld [vmem:[%s572] sm:$0xff]
        %v1686 = vsel %vm574, %v1684, 0
        %1688 = vmatprep.subr.mxu0 %v1683
        %1689 = vmatpush1.msra.mxu0 %v1682
        %1690 = vmatprep.subr.mxu0 0.0
        %1691 = vmatpush1.msra.mxu0 0.0
        %1692 = vmatprep.subr.mxu0 0.0
        %1693 = vmatpush1.msra.mxu0 0.0
        %1694 = vmatprep.subr.mxu0 0.0
        %1695 = vmatpush1.msra.mxu0 0.0
        %1696 = vmatprep.subr.mxu0 0.0
        %1697 = vmatpush1.msra.mxu0 0.0
        %1698 = vmatprep.subr.mxu0 0.0
        %1699 = vmatpush1.msra.mxu0 0.0
        %1700 = vmatprep.subr.mxu0 0.0
        %1701 = vmatpush1.msra.mxu0 0.0
        %1702 = vmatprep.subr.mxu0 0.0
        %1703 = vmatpush1.msra.mxu0 0.0
        %1704 = vmatprep.subr.mxu0 0.0
        %1705 = vmatpush1.msra.mxu0 0.0
        %1706 = vmatprep.subr.mxu0 0.0
        %1707 = vmatpush1.msra.mxu0 0.0
        %1708 = vmatprep.subr.mxu0 0.0
        %1709 = vmatpush1.msra.mxu0 0.0
        %1710 = vmatprep.subr.mxu0 0.0
        %1711 = vmatpush1.msra.mxu0 0.0
        %1712 = vmatprep.subr.mxu0 0.0
        %1713 = vmatpush1.msra.mxu0 0.0
        %1714 = vmatprep.subr.mxu0 0.0
        %1715 = vmatpush1.msra.mxu0 0.0
        %1716 = vmatprep.subr.mxu0 0.0
        %1717 = vmatpush1.msra.mxu0 0.0
        %1718 = vmatprep.subr.mxu0 0.0
        %1719 = vmatpush1.msra.mxu0 0.0
        %1720 = vmatprep.subr.mxu0 0.0
        %1721 = vmatpush1.msra.mxu0 0.0
        %1722 = vmatprep.subr.mxu0 0.0
        %1723 = vmatpush1.msra.mxu0 0.0
        %1724 = vmatprep.subr.mxu0 0.0
        %1725 = vmatpush1.msra.mxu0 0.0
        %1726 = vmatprep.subr.mxu0 0.0
        %1727 = vmatpush1.msra.mxu0 0.0
        %1728 = vmatprep.subr.mxu0 0.0
        %1729 = vmatpush1.msra.mxu0 0.0
        %1730 = vmatprep.subr.mxu0 0.0
        %1731 = vmatpush1.msra.mxu0 0.0
        %1732 = vmatprep.subr.mxu0 0.0
        %1733 = vmatpush1.msra.mxu0 0.0
        %1734 = vmatprep.subr.mxu0 0.0
        %1735 = vmatpush1.msra.mxu0 0.0
        %1736 = vmatprep.subr.mxu0 0.0
        %1737 = vmatpush1.msra.mxu0 0.0
        %1738 = vmatprep.subr.mxu0 0.0
        %1739 = vmatpush1.msra.mxu0 0.0
        %1740 = vmatprep.subr.mxu0 0.0
        %1741 = vmatpush1.msra.mxu0 0.0
        %1742 = vmatprep.subr.mxu0 0.0
        %1743 = vmatpush1.msra.mxu0 0.0
        %1744 = vmatprep.subr.mxu0 0.0
        %1745 = vmatpush1.msra.mxu0 0.0
        %1746 = vmatprep.subr.mxu0 0.0
        %1747 = vmatpush1.msra.mxu0 0.0
        %1748 = vmatprep.subr.mxu0 0.0
        %1749 = vmatpush1.msra.mxu0 0.0
        %1750 = vmatprep.subr.mxu0 0.0
        %1751 = vmatpush1.msra.mxu0 0.0
        %1752 = vmatprep.mubr.f32.mxu0 0.0
        %1753 = vmatmul.mubr.f32.gmra.mrb[0].mxu0 %v1686
        %v1754 = vpop.f32.mrb[0].mxu0
        %v1755 = vadd.f32 0.0, %v1754
        %v1756 = vpop.f32.mrb[0].mxu0
        %v1757 = vadd.f32 0.0, %v1756
        %1758 = vdwg.mxu0
        %v1760 = vsel %vm574, %v1675, 0
        %1762 = vmatprep.subr.mxu0 %v1674
        %1763 = vmatpush1.msra.mxu0 %v1673
        %1764 = vmatprep.subr.mxu0 0.0
        %1765 = vmatpush1.msra.mxu0 0.0
        %1766 = vmatprep.subr.mxu0 0.0
        %1767 = vmatpush1.msra.mxu0 0.0
        %1768 = vmatprep.subr.mxu0 0.0
        %1769 = vmatpush1.msra.mxu0 0.0
        %1770 = vmatprep.subr.mxu0 0.0
        %1771 = vmatpush1.msra.mxu0 0.0
        %1772 = vmatprep.subr.mxu0 0.0
        %1773 = vmatpush1.msra.mxu0 0.0
        %1774 = vmatprep.subr.mxu0 0.0
        %1775 = vmatpush1.msra.mxu0 0.0
        %1776 = vmatprep.subr.mxu0 0.0
        %1777 = vmatpush1.msra.mxu0 0.0
        %1778 = vmatprep.subr.mxu0 0.0
        %1779 = vmatpush1.msra.mxu0 0.0
        %1780 = vmatprep.subr.mxu0 0.0
        %1781 = vmatpush1.msra.mxu0 0.0
        %1782 = vmatprep.subr.mxu0 0.0
        %1783 = vmatpush1.msra.mxu0 0.0
        %1784 = vmatprep.subr.mxu0 0.0
        %1785 = vmatpush1.msra.mxu0 0.0
        %1786 = vmatprep.subr.mxu0 0.0
        %1787 = vmatpush1.msra.mxu0 0.0
        %1788 = vmatprep.subr.mxu0 0.0
        %1789 = vmatpush1.msra.mxu0 0.0
        %1790 = vmatprep.subr.mxu0 0.0
        %1791 = vmatpush1.msra.mxu0 0.0
        %1792 = vmatprep.subr.mxu0 0.0
        %1793 = vmatpush1.msra.mxu0 0.0
        %1794 = vmatprep.subr.mxu0 0.0
        %1795 = vmatpush1.msra.mxu0 0.0
        %1796 = vmatprep.subr.mxu0 0.0
        %1797 = vmatpush1.msra.mxu0 0.0
        %1798 = vmatprep.subr.mxu0 0.0
        %1799 = vmatpush1.msra.mxu0 0.0
        %1800 = vmatprep.subr.mxu0 0.0
        %1801 = vmatpush1.msra.mxu0 0.0
        %1802 = vmatprep.subr.mxu0 0.0
        %1803 = vmatpush1.msra.mxu0 0.0
        %1804 = vmatprep.subr.mxu0 0.0
        %1805 = vmatpush1.msra.mxu0 0.0
        %1806 = vmatprep.subr.mxu0 0.0
        %1807 = vmatpush1.msra.mxu0 0.0
        %1808 = vmatprep.subr.mxu0 0.0
        %1809 = vmatpush1.msra.mxu0 0.0
        %1810 = vmatprep.subr.mxu0 0.0
        %1811 = vmatpush1.msra.mxu0 0.0
        %1812 = vmatprep.subr.mxu0 0.0
        %1813 = vmatpush1.msra.mxu0 0.0
        %1814 = vmatprep.subr.mxu0 0.0
        %1815 = vmatpush1.msra.mxu0 0.0
        %1816 = vmatprep.subr.mxu0 0.0
        %1817 = vmatpush1.msra.mxu0 0.0
        %1818 = vmatprep.subr.mxu0 0.0
        %1819 = vmatpush1.msra.mxu0 0.0
        %1820 = vmatprep.subr.mxu0 0.0
        %1821 = vmatpush1.msra.mxu0 0.0
        %1822 = vmatprep.subr.mxu0 0.0
        %1823 = vmatpush1.msra.mxu0 0.0
        %1824 = vmatprep.subr.mxu0 0.0
        %1825 = vmatpush1.msra.mxu0 0.0
        %1826 = vmatprep.mubr.f32.mxu0 0.0
        %1827 = vmatmul.mubr.f32.gmra.mrb[0].mxu0 %v1760
        %v1828 = vpop.f32.mrb[0].mxu0
        %v1829 = vadd.f32 %v1755, %v1828
        %v1830 = vpop.f32.mrb[0].mxu0
        %v1831 = vadd.f32 %v1757, %v1830
        %1832 = vdwg.mxu0
        %1833 = vrot.lane.b32.xlu0 %v1665, 15
        %v1834 = vpop.permute.xlu0 %1833
        %1835 = vrot.lane.b32.xlu0 %v1666, 15
        %v1836 = vpop.permute.xlu0 %1835
        %v1837 = vsel %vm727, %v1834, %v1836
        %v1838 = vsel %vm727, %v1836, %v1834
        %v1839 = vmul.f32 %v1838, %v733
        %v1840 = vmul.f32 %v1837, %v737
        %v1841 = vld [vmem:[%s740] sm:$0xff]
        %v1843 = vsel %vm574, %v1841, 0
        %1845 = vmatprep.subr.mxu0 %v1840
        %1846 = vmatpush1.msra.mxu0 %v1839
        %1847 = vmatprep.subr.mxu0 0.0
        %1848 = vmatpush1.msra.mxu0 0.0
        %1849 = vmatprep.subr.mxu0 0.0
        %1850 = vmatpush1.msra.mxu0 0.0
        %1851 = vmatprep.subr.mxu0 0.0
        %1852 = vmatpush1.msra.mxu0 0.0
        %1853 = vmatprep.subr.mxu0 0.0
        %1854 = vmatpush1.msra.mxu0 0.0
        %1855 = vmatprep.subr.mxu0 0.0
        %1856 = vmatpush1.msra.mxu0 0.0
        %1857 = vmatprep.subr.mxu0 0.0
        %1858 = vmatpush1.msra.mxu0 0.0
        %1859 = vmatprep.subr.mxu0 0.0
        %1860 = vmatpush1.msra.mxu0 0.0
        %1861 = vmatprep.subr.mxu0 0.0
        %1862 = vmatpush1.msra.mxu0 0.0
        %1863 = vmatprep.subr.mxu0 0.0
        %1864 = vmatpush1.msra.mxu0 0.0
        %1865 = vmatprep.subr.mxu0 0.0
        %1866 = vmatpush1.msra.mxu0 0.0
        %1867 = vmatprep.subr.mxu0 0.0
        %1868 = vmatpush1.msra.mxu0 0.0
        %1869 = vmatprep.subr.mxu0 0.0
        %1870 = vmatpush1.msra.mxu0 0.0
        %1871 = vmatprep.subr.mxu0 0.0
        %1872 = vmatpush1.msra.mxu0 0.0
        %1873 = vmatprep.subr.mxu0 0.0
        %1874 = vmatpush1.msra.mxu0 0.0
        %1875 = vmatprep.subr.mxu0 0.0
        %1876 = vmatpush1.msra.mxu0 0.0
        %1877 = vmatprep.subr.mxu0 0.0
        %1878 = vmatpush1.msra.mxu0 0.0
        %1879 = vmatprep.subr.mxu0 0.0
        %1880 = vmatpush1.msra.mxu0 0.0
        %1881 = vmatprep.subr.mxu0 0.0
        %1882 = vmatpush1.msra.mxu0 0.0
        %1883 = vmatprep.subr.mxu0 0.0
        %1884 = vmatpush1.msra.mxu0 0.0
        %1885 = vmatprep.subr.mxu0 0.0
        %1886 = vmatpush1.msra.mxu0 0.0
        %1887 = vmatprep.subr.mxu0 0.0
        %1888 = vmatpush1.msra.mxu0 0.0
        %1889 = vmatprep.subr.mxu0 0.0
        %1890 = vmatpush1.msra.mxu0 0.0
        %1891 = vmatprep.subr.mxu0 0.0
        %1892 = vmatpush1.msra.mxu0 0.0
        %1893 = vmatprep.subr.mxu0 0.0
        %1894 = vmatpush1.msra.mxu0 0.0
        %1895 = vmatprep.subr.mxu0 0.0
        %1896 = vmatpush1.msra.mxu0 0.0
        %1897 = vmatprep.subr.mxu0 0.0
        %1898 = vmatpush1.msra.mxu0 0.0
        %1899 = vmatprep.subr.mxu0 0.0
        %1900 = vmatpush1.msra.mxu0 0.0
        %1901 = vmatprep.subr.mxu0 0.0
        %1902 = vmatpush1.msra.mxu0 0.0
        %1903 = vmatprep.subr.mxu0 0.0
        %1904 = vmatpush1.msra.mxu0 0.0
        %1905 = vmatprep.subr.mxu0 0.0
        %1906 = vmatpush1.msra.mxu0 0.0
        %1907 = vmatprep.subr.mxu0 0.0
        %1908 = vmatpush1.msra.mxu0 0.0
        %1909 = vmatprep.mubr.f32.mxu0 0.0
        %1910 = vmatmul.mubr.f32.gmra.mrb[0].mxu0 %v1843
        %v1911 = vpop.f32.mrb[0].mxu0
        %v1912 = vadd.f32 0.0, %v1911
        %v1913 = vpop.f32.mrb[0].mxu0
        %v1914 = vadd.f32 0.0, %v1913
        %1915 = vdwg.mxu0
        %v1916 = vadd.f32 %v1829, %v1912
        %v1917 = vadd.f32 %v1831, %v1914
        %1918 = vrot.lane.b32.xlu0 %v1665, 1
        %v1919 = vpop.permute.xlu0 %1918
        %1920 = vrot.lane.b32.xlu0 %v1666, 1
        %v1921 = vpop.permute.xlu0 %1920
        %v1922 = vsel %vm822, %v1919, %v1921
        %v1923 = vsel %vm822, %v1921, %v1919
        %v1924 = vmul.f32 %v1923, %v828
        %v1925 = vmul.f32 %v1922, %v832
        %v1926 = vld [vmem:[%s835] sm:$0xff]
        %v1928 = vsel %vm574, %v1926, 0
        %1930 = vmatprep.subr.mxu0 %v1925
        %1931 = vmatpush1.msra.mxu0 %v1924
        %1932 = vmatprep.subr.mxu0 0.0
        %1933 = vmatpush1.msra.mxu0 0.0
        %1934 = vmatprep.subr.mxu0 0.0
        %1935 = vmatpush1.msra.mxu0 0.0
        %1936 = vmatprep.subr.mxu0 0.0
        %1937 = vmatpush1.msra.mxu0 0.0
        %1938 = vmatprep.subr.mxu0 0.0
        %1939 = vmatpush1.msra.mxu0 0.0
        %1940 = vmatprep.subr.mxu0 0.0
        %1941 = vmatpush1.msra.mxu0 0.0
        %1942 = vmatprep.subr.mxu0 0.0
        %1943 = vmatpush1.msra.mxu0 0.0
        %1944 = vmatprep.subr.mxu0 0.0
        %1945 = vmatpush1.msra.mxu0 0.0
        %1946 = vmatprep.subr.mxu0 0.0
        %1947 = vmatpush1.msra.mxu0 0.0
        %1948 = vmatprep.subr.mxu0 0.0
        %1949 = vmatpush1.msra.mxu0 0.0
        %1950 = vmatprep.subr.mxu0 0.0
        %1951 = vmatpush1.msra.mxu0 0.0
        %1952 = vmatprep.subr.mxu0 0.0
        %1953 = vmatpush1.msra.mxu0 0.0
        %1954 = vmatprep.subr.mxu0 0.0
        %1955 = vmatpush1.msra.mxu0 0.0
        %1956 = vmatprep.subr.mxu0 0.0
        %1957 = vmatpush1.msra.mxu0 0.0
        %1958 = vmatprep.subr.mxu0 0.0
        %1959 = vmatpush1.msra.mxu0 0.0
        %1960 = vmatprep.subr.mxu0 0.0
        %1961 = vmatpush1.msra.mxu0 0.0
        %1962 = vmatprep.subr.mxu0 0.0
        %1963 = vmatpush1.msra.mxu0 0.0
        %1964 = vmatprep.subr.mxu0 0.0
        %1965 = vmatpush1.msra.mxu0 0.0
        %1966 = vmatprep.subr.mxu0 0.0
        %1967 = vmatpush1.msra.mxu0 0.0
        %1968 = vmatprep.subr.mxu0 0.0
        %1969 = vmatpush1.msra.mxu0 0.0
        %1970 = vmatprep.subr.mxu0 0.0
        %1971 = vmatpush1.msra.mxu0 0.0
        %1972 = vmatprep.subr.mxu0 0.0
        %1973 = vmatpush1.msra.mxu0 0.0
        %1974 = vmatprep.subr.mxu0 0.0
        %1975 = vmatpush1.msra.mxu0 0.0
        %1976 = vmatprep.subr.mxu0 0.0
        %1977 = vmatpush1.msra.mxu0 0.0
        %1978 = vmatprep.subr.mxu0 0.0
        %1979 = vmatpush1.msra.mxu0 0.0
        %1980 = vmatprep.subr.mxu0 0.0
        %1981 = vmatpush1.msra.mxu0 0.0
        %1982 = vmatprep.subr.mxu0 0.0
        %1983 = vmatpush1.msra.mxu0 0.0
        %1984 = vmatprep.subr.mxu0 0.0
        %1985 = vmatpush1.msra.mxu0 0.0
        %1986 = vmatprep.subr.mxu0 0.0
        %1987 = vmatpush1.msra.mxu0 0.0
        %1988 = vmatprep.subr.mxu0 0.0
        %1989 = vmatpush1.msra.mxu0 0.0
        %1990 = vmatprep.subr.mxu0 0.0
        %1991 = vmatpush1.msra.mxu0 0.0
        %1992 = vmatprep.subr.mxu0 0.0
        %1993 = vmatpush1.msra.mxu0 0.0
        %1994 = vmatprep.mubr.f32.mxu0 0.0
        %1995 = vmatmul.mubr.f32.gmra.mrb[0].mxu0 %v1928
        %v1996 = vpop.f32.mrb[0].mxu0
        %v1997 = vadd.f32 0.0, %v1996
        %v1998 = vpop.f32.mrb[0].mxu0
        %v1999 = vadd.f32 0.0, %v1998
        %2000 = vdwg.mxu0
        %v2001 = vadd.f32 %v1916, %v1997
        %v2002 = vadd.f32 %v1917, %v1999
        %v2003 = vmul.f32 %v1665, %v916
        %v2004 = vmul.f32 %v1666, %v920
        %v2005 = vld [vmem:[%s923] sm:$0xff]
        %v2007 = vsel %vm574, %v2005, 0
        %2009 = vmatprep.subr.mxu0 %v2004
        %2010 = vmatpush1.msra.mxu0 %v2003
        %2011 = vmatprep.subr.mxu0 0.0
        %2012 = vmatpush1.msra.mxu0 0.0
        %2013 = vmatprep.subr.mxu0 0.0
        %2014 = vmatpush1.msra.mxu0 0.0
        %2015 = vmatprep.subr.mxu0 0.0
        %2016 = vmatpush1.msra.mxu0 0.0
        %2017 = vmatprep.subr.mxu0 0.0
        %2018 = vmatpush1.msra.mxu0 0.0
        %2019 = vmatprep.subr.mxu0 0.0
        %2020 = vmatpush1.msra.mxu0 0.0
        %2021 = vmatprep.subr.mxu0 0.0
        %2022 = vmatpush1.msra.mxu0 0.0
        %2023 = vmatprep.subr.mxu0 0.0
        %2024 = vmatpush1.msra.mxu0 0.0
        %2025 = vmatprep.subr.mxu0 0.0
        %2026 = vmatpush1.msra.mxu0 0.0
        %2027 = vmatprep.subr.mxu0 0.0
        %2028 = vmatpush1.msra.mxu0 0.0
        %2029 = vmatprep.subr.mxu0 0.0
        %2030 = vmatpush1.msra.mxu0 0.0
        %2031 = vmatprep.subr.mxu0 0.0
        %2032 = vmatpush1.msra.mxu0 0.0
        %2033 = vmatprep.subr.mxu0 0.0
        %2034 = vmatpush1.msra.mxu0 0.0
        %2035 = vmatprep.subr.mxu0 0.0
        %2036 = vmatpush1.msra.mxu0 0.0
        %2037 = vmatprep.subr.mxu0 0.0
        %2038 = vmatpush1.msra.mxu0 0.0
        %2039 = vmatprep.subr.mxu0 0.0
        %2040 = vmatpush1.msra.mxu0 0.0
        %2041 = vmatprep.subr.mxu0 0.0
        %2042 = vmatpush1.msra.mxu0 0.0
        %2043 = vmatprep.subr.mxu0 0.0
        %2044 = vmatpush1.msra.mxu0 0.0
        %2045 = vmatprep.subr.mxu0 0.0
        %2046 = vmatpush1.msra.mxu0 0.0
        %2047 = vmatprep.subr.mxu0 0.0
        %2048 = vmatpush1.msra.mxu0 0.0
        %2049 = vmatprep.subr.mxu0 0.0
        %2050 = vmatpush1.msra.mxu0 0.0
        %2051 = vmatprep.subr.mxu0 0.0
        %2052 = vmatpush1.msra.mxu0 0.0
        %2053 = vmatprep.subr.mxu0 0.0
        %2054 = vmatpush1.msra.mxu0 0.0
        %2055 = vmatprep.subr.mxu0 0.0
        %2056 = vmatpush1.msra.mxu0 0.0
        %2057 = vmatprep.subr.mxu0 0.0
        %2058 = vmatpush1.msra.mxu0 0.0
        %2059 = vmatprep.subr.mxu0 0.0
        %2060 = vmatpush1.msra.mxu0 0.0
        %2061 = vmatprep.subr.mxu0 0.0
        %2062 = vmatpush1.msra.mxu0 0.0
        %2063 = vmatprep.subr.mxu0 0.0
        %2064 = vmatpush1.msra.mxu0 0.0
        %2065 = vmatprep.subr.mxu0 0.0
        %2066 = vmatpush1.msra.mxu0 0.0
        %2067 = vmatprep.subr.mxu0 0.0
        %2068 = vmatpush1.msra.mxu0 0.0
        %2069 = vmatprep.subr.mxu0 0.0
        %2070 = vmatpush1.msra.mxu0 0.0
        %2071 = vmatprep.subr.mxu0 0.0
        %2072 = vmatpush1.msra.mxu0 0.0
        %2073 = vmatprep.mubr.f32.mxu0 0.0
        %2074 = vmatmul.mubr.f32.gmra.mrb[0].mxu0 %v2007
        %v2075 = vpop.f32.mrb[0].mxu0
        %v2076 = vadd.f32 0.0, %v2075
        %v2077 = vpop.f32.mrb[0].mxu0
        %v2078 = vadd.f32 0.0, %v2077
        %2079 = vdwg.mxu0
        %v2080 = vadd.f32 %v2001, %v2076
        %v2081 = vadd.f32 %v2002, %v2078
        %2082 = vrot.lane.b32.xlu0 %v1665, 127
        %v2083 = vpop.permute.xlu0 %2082
        %2084 = vrot.lane.b32.xlu0 %v1666, 127
        %v2085 = vpop.permute.xlu0 %2084
        %v2086 = vsel %vm1005, %v2083, %v2085
        %v2087 = vsel %vm1005, %v2085, %v2083
        %v2088 = vmul.f32 %v2086, %v1011
        %v2089 = vmul.f32 %v2087, %v1015
        %v2090 = vld [vmem:[%s1018] sm:$0xff]
        %v2092 = vsel %vm574, %v2090, 0
        %2094 = vmatprep.subr.mxu0 %v2089
        %2095 = vmatpush1.msra.mxu0 %v2088
        %2096 = vmatprep.subr.mxu0 0.0
        %2097 = vmatpush1.msra.mxu0 0.0
        %2098 = vmatprep.subr.mxu0 0.0
        %2099 = vmatpush1.msra.mxu0 0.0
        %2100 = vmatprep.subr.mxu0 0.0
        %2101 = vmatpush1.msra.mxu0 0.0
        %2102 = vmatprep.subr.mxu0 0.0
        %2103 = vmatpush1.msra.mxu0 0.0
        %2104 = vmatprep.subr.mxu0 0.0
        %2105 = vmatpush1.msra.mxu0 0.0
        %2106 = vmatprep.subr.mxu0 0.0
        %2107 = vmatpush1.msra.mxu0 0.0
        %2108 = vmatprep.subr.mxu0 0.0
        %2109 = vmatpush1.msra.mxu0 0.0
        %2110 = vmatprep.subr.mxu0 0.0
        %2111 = vmatpush1.msra.mxu0 0.0
        %2112 = vmatprep.subr.mxu0 0.0
        %2113 = vmatpush1.msra.mxu0 0.0
        %2114 = vmatprep.subr.mxu0 0.0
        %2115 = vmatpush1.msra.mxu0 0.0
        %2116 = vmatprep.subr.mxu0 0.0
        %2117 = vmatpush1.msra.mxu0 0.0
        %2118 = vmatprep.subr.mxu0 0.0
        %2119 = vmatpush1.msra.mxu0 0.0
        %2120 = vmatprep.subr.mxu0 0.0
        %2121 = vmatpush1.msra.mxu0 0.0
        %2122 = vmatprep.subr.mxu0 0.0
        %2123 = vmatpush1.msra.mxu0 0.0
        %2124 = vmatprep.subr.mxu0 0.0
        %2125 = vmatpush1.msra.mxu0 0.0
        %2126 = vmatprep.subr.mxu0 0.0
        %2127 = vmatpush1.msra.mxu0 0.0
        %2128 = vmatprep.subr.mxu0 0.0
        %2129 = vmatpush1.msra.mxu0 0.0
        %2130 = vmatprep.subr.mxu0 0.0
        %2131 = vmatpush1.msra.mxu0 0.0
        %2132 = vmatprep.subr.mxu0 0.0
        %2133 = vmatpush1.msra.mxu0 0.0
        %2134 = vmatprep.subr.mxu0 0.0
        %2135 = vmatpush1.msra.mxu0 0.0
        %2136 = vmatprep.subr.mxu0 0.0
        %2137 = vmatpush1.msra.mxu0 0.0
        %2138 = vmatprep.subr.mxu0 0.0
        %2139 = vmatpush1.msra.mxu0 0.0
        %2140 = vmatprep.subr.mxu0 0.0
        %2141 = vmatpush1.msra.mxu0 0.0
        %2142 = vmatprep.subr.mxu0 0.0
        %2143 = vmatpush1.msra.mxu0 0.0
        %2144 = vmatprep.subr.mxu0 0.0
        %2145 = vmatpush1.msra.mxu0 0.0
        %2146 = vmatprep.subr.mxu0 0.0
        %2147 = vmatpush1.msra.mxu0 0.0
        %2148 = vmatprep.subr.mxu0 0.0
        %2149 = vmatpush1.msra.mxu0 0.0
        %2150 = vmatprep.subr.mxu0 0.0
        %2151 = vmatpush1.msra.mxu0 0.0
        %2152 = vmatprep.subr.mxu0 0.0
        %2153 = vmatpush1.msra.mxu0 0.0
        %2154 = vmatprep.subr.mxu0 0.0
        %2155 = vmatpush1.msra.mxu0 0.0
        %2156 = vmatprep.subr.mxu0 0.0
        %2157 = vmatpush1.msra.mxu0 0.0
        %2158 = vmatprep.mubr.f32.mxu0 0.0
        %2159 = vmatmul.mubr.f32.gmra.mrb[0].mxu0 %v2092
        %v2160 = vpop.f32.mrb[0].mxu0
        %v2161 = vadd.f32 0.0, %v2160
        %v2162 = vpop.f32.mrb[0].mxu0
        %v2163 = vadd.f32 0.0, %v2162
        %2164 = vdwg.mxu0
        %v2165 = vadd.f32 %v2080, %v2161
        %v2166 = vadd.f32 %v2081, %v2163
        %2167 = vrot.lane.b32.xlu0 %v1665, 113
        %v2168 = vpop.permute.xlu0 %2167
        %2169 = vrot.lane.b32.xlu0 %v1666, 113
        %v2170 = vpop.permute.xlu0 %2169
        %v2171 = vsel %vm1100, %v2168, %v2170
        %v2172 = vsel %vm1100, %v2170, %v2168
        %v2173 = vmul.f32 %v2171, %v1106
        %v2174 = vmul.f32 %v2172, %v1110
        %v2175 = vld [vmem:[%s1113] sm:$0xff]
        %v2177 = vsel %vm574, %v2175, 0
        %2179 = vmatprep.subr.mxu0 %v2174
        %2180 = vmatpush1.msra.mxu0 %v2173
        %2181 = vmatprep.subr.mxu0 0.0
        %2182 = vmatpush1.msra.mxu0 0.0
        %2183 = vmatprep.subr.mxu0 0.0
        %2184 = vmatpush1.msra.mxu0 0.0
        %2185 = vmatprep.subr.mxu0 0.0
        %2186 = vmatpush1.msra.mxu0 0.0
        %2187 = vmatprep.subr.mxu0 0.0
        %2188 = vmatpush1.msra.mxu0 0.0
        %2189 = vmatprep.subr.mxu0 0.0
        %2190 = vmatpush1.msra.mxu0 0.0
        %2191 = vmatprep.subr.mxu0 0.0
        %2192 = vmatpush1.msra.mxu0 0.0
        %2193 = vmatprep.subr.mxu0 0.0
        %2194 = vmatpush1.msra.mxu0 0.0
        %2195 = vmatprep.subr.mxu0 0.0
        %2196 = vmatpush1.msra.mxu0 0.0
        %2197 = vmatprep.subr.mxu0 0.0
        %2198 = vmatpush1.msra.mxu0 0.0
        %2199 = vmatprep.subr.mxu0 0.0
        %2200 = vmatpush1.msra.mxu0 0.0
        %2201 = vmatprep.subr.mxu0 0.0
        %2202 = vmatpush1.msra.mxu0 0.0
        %2203 = vmatprep.subr.mxu0 0.0
        %2204 = vmatpush1.msra.mxu0 0.0
        %2205 = vmatprep.subr.mxu0 0.0
        %2206 = vmatpush1.msra.mxu0 0.0
        %2207 = vmatprep.subr.mxu0 0.0
        %2208 = vmatpush1.msra.mxu0 0.0
        %2209 = vmatprep.subr.mxu0 0.0
        %2210 = vmatpush1.msra.mxu0 0.0
        %2211 = vmatprep.subr.mxu0 0.0
        %2212 = vmatpush1.msra.mxu0 0.0
        %2213 = vmatprep.subr.mxu0 0.0
        %2214 = vmatpush1.msra.mxu0 0.0
        %2215 = vmatprep.subr.mxu0 0.0
        %2216 = vmatpush1.msra.mxu0 0.0
        %2217 = vmatprep.subr.mxu0 0.0
        %2218 = vmatpush1.msra.mxu0 0.0
        %2219 = vmatprep.subr.mxu0 0.0
        %2220 = vmatpush1.msra.mxu0 0.0
        %2221 = vmatprep.subr.mxu0 0.0
        %2222 = vmatpush1.msra.mxu0 0.0
        %2223 = vmatprep.subr.mxu0 0.0
        %2224 = vmatpush1.msra.mxu0 0.0
        %2225 = vmatprep.subr.mxu0 0.0
        %2226 = vmatpush1.msra.mxu0 0.0
        %2227 = vmatprep.subr.mxu0 0.0
        %2228 = vmatpush1.msra.mxu0 0.0
        %2229 = vmatprep.subr.mxu0 0.0
        %2230 = vmatpush1.msra.mxu0 0.0
        %2231 = vmatprep.subr.mxu0 0.0
        %2232 = vmatpush1.msra.mxu0 0.0
        %2233 = vmatprep.subr.mxu0 0.0
        %2234 = vmatpush1.msra.mxu0 0.0
        %2235 = vmatprep.subr.mxu0 0.0
        %2236 = vmatpush1.msra.mxu0 0.0
        %2237 = vmatprep.subr.mxu0 0.0
        %2238 = vmatpush1.msra.mxu0 0.0
        %2239 = vmatprep.subr.mxu0 0.0
        %2240 = vmatpush1.msra.mxu0 0.0
        %2241 = vmatprep.subr.mxu0 0.0
        %2242 = vmatpush1.msra.mxu0 0.0
        %2243 = vmatprep.mubr.f32.mxu0 0.0
        %2244 = vmatmul.mubr.f32.gmra.mrb[0].mxu0 %v2177
        %v2245 = vpop.f32.mrb[0].mxu0
        %v2246 = vadd.f32 0.0, %v2245
        %v2247 = vpop.f32.mrb[0].mxu0
        %v2248 = vadd.f32 0.0, %v2247
        %2249 = vdwg.mxu0
        %v2250 = vadd.f32 %v2165, %v2246
        %v2251 = vadd.f32 %v2166, %v2248
        %2252 = vrot.lane.b32.xlu0 %v1665, 112
        %v2253 = vpop.permute.xlu0 %2252
        %2254 = vrot.lane.b32.xlu0 %v1666, 112
        %v2255 = vpop.permute.xlu0 %2254
        %v2256 = vsel %vm1195, %v2253, %v2255
        %v2257 = vsel %vm1195, %v2255, %v2253
        %v2258 = vmul.f32 %v2256, %v1201
        %v2259 = vmul.f32 %v2257, %v1205
        %v2260 = vld [vmem:[%s1208] sm:$0xff]
        %v2262 = vsel %vm574, %v2260, 0
        %2264 = vmatprep.subr.mxu0 %v2259
        %2265 = vmatpush1.msra.mxu0 %v2258
        %2266 = vmatprep.subr.mxu0 0.0
        %2267 = vmatpush1.msra.mxu0 0.0
        %2268 = vmatprep.subr.mxu0 0.0
        %2269 = vmatpush1.msra.mxu0 0.0
        %2270 = vmatprep.subr.mxu0 0.0
        %2271 = vmatpush1.msra.mxu0 0.0
        %2272 = vmatprep.subr.mxu0 0.0
        %2273 = vmatpush1.msra.mxu0 0.0
        %2274 = vmatprep.subr.mxu0 0.0
        %2275 = vmatpush1.msra.mxu0 0.0
        %2276 = vmatprep.subr.mxu0 0.0
        %2277 = vmatpush1.msra.mxu0 0.0
        %2278 = vmatprep.subr.mxu0 0.0
        %2279 = vmatpush1.msra.mxu0 0.0
        %2280 = vmatprep.subr.mxu0 0.0
        %2281 = vmatpush1.msra.mxu0 0.0
        %2282 = vmatprep.subr.mxu0 0.0
        %2283 = vmatpush1.msra.mxu0 0.0
        %2284 = vmatprep.subr.mxu0 0.0
        %2285 = vmatpush1.msra.mxu0 0.0
        %2286 = vmatprep.subr.mxu0 0.0
        %2287 = vmatpush1.msra.mxu0 0.0
        %2288 = vmatprep.subr.mxu0 0.0
        %2289 = vmatpush1.msra.mxu0 0.0
        %2290 = vmatprep.subr.mxu0 0.0
        %2291 = vmatpush1.msra.mxu0 0.0
        %2292 = vmatprep.subr.mxu0 0.0
        %2293 = vmatpush1.msra.mxu0 0.0
        %2294 = vmatprep.subr.mxu0 0.0
        %2295 = vmatpush1.msra.mxu0 0.0
        %2296 = vmatprep.subr.mxu0 0.0
        %2297 = vmatpush1.msra.mxu0 0.0
        %2298 = vmatprep.subr.mxu0 0.0
        %2299 = vmatpush1.msra.mxu0 0.0
        %2300 = vmatprep.subr.mxu0 0.0
        %2301 = vmatpush1.msra.mxu0 0.0
        %2302 = vmatprep.subr.mxu0 0.0
        %2303 = vmatpush1.msra.mxu0 0.0
        %2304 = vmatprep.subr.mxu0 0.0
        %2305 = vmatpush1.msra.mxu0 0.0
        %2306 = vmatprep.subr.mxu0 0.0
        %2307 = vmatpush1.msra.mxu0 0.0
        %2308 = vmatprep.subr.mxu0 0.0
        %2309 = vmatpush1.msra.mxu0 0.0
        %2310 = vmatprep.subr.mxu0 0.0
        %2311 = vmatpush1.msra.mxu0 0.0
        %2312 = vmatprep.subr.mxu0 0.0
        %2313 = vmatpush1.msra.mxu0 0.0
        %2314 = vmatprep.subr.mxu0 0.0
        %2315 = vmatpush1.msra.mxu0 0.0
        %2316 = vmatprep.subr.mxu0 0.0
        %2317 = vmatpush1.msra.mxu0 0.0
        %2318 = vmatprep.subr.mxu0 0.0
        %2319 = vmatpush1.msra.mxu0 0.0
        %2320 = vmatprep.subr.mxu0 0.0
        %2321 = vmatpush1.msra.mxu0 0.0
        %2322 = vmatprep.subr.mxu0 0.0
        %2323 = vmatpush1.msra.mxu0 0.0
        %2324 = vmatprep.subr.mxu0 0.0
        %2325 = vmatpush1.msra.mxu0 0.0
        %2326 = vmatprep.subr.mxu0 0.0
        %2327 = vmatpush1.msra.mxu0 0.0
        %2328 = vmatprep.mubr.f32.mxu0 0.0
        %2329 = vmatmul.mubr.f32.gmra.mrb[0].mxu0 %v2262
        %v2330 = vpop.f32.mrb[0].mxu0
        %v2331 = vadd.f32 0.0, %v2330
        %v2332 = vpop.f32.mrb[0].mxu0
        %v2333 = vadd.f32 0.0, %v2332
        %2334 = vdwg.mxu0
        %v2335 = vadd.f32 %v2250, %v2331
        %v2336 = vadd.f32 %v2251, %v2333
        %2337 = vrot.lane.b32.xlu0 %v1665, 111
        %v2338 = vpop.permute.xlu0 %2337
        %2339 = vrot.lane.b32.xlu0 %v1666, 111
        %v2340 = vpop.permute.xlu0 %2339
        %v2341 = vsel %vm1290, %v2338, %v2340
        %v2342 = vsel %vm1290, %v2340, %v2338
        %v2343 = vmul.f32 %v2341, %v1296
        %v2344 = vmul.f32 %v2342, %v1300
        %v2345 = vld [vmem:[%s1303] sm:$0xff]
        %v2347 = vsel %vm574, %v2345, 0
        %2349 = vmatprep.subr.mxu0 %v2344
        %2350 = vmatpush1.msra.mxu0 %v2343
        %2351 = vmatprep.subr.mxu0 0.0
        %2352 = vmatpush1.msra.mxu0 0.0
        %2353 = vmatprep.subr.mxu0 0.0
        %2354 = vmatpush1.msra.mxu0 0.0
        %2355 = vmatprep.subr.mxu0 0.0
        %2356 = vmatpush1.msra.mxu0 0.0
        %2357 = vmatprep.subr.mxu0 0.0
        %2358 = vmatpush1.msra.mxu0 0.0
        %2359 = vmatprep.subr.mxu0 0.0
        %2360 = vmatpush1.msra.mxu0 0.0
        %2361 = vmatprep.subr.mxu0 0.0
        %2362 = vmatpush1.msra.mxu0 0.0
        %2363 = vmatprep.subr.mxu0 0.0
        %2364 = vmatpush1.msra.mxu0 0.0
        %2365 = vmatprep.subr.mxu0 0.0
        %2366 = vmatpush1.msra.mxu0 0.0
        %2367 = vmatprep.subr.mxu0 0.0
        %2368 = vmatpush1.msra.mxu0 0.0
        %2369 = vmatprep.subr.mxu0 0.0
        %2370 = vmatpush1.msra.mxu0 0.0
        %2371 = vmatprep.subr.mxu0 0.0
        %2372 = vmatpush1.msra.mxu0 0.0
        %2373 = vmatprep.subr.mxu0 0.0
        %2374 = vmatpush1.msra.mxu0 0.0
        %2375 = vmatprep.subr.mxu0 0.0
        %2376 = vmatpush1.msra.mxu0 0.0
        %2377 = vmatprep.subr.mxu0 0.0
        %2378 = vmatpush1.msra.mxu0 0.0
        %2379 = vmatprep.subr.mxu0 0.0
        %2380 = vmatpush1.msra.mxu0 0.0
        %2381 = vmatprep.subr.mxu0 0.0
        %2382 = vmatpush1.msra.mxu0 0.0
        %2383 = vmatprep.subr.mxu0 0.0
        %2384 = vmatpush1.msra.mxu0 0.0
        %2385 = vmatprep.subr.mxu0 0.0
        %2386 = vmatpush1.msra.mxu0 0.0
        %2387 = vmatprep.subr.mxu0 0.0
        %2388 = vmatpush1.msra.mxu0 0.0
        %2389 = vmatprep.subr.mxu0 0.0
        %2390 = vmatpush1.msra.mxu0 0.0
        %2391 = vmatprep.subr.mxu0 0.0
        %2392 = vmatpush1.msra.mxu0 0.0
        %2393 = vmatprep.subr.mxu0 0.0
        %2394 = vmatpush1.msra.mxu0 0.0
        %2395 = vmatprep.subr.mxu0 0.0
        %2396 = vmatpush1.msra.mxu0 0.0
        %2397 = vmatprep.subr.mxu0 0.0
        %2398 = vmatpush1.msra.mxu0 0.0
        %2399 = vmatprep.subr.mxu0 0.0
        %2400 = vmatpush1.msra.mxu0 0.0
        %2401 = vmatprep.subr.mxu0 0.0
        %2402 = vmatpush1.msra.mxu0 0.0
        %2403 = vmatprep.subr.mxu0 0.0
        %2404 = vmatpush1.msra.mxu0 0.0
        %2405 = vmatprep.subr.mxu0 0.0
        %2406 = vmatpush1.msra.mxu0 0.0
        %2407 = vmatprep.subr.mxu0 0.0
        %2408 = vmatpush1.msra.mxu0 0.0
        %2409 = vmatprep.subr.mxu0 0.0
        %2410 = vmatpush1.msra.mxu0 0.0
        %2411 = vmatprep.subr.mxu0 0.0
        %2412 = vmatpush1.msra.mxu0 0.0
        %2413 = vmatprep.mubr.f32.mxu0 0.0
        %2414 = vmatmul.mubr.f32.gmra.mrb[0].mxu0 %v2347
        %v2415 = vpop.f32.mrb[0].mxu0
        %v2416 = vadd.f32 0.0, %v2415
        %v2417 = vpop.f32.mrb[0].mxu0
        %v2418 = vadd.f32 0.0, %v2417
        %2419 = vdwg.mxu0
        %v2420 = vadd.f32 %v2335, %v2416
        %v2421 = vadd.f32 %v2336, %v2418
        %v2422 = vadd.f32 %v2420, %v1384
        %v2423 = vadd.f32 %v2421, %v1384
        %v2424 = vmax.f32 %v2422, 0.0
        %v2425 = vmax.f32 %v2423, 0.0
        %v2426 = vadd.f32 %v2424, %v1659
        %v2427 = vadd.f32 %v2425, %v1661
        %v2428 = vsel %vm1396, %v1563, 0
        %v2430 = vsel %vm1396, %v1564, 0
        %2432 = vmatprep.subr.mxu0 %v2430
        %2433 = vmatpush1.msra.mxu0 %v2428
        %2434 = vmatprep.subr.mxu0 0.0
        %2435 = vmatpush1.msra.mxu0 0.0
        %2436 = vmatprep.subr.mxu0 0.0
        %2437 = vmatpush1.msra.mxu0 0.0
        %2438 = vmatprep.subr.mxu0 0.0
        %2439 = vmatpush1.msra.mxu0 0.0
        %2440 = vmatprep.subr.mxu0 0.0
        %2441 = vmatpush1.msra.mxu0 0.0
        %2442 = vmatprep.subr.mxu0 0.0
        %2443 = vmatpush1.msra.mxu0 0.0
        %2444 = vmatprep.subr.mxu0 0.0
        %2445 = vmatpush1.msra.mxu0 0.0
        %2446 = vmatprep.subr.mxu0 0.0
        %2447 = vmatpush1.msra.mxu0 0.0
        %2448 = vmatprep.subr.mxu0 0.0
        %2449 = vmatpush1.msra.mxu0 0.0
        %2450 = vmatprep.subr.mxu0 0.0
        %2451 = vmatpush1.msra.mxu0 0.0
        %2452 = vmatprep.subr.mxu0 0.0
        %2453 = vmatpush1.msra.mxu0 0.0
        %2454 = vmatprep.subr.mxu0 0.0
        %2455 = vmatpush1.msra.mxu0 0.0
        %2456 = vmatprep.subr.mxu0 0.0
        %2457 = vmatpush1.msra.mxu0 0.0
        %2458 = vmatprep.subr.mxu0 0.0
        %2459 = vmatpush1.msra.mxu0 0.0
        %2460 = vmatprep.subr.mxu0 0.0
        %2461 = vmatpush1.msra.mxu0 0.0
        %2462 = vmatprep.subr.mxu0 0.0
        %2463 = vmatpush1.msra.mxu0 0.0
        %2464 = vmatprep.subr.mxu0 0.0
        %2465 = vmatpush1.msra.mxu0 0.0
        %2466 = vmatprep.subr.mxu0 0.0
        %2467 = vmatpush1.msra.mxu0 0.0
        %2468 = vmatprep.subr.mxu0 0.0
        %2469 = vmatpush1.msra.mxu0 0.0
        %2470 = vmatprep.subr.mxu0 0.0
        %2471 = vmatpush1.msra.mxu0 0.0
        %2472 = vmatprep.subr.mxu0 0.0
        %2473 = vmatpush1.msra.mxu0 0.0
        %2474 = vmatprep.subr.mxu0 0.0
        %2475 = vmatpush1.msra.mxu0 0.0
        %2476 = vmatprep.subr.mxu0 0.0
        %2477 = vmatpush1.msra.mxu0 0.0
        %2478 = vmatprep.subr.mxu0 0.0
        %2479 = vmatpush1.msra.mxu0 0.0
        %2480 = vmatprep.subr.mxu0 0.0
        %2481 = vmatpush1.msra.mxu0 0.0
        %2482 = vmatprep.subr.mxu0 0.0
        %2483 = vmatpush1.msra.mxu0 0.0
        %2484 = vmatprep.subr.mxu0 0.0
        %2485 = vmatpush1.msra.mxu0 0.0
        %2486 = vmatprep.subr.mxu0 0.0
        %2487 = vmatpush1.msra.mxu0 0.0
        %2488 = vmatprep.subr.mxu0 0.0
        %2489 = vmatpush1.msra.mxu0 0.0
        %2490 = vmatprep.subr.mxu0 0.0
        %2491 = vmatpush1.msra.mxu0 0.0
        %2492 = vmatprep.subr.mxu0 0.0
        %2493 = vmatpush1.msra.mxu0 0.0
        %2494 = vmatprep.subr.mxu0 0.0
        %2495 = vmatpush1.msra.mxu0 0.0
        %2496 = vmatprep.mubr.f32.mxu0 0.0
        %2497 = vmatmul.mubr.f32.gmra.mrb[0].mxu0 %v1394
        %v2498 = vpop.f32.mrb[0].mxu0
        %v2499 = vadd.f32 0.0, %v2498
        %v2500 = vpop.f32.mrb[0].mxu0
        %v2501 = vadd.f32 0.0, %v2500
        %2502 = vdwg.mxu0
        %2503 = vmatprep.subr.mxu0 %v2427
        %2504 = vmatpush1.msra.mxu0 %v2426
        %2505 = vmatprep.subr.mxu0 0.0
        %2506 = vmatpush1.msra.mxu0 0.0
        %2507 = vmatprep.subr.mxu0 0.0
        %2508 = vmatpush1.msra.mxu0 0.0
        %2509 = vmatprep.subr.mxu0 0.0
        %2510 = vmatpush1.msra.mxu0 0.0
        %2511 = vmatprep.subr.mxu0 0.0
        %2512 = vmatpush1.msra.mxu0 0.0
        %2513 = vmatprep.subr.mxu0 0.0
        %2514 = vmatpush1.msra.mxu0 0.0
        %2515 = vmatprep.subr.mxu0 0.0
        %2516 = vmatpush1.msra.mxu0 0.0
        %2517 = vmatprep.subr.mxu0 0.0
        %2518 = vmatpush1.msra.mxu0 0.0
        %2519 = vmatprep.subr.mxu0 0.0
        %2520 = vmatpush1.msra.mxu0 0.0
        %2521 = vmatprep.subr.mxu0 0.0
        %2522 = vmatpush1.msra.mxu0 0.0
        %2523 = vmatprep.subr.mxu0 0.0
        %2524 = vmatpush1.msra.mxu0 0.0
        %2525 = vmatprep.subr.mxu0 0.0
        %2526 = vmatpush1.msra.mxu0 0.0
        %2527 = vmatprep.subr.mxu0 0.0
        %2528 = vmatpush1.msra.mxu0 0.0
        %2529 = vmatprep.subr.mxu0 0.0
        %2530 = vmatpush1.msra.mxu0 0.0
        %2531 = vmatprep.subr.mxu0 0.0
        %2532 = vmatpush1.msra.mxu0 0.0
        %2533 = vmatprep.subr.mxu0 0.0
        %2534 = vmatpush1.msra.mxu0 0.0
        %2535 = vmatprep.subr.mxu0 0.0
        %2536 = vmatpush1.msra.mxu0 0.0
        %2537 = vmatprep.subr.mxu0 0.0
        %2538 = vmatpush1.msra.mxu0 0.0
        %2539 = vmatprep.subr.mxu0 0.0
        %2540 = vmatpush1.msra.mxu0 0.0
        %2541 = vmatprep.subr.mxu0 0.0
        %2542 = vmatpush1.msra.mxu0 0.0
        %2543 = vmatprep.subr.mxu0 0.0
        %2544 = vmatpush1.msra.mxu0 0.0
        %2545 = vmatprep.subr.mxu0 0.0
        %2546 = vmatpush1.msra.mxu0 0.0
        %2547 = vmatprep.subr.mxu0 0.0
        %2548 = vmatpush1.msra.mxu0 0.0
        %2549 = vmatprep.subr.mxu0 0.0
        %2550 = vmatpush1.msra.mxu0 0.0
        %2551 = vmatprep.subr.mxu0 0.0
        %2552 = vmatpush1.msra.mxu0 0.0
        %2553 = vmatprep.subr.mxu0 0.0
        %2554 = vmatpush1.msra.mxu0 0.0
        %2555 = vmatprep.subr.mxu0 0.0
        %2556 = vmatpush1.msra.mxu0 0.0
        %2557 = vmatprep.subr.mxu0 0.0
        %2558 = vmatpush1.msra.mxu0 0.0
        %2559 = vmatprep.subr.mxu0 0.0
        %2560 = vmatpush1.msra.mxu0 0.0
        %2561 = vmatprep.subr.mxu0 0.0
        %2562 = vmatpush1.msra.mxu0 0.0
        %2563 = vmatprep.subr.mxu0 0.0
        %2564 = vmatpush1.msra.mxu0 0.0
        %2565 = vmatprep.subr.mxu0 0.0
        %2566 = vmatpush1.msra.mxu0 0.0
        %2567 = vmatprep.mubr.f32.mxu0 0.0
        %2568 = vmatmul.mubr.f32.gmra.mrb[0].mxu0 %v1473
        %v2569 = vpop.f32.mrb[0].mxu0
        %v2570 = vadd.f32 %v2499, %v2569
        %v2571 = vpop.f32.mrb[0].mxu0
        %v2572 = vadd.f32 %v2501, %v2571
        %2573 = vdwg.mxu0
        %v2574 = vadd.f32 %v2570, %v1549
        %v2575 = vadd.f32 %v2572, %v1549
        %v2576 = vadd.f32 %v2574, %v1561
        %v2577 = vadd.f32 %v2575, %v1566
        %v2580 = vcombine.low %v2576, %v2577
        %s2582 = scalar_lea.vmem %s373, 8 [#allocation2]
        %2583 = vst [vmem:[%s2582] sm:$0xff] %v2580
        %s2584 = sand.u32 %s252, 1
        %s2585 = scalar_lea.sflag [#allocation3], %s2584
        %s2586 = sand.u32 %s252, 1
        %s2587 = smul.addr %s2586, 16
        %s2588 = scalar_lea.vmem [#allocation2], %s2587
        // Predicated region
        $region61: #{tpu_custom_call.1} parent=59 // pred_check
          %p2589 = pneg %p262
        $region62: #{tpu_custom_call.1} parent=59 // pred_check_branch
          %2591 = sbr.rel (%p2589) target = $region64
        $region63: #{tpu_custom_call.1} parent=59 // pred_region
          %s2592 = smul.u32 2, %s24
          %s2594 = ssub.s32 256, 256
          %2595 = vsyncadd %s2585, %s2594
          %s2596 = smul.addr %s2592, 2
          %s2597 = smul.addr %s2596, 64
          %s2598 = scalar_lea.hbm %s10, %s2597
          %s2599 = sshll.u32 %s2588, 4
          %s2600 = int_to_ptr.vmem [resolvable:$true] %s2599
          %2605 = dma.vmem_to_hbm [thread:$0]  %s2600, 256, %s2598, %s2585, 128, 128, 8
        $region64: #{tpu_custom_call.1} parent=59 // pred_fallthru
          _
      $region60: #{tpu_custom_call.1} parent=5 // pred_fallthru
        _
      %p2606 = scmp.le.s32.totalorder 2, %s19
      // Predicated region
      $region65: #{tpu_custom_call.1} parent=5 // pred_check
        %p2607 = pneg %p2606
      $region66: #{tpu_custom_call.1} parent=5 // pred_check_branch
        %2609 = sbr.rel (%p2607) target = $region68
      $region67: #{tpu_custom_call.1} parent=5 // pred_region
        %s2610 = ssub.s32 %s19, 2
        // Predicated region
        $region69: #{tpu_custom_call.1} parent=67 // pred_check
          %p2611 = pneg %p268
        $region70: #{tpu_custom_call.1} parent=67 // pred_check_branch
          %2613 = sbr.rel (%p2611) target = $region72
        $region71: #{tpu_custom_call.1} parent=67 // pred_region
          %s2614 = sand.u32 %s253, 1
          %s2615 = scalar_lea.sflag [#allocation3], %s2614
          %s2616 = sand.u32 %s253, 1
          %s2617 = smul.addr %s2616, 16
          %s2618 = scalar_lea.vmem [#allocation2], %s2617
          %2619 = dma.done %s2615, 256
        $region72: #{tpu_custom_call.1} parent=67 // pred_fallthru
          _
      $region68: #{tpu_custom_call.1} parent=5 // pred_fallthru
        _
    $region6: #{tpu_custom_call.1} parent=1 // loop_footer
      %s23 = sadd.s32 1, %s19
    $region7: #{tpu_custom_call.1} parent=1 // loop_footer_branch
      %18 = sbr.rel target = $region3
    $region8: #{tpu_custom_call.1} parent=1 // loop_exit
      _
    %2620 = vsyncpa [#allocation3], 1
    %s2621 = scalar_lea.sflag [#allocation3], 1
    %2622 = vsyncpa %s2621, 1

</llo_original>
